<compile_context>
chip_gen: v7x
topology: tpu7x:2x2x1
jax: 0.10.0
libtpu: 0.0.40
codegen_flags: <defaults>
</compile_context>

<pallas_src>
import functools

import jax
import jax.numpy as jnp
from jax.experimental import pallas as pl
from jax.experimental.pallas import tpu as pltpu

LEAKY_SLOPE = 0.2
BN_EPS = 1e-5
TILE_P = 512   # row tile (multiple of 8); fits VMEM comfortably with double-buffering
LANE = 128     # K / Cout padded to multiples of the lane width


def _round_up(x, m):
    return ((x + m - 1) // m) * m


# ---------------------------------------------------------------------------
# Pallas kernels
# ---------------------------------------------------------------------------
def _matmul_lrelu_kernel(a_ref, w_ref, o_ref):
    """o = LeakyReLU(A @ W).  A:(tP,K) bf16, W:(K,C) bf16, o:(tP,C) bf16."""
    y = jnp.dot(a_ref[...], w_ref[...], preferred_element_type=jnp.float32)
    y = jnp.where(y > 0, y, LEAKY_SLOPE * y)
    o_ref[...] = y.astype(o_ref.dtype)


def _matmul_stats_kernel(a_ref, w_ref, y_ref, sum_ref, ssq_ref):
    """Pass 1 of Conv+BN: y = A @ W plus per-channel sum / sum-of-squares.

    sum_ref / ssq_ref use a constant index_map along the P grid axis, so they
    stay resident in VMEM and accumulate across tiles (axis is 'arbitrary').
    Stats are accumulated from the f32 MXU result; y is written back in bf16
    to halve the intermediate HBM traffic.
    """
    @pl.when(pl.program_id(0) == 0)
    def _():
        sum_ref[...] = jnp.zeros_like(sum_ref)
        ssq_ref[...] = jnp.zeros_like(ssq_ref)

    y = jnp.dot(a_ref[...], w_ref[...], preferred_element_type=jnp.float32)
    sum_ref[...] += jnp.sum(y, axis=0, keepdims=True)
    ssq_ref[...] += jnp.sum(y * y, axis=0, keepdims=True)
    y_ref[...] = y.astype(y_ref.dtype)


def _bn_lrelu_kernel(y_ref, scale_ref, shift_ref, o_ref):
    """Pass 2 of Conv+BN: o = LeakyReLU(y * scale + shift), per-channel affine."""
    y = y_ref[...].astype(jnp.float32) * scale_ref[...] + shift_ref[...]
    o_ref[...] = jnp.where(y > 0, y, LEAKY_SLOPE * y).astype(o_ref.dtype)


# ---------------------------------------------------------------------------
# pallas_call wrappers (tiled over the P = N*Ho*Wo axis)
# ---------------------------------------------------------------------------
def _conv_lrelu(a_pad, w_pad, tile_p):
    Pp, Kp = a_pad.shape
    Cp = w_pad.shape[1]
    return pl.pallas_call(
        _matmul_lrelu_kernel,
        out_shape=jax.ShapeDtypeStruct((Pp, Cp), jnp.bfloat16),
        grid=(Pp // tile_p,),
        in_specs=[
            pl.BlockSpec((tile_p, Kp), lambda i: (i, 0)),
            pl.BlockSpec((Kp, Cp), lambda i: (0, 0)),
        ],
        out_specs=pl.BlockSpec((tile_p, Cp), lambda i: (i, 0)),
        compiler_params=pltpu.CompilerParams(dimension_semantics=("parallel",)),
    )(a_pad, w_pad)


def _conv_stats(a_pad, w_pad, tile_p):
    Pp, Kp = a_pad.shape
    Cp = w_pad.shape[1]
    return pl.pallas_call(
        _matmul_stats_kernel,
        out_shape=(
            jax.ShapeDtypeStruct((Pp, Cp), jnp.bfloat16),   # intermediate y (bf16)
            jax.ShapeDtypeStruct((1, Cp), jnp.float32),     # per-channel sum
            jax.ShapeDtypeStruct((1, Cp), jnp.float32),     # per-channel sum-sq
        ),
        grid=(Pp // tile_p,),
        in_specs=[
            pl.BlockSpec((tile_p, Kp), lambda i: (i, 0)),
            pl.BlockSpec((Kp, Cp), lambda i: (0, 0)),
        ],
        out_specs=(
            pl.BlockSpec((tile_p, Cp), lambda i: (i, 0)),
            pl.BlockSpec((1, Cp), lambda i: (0, 0)),   # resident accumulator
            pl.BlockSpec((1, Cp), lambda i: (0, 0)),   # resident accumulator
        ),
        compiler_params=pltpu.CompilerParams(dimension_semantics=("arbitrary",)),
    )(a_pad, w_pad)


def _bn_lrelu(y, scale, shift, tile_p):
    Pp, Cp = y.shape
    return pl.pallas_call(
        _bn_lrelu_kernel,
        out_shape=jax.ShapeDtypeStruct((Pp, Cp), jnp.bfloat16),
        grid=(Pp // tile_p,),
        in_specs=[
            pl.BlockSpec((tile_p, Cp), lambda i: (i, 0)),
            pl.BlockSpec((1, Cp), lambda i: (0, 0)),
            pl.BlockSpec((1, Cp), lambda i: (0, 0)),
        ],
        out_specs=pl.BlockSpec((tile_p, Cp), lambda i: (i, 0)),
        compiler_params=pltpu.CompilerParams(dimension_semantics=("parallel",)),
    )(y, scale, shift)


# ---------------------------------------------------------------------------
# JAX glue: channels-last im2col + layer wrapper
# ---------------------------------------------------------------------------
def _im2col_nhwc(x, k, stride, pad):
    """x:(N,H,W,C) -> A:(N*Ho*Wo, k*k*C), inner order (kh, kw, C)."""
    N, H, W, C = x.shape
    if pad:
        x = jnp.pad(x, ((0, 0), (pad, pad), (pad, pad), (0, 0)))
    Ho = (H + 2 * pad - k) // stride + 1
    Wo = (W + 2 * pad - k) // stride + 1
    cols = []
    for kh in range(k):
        for kw in range(k):
            cols.append(
                x[:, kh:kh + stride * Ho:stride, kw:kw + stride * Wo:stride, :])
    # TODO(synk): replace materialized im2col with an implicit-GEMM kernel; the
    # stride-2 window is not expressible with a plain BlockSpec index_map, so
    # patch extraction stays in XLA (channels-last concat only, no transposes).
    a = jnp.concatenate(cols, axis=-1)  # (N, Ho, Wo, k*k*C)
    return a.reshape(N * Ho * Wo, k * k * C), Ho, Wo


def _conv_layer(x_nhwc, w, stride, pad, *, bn=None):
    """Conv2d(bias=False) [+ BatchNorm2d(batch stats)] + LeakyReLU(0.2), NHWC io."""
    Cout, Cin, k, _ = w.shape
    N = x_nhwc.shape[0]
    a, Ho, Wo = _im2col_nhwc(x_nhwc, k, stride, pad)
    P, K = a.shape
    wmat = w.transpose(2, 3, 1, 0).reshape(K, Cout)  # (kh, kw, Cin) inner order

    tile_p = TILE_P if P >= TILE_P else _round_up(P, 8)
    Pp = _round_up(P, tile_p)
    Kp = _round_up(K, LANE)
    Cp = _round_up(Cout, LANE)

    # Zero-pad + cast to bf16 (halves HBM traffic, MXU-native shapes).
    a_pad = jnp.pad(a.astype(jnp.bfloat16), ((0, Pp - P), (0, Kp - K)))
    w_pad = jnp.pad(wmat.astype(jnp.bfloat16), ((0, Kp - K), (0, Cp - Cout)))

    if bn is None:
        y = _conv_lrelu(a_pad, w_pad, tile_p)
    else:
        gamma, beta = bn
        y_raw, s, ss = _conv_stats(a_pad, w_pad, tile_p)
        # Padded rows/channels are exactly zero, so they add nothing to the sums;
        # dividing by the true row count P gives exact training-mode batch stats.
        mean = s[0] / P
        var = ss[0] / P - mean * mean
        g = jnp.zeros((Cp,), jnp.float32).at[:Cout].set(gamma)
        b = jnp.zeros((Cp,), jnp.float32).at[:Cout].set(beta)
        scale = g * jax.lax.rsqrt(var + BN_EPS)
        shift = b - mean * scale
        y = _bn_lrelu(y_raw, scale.reshape(1, Cp), shift.reshape(1, Cp), tile_p)

    return y[:P, :Cout].reshape(N, Ho, Wo, Cout)


# ---------------------------------------------------------------------------
# Discriminator parameters + forward
# ---------------------------------------------------------------------------
def init_discriminator_params(key, ndf, nc):
    ks = jax.random.split(key, 5)

    def conv_w(k, cout, cin):
        return 0.02 * jax.random.normal(k, (cout, cin, 4, 4), jnp.float32)

    return {
        "w1": conv_w(ks[0], ndf, nc),
        "w2": conv_w(ks[1], ndf * 2, ndf),
        "g2": jnp.ones((ndf * 2,), jnp.float32), "b2": jnp.zeros((ndf * 2,), jnp.float32),
        "w3": conv_w(ks[2], ndf * 4, ndf * 2),
        "g3": jnp.ones((ndf * 4,), jnp.float32), "b3": jnp.zeros((ndf * 4,), jnp.float32),
        "w4": conv_w(ks[3], ndf * 8, ndf * 4),
        "g4": jnp.ones((ndf * 8,), jnp.float32), "b4": jnp.zeros((ndf * 8,), jnp.float32),
        "w5": conv_w(ks[4], 1, ndf * 8),
    }


def discriminator_forward(x_nchw, p, *, use_sigmoid=True, wgan=False):
    # Model boundary: NCHW (PyTorch) -> NHWC (channels on the TPU lane axis).
    h = x_nchw.transpose(0, 2, 3, 1)
    h = _conv_layer(h, p["w1"], 2, 1)                             # (N, H/2,  W/2,  ndf)
    h = _conv_layer(h, p["w2"], 2, 1, bn=(p["g2"], p["b2"]))      # (N, H/4,  W/4,  2ndf)
    h = _conv_layer(h, p["w3"], 2, 1, bn=(p["g3"], p["b3"]))      # (N, H/8,  W/8,  4ndf)
    h = _conv_layer(h, p["w4"], 2, 1, bn=(p["g4"], p["b4"]))      # (N, H/16, W/16, 8ndf)

    # Final Conv(8ndf -> 1, 4, 1, 0) [+ Sigmoid]: tiny 1-lane contraction, plain JAX.
    a, Ho, Wo = _im2col_nhwc(h.astype(jnp.float32), 4, 1, 0)      # (N*Ho*Wo, 8ndf*16)
    wmat = p["w5"].transpose(2, 3, 1, 0).reshape(-1, 1)
    out = a @ wmat                                                # (N*Ho*Wo, 1)
    if use_sigmoid:
        out = jax.nn.sigmoid(out)
    if wgan:
        return out.reshape(-1)
    return out.reshape(-1, 1).squeeze(1)


# ---------------------------------------------------------------------------
if __name__ == "__main__":
    # Small DCGAN discriminator: 64x64 input so the final 4x4/s1/p0 conv -> 1x1.
    N, NC, NDF, HW = 2, 3, 8, 64

    key = jax.random.PRNGKey(0)
    k_x, k_p = jax.random.split(key)
    x = jax.random.normal(k_x, (N, NC, HW, HW), jnp.float32)
    params = init_discriminator_params(k_p, NDF, NC)

    fwd = jax.jit(functools.partial(discriminator_forward, use_sigmoid=True, wgan=False))
    out = jax.block_until_ready(fwd(x, params))
    assert out.shape == (N,), out.shape
    assert bool(jnp.all(jnp.isfinite(out)))
    print("KERNEL_OK")
</pallas_src>

<mosaic_0001>
module attributes {stable_mosaic.version = 11 : i64} {
  func.func @_matmul_lrelu_kernel(%arg0: i32, %arg1: memref<512x128xbf16, #tpu.memory_space<vmem>>, %arg2: memref<128x128xbf16, #tpu.memory_space<vmem>>, %arg3: memref<512x128xbf16, #tpu.memory_space<vmem>>) attributes {dimension_semantics = [#tpu.dimension_semantics<parallel>], iteration_bounds = array<i64: 4>, scalar_prefetch = 0 : i64, scratch_operands = 0 : i64, tpu.core_type = #tpu.core_type<tc>, window_params = [{transform_indices = @transform_0, window_bounds = array<i64: 512, 128>}, {pipeline_mode = #tpu.pipeline_mode<synchronous>, transform_indices = @transform_1, window_bounds = array<i64: 128, 128>}, {transform_indices = @transform_2, window_bounds = array<i64: 512, 128>}]} {
    %c0 = arith.constant 0 : index
    %c0_0 = arith.constant 0 : index
    %0 = vector.load %arg1[%c0, %c0_0] : memref<512x128xbf16, #tpu.memory_space<vmem>>, vector<512x128xbf16>
    %c0_1 = arith.constant 0 : index
    %c0_2 = arith.constant 0 : index
    %1 = vector.load %arg2[%c0_1, %c0_2] : memref<128x128xbf16, #tpu.memory_space<vmem>>, vector<128x128xbf16>
    %cst = arith.constant dense<0.000000e+00> : vector<512x128xf32>
    %2 = tpu.matmul %0, %1, %cst {dimension_numbers = #tpu.dot_dimension_numbers<[1], [0], [0], [1], [0, 0, 1, 1], [], []>} : vector<512x128xbf16>, vector<128x128xbf16>, vector<512x128xf32> -> vector<512x128xf32>
    %cst_3 = arith.constant 0.000000e+00 : f32
    %3 = vector.broadcast %cst_3 : f32 to vector<512x128xf32>
    %4 = arith.cmpf ogt, %2, %3 : vector<512x128xf32>
    %cst_4 = arith.constant 2.000000e-01 : f32
    %5 = vector.broadcast %cst_4 : f32 to vector<512x128xf32>
    %6 = arith.mulf %5, %2 : vector<512x128xf32>
    %7 = arith.select %4, %2, %6 : vector<512x128xi1>, vector<512x128xf32>
    %8 = arith.truncf %7 : vector<512x128xf32> to vector<512x128xbf16>
    %c0_5 = arith.constant 0 : index
    %c0_6 = arith.constant 0 : index
    %9 = vector.load %arg3[%c0_5, %c0_6] : memref<512x128xbf16, #tpu.memory_space<vmem>>, vector<512x128xbf16>
    tpu.vector_store %arg3[%c0_5, %c0_6], %8 {strides = array<i32>} : memref<512x128xbf16, #tpu.memory_space<vmem>>, vector<512x128xbf16>,
    return
  }
  func.func @transform_0(%arg0: i32) -> (i32, i32) {
    %c0_i32 = arith.constant 0 : i32
    %c0_i32_0 = arith.constant 0 : i32
    return %arg0, %c0_i32 : i32, i32
  }
  func.func @transform_1(%arg0: i32) -> (i32, i32) {
    %c0_i32 = arith.constant 0 : i32
    %c0_i32_0 = arith.constant 0 : i32
    %c0_i32_1 = arith.constant 0 : i32
    return %c0_i32, %c0_i32_0 : i32, i32
  }
  func.func @transform_2(%arg0: i32) -> (i32, i32) {
    %c0_i32 = arith.constant 0 : i32
    %c0_i32_0 = arith.constant 0 : i32
    return %arg0, %c0_i32 : i32, i32
  }
}

module attributes {stable_mosaic.version = 11 : i64} {
  func.func @_matmul_stats_kernel(%arg0: i32, %arg1: memref<512x128xbf16, #tpu.memory_space<vmem>>, %arg2: memref<128x128xbf16, #tpu.memory_space<vmem>>, %arg3: memref<512x128xbf16, #tpu.memory_space<vmem>>, %arg4: memref<1x128xf32, #tpu.memory_space<vmem>>, %arg5: memref<1x128xf32, #tpu.memory_space<vmem>>) attributes {dimension_semantics = [#tpu.dimension_semantics<arbitrary>], iteration_bounds = array<i64: 1>, scalar_prefetch = 0 : i64, scratch_operands = 0 : i64, tpu.core_type = #tpu.core_type<tc>, window_params = [{transform_indices = @transform_0, window_bounds = array<i64: 512, 128>}, {pipeline_mode = #tpu.pipeline_mode<synchronous>, transform_indices = @transform_1, window_bounds = array<i64: 128, 128>}, {transform_indices = @transform_2, window_bounds = array<i64: 512, 128>}, {pipeline_mode = #tpu.pipeline_mode<synchronous>, transform_indices = @transform_3, window_bounds = array<i64: 1, 128>}, {pipeline_mode = #tpu.pipeline_mode<synchronous>, transform_indices = @transform_4, window_bounds = array<i64: 1, 128>}]} {
    %c0_i32 = arith.constant 0 : i32
    %0 = arith.cmpi eq, %arg0, %c0_i32 : i32
    %1 = arith.extui %0 : i1 to i32
    %c0_i32_0 = arith.constant 0 : i32
    %2 = arith.cmpi ne, %1, %c0_i32_0 : i32
    scf.if %2 {
      %cst_16 = arith.constant 0.000000e+00 : f32
      %19 = vector.broadcast %cst_16 : f32 to vector<1x128xf32>
      %c0_17 = arith.constant 0 : index
      %c0_18 = arith.constant 0 : index
      %20 = vector.load %arg4[%c0_17, %c0_18] : memref<1x128xf32, #tpu.memory_space<vmem>>, vector<1x128xf32>
      tpu.vector_store %arg4[%c0_17, %c0_18], %19 {strides = array<i32>} : memref<1x128xf32, #tpu.memory_space<vmem>>, vector<1x128xf32>,
      %cst_19 = arith.constant 0.000000e+00 : f32
      %21 = vector.broadcast %cst_19 : f32 to vector<1x128xf32>
      %c0_20 = arith.constant 0 : index
      %c0_21 = arith.constant 0 : index
      %22 = vector.load %arg5[%c0_20, %c0_21] : memref<1x128xf32, #tpu.memory_space<vmem>>, vector<1x128xf32>
      tpu.vector_store %arg5[%c0_20, %c0_21], %21 {strides = array<i32>} : memref<1x128xf32, #tpu.memory_space<vmem>>, vector<1x128xf32>,
    } else {
    }
    %c0 = arith.constant 0 : index
    %c0_1 = arith.constant 0 : index
    %3 = vector.load %arg1[%c0, %c0_1] : memref<512x128xbf16, #tpu.memory_space<vmem>>, vector<512x128xbf16>
    %c0_2 = arith.constant 0 : index
    %c0_3 = arith.constant 0 : index
    %4 = vector.load %arg2[%c0_2, %c0_3] : memref<128x128xbf16, #tpu.memory_space<vmem>>, vector<128x128xbf16>
    %cst = arith.constant dense<0.000000e+00> : vector<512x128xf32>
    %5 = tpu.matmul %3, %4, %cst {dimension_numbers = #tpu.dot_dimension_numbers<[1], [0], [0], [1], [0, 0, 1, 1], [], []>} : vector<512x128xbf16>, vector<128x128xbf16>, vector<512x128xf32> -> vector<512x128xf32>
    %c0_4 = arith.constant 0 : index
    %c0_5 = arith.constant 0 : index
    %6 = vector.load %arg4[%c0_4, %c0_5] : memref<1x128xf32, #tpu.memory_space<vmem>>, vector<1x128xf32>
    %cst_6 = arith.constant dense<0.000000e+00> : vector<128xf32>
    %7 = vector.multi_reduction <add>, %5, %cst_6 [0] : vector<512x128xf32> to vector<128xf32>
    %8 = vector.shape_cast %7 : vector<128xf32> to vector<1x128xf32>
    %9 = arith.addf %6, %8 : vector<1x128xf32>
    %c0_7 = arith.constant 0 : index
    %c0_8 = arith.constant 0 : index
    %10 = vector.load %arg4[%c0_7, %c0_8] : memref<1x128xf32, #tpu.memory_space<vmem>>, vector<1x128xf32>
    tpu.vector_store %arg4[%c0_7, %c0_8], %9 {strides = array<i32>} : memref<1x128xf32, #tpu.memory_space<vmem>>, vector<1x128xf32>,
    %c0_9 = arith.constant 0 : index
    %c0_10 = arith.constant 0 : index
    %11 = vector.load %arg5[%c0_9, %c0_10] : memref<1x128xf32, #tpu.memory_space<vmem>>, vector<1x128xf32>
    %12 = arith.mulf %5, %5 : vector<512x128xf32>
    %cst_11 = arith.constant dense<0.000000e+00> : vector<128xf32>
    %13 = vector.multi_reduction <add>, %12, %cst_11 [0] : vector<512x128xf32> to vector<128xf32>
    %14 = vector.shape_cast %13 : vector<128xf32> to vector<1x128xf32>
    %15 = arith.addf %11, %14 : vector<1x128xf32>
    %c0_12 = arith.constant 0 : index
    %c0_13 = arith.constant 0 : index
    %16 = vector.load %arg5[%c0_12, %c0_13] : memref<1x128xf32, #tpu.memory_space<vmem>>, vector<1x128xf32>
    tpu.vector_store %arg5[%c0_12, %c0_13], %15 {strides = array<i32>} : memref<1x128xf32, #tpu.memory_space<vmem>>, vector<1x128xf32>,
    %17 = arith.truncf %5 : vector<512x128xf32> to vector<512x128xbf16>
    %c0_14 = arith.constant 0 : index
    %c0_15 = arith.constant 0 : index
    %18 = vector.load %arg3[%c0_14, %c0_15] : memref<512x128xbf16, #tpu.memory_space<vmem>>, vector<512x128xbf16>
    tpu.vector_store %arg3[%c0_14, %c0_15], %17 {strides = array<i32>} : memref<512x128xbf16, #tpu.memory_space<vmem>>, vector<512x128xbf16>,
    return
  }
  func.func @transform_0(%arg0: i32) -> (i32, i32) {
    %c0_i32 = arith.constant 0 : i32
    %c0_i32_0 = arith.constant 0 : i32
    return %arg0, %c0_i32 : i32, i32
  }
  func.func @transform_1(%arg0: i32) -> (i32, i32) {
    %c0_i32 = arith.constant 0 : i32
    %c0_i32_0 = arith.constant 0 : i32
    %c0_i32_1 = arith.constant 0 : i32
    return %c0_i32, %c0_i32_0 : i32, i32
  }
  func.func @transform_2(%arg0: i32) -> (i32, i32) {
    %c0_i32 = arith.constant 0 : i32
    %c0_i32_0 = arith.constant 0 : i32
    return %arg0, %c0_i32 : i32, i32
  }
  func.func @transform_3(%arg0: i32) -> (i32, i32) {
    %c0_i32 = arith.constant 0 : i32
    %c0_i32_0 = arith.constant 0 : i32
    %c0_i32_1 = arith.constant 0 : i32
    return %c0_i32, %c0_i32_0 : i32, i32
  }
  func.func @transform_4(%arg0: i32) -> (i32, i32) {
    %c0_i32 = arith.constant 0 : i32
    %c0_i32_0 = arith.constant 0 : i32
    %c0_i32_1 = arith.constant 0 : i32
    return %c0_i32, %c0_i32_0 : i32, i32
  }
}

module attributes {stable_mosaic.version = 11 : i64} {
  func.func @_bn_lrelu_kernel(%arg0: i32, %arg1: memref<512x128xbf16, #tpu.memory_space<vmem>>, %arg2: memref<1x128xf32, #tpu.memory_space<vmem>>, %arg3: memref<1x128xf32, #tpu.memory_space<vmem>>, %arg4: memref<512x128xbf16, #tpu.memory_space<vmem>>) attributes {dimension_semantics = [#tpu.dimension_semantics<parallel>], iteration_bounds = array<i64: 1>, scalar_prefetch = 0 : i64, scratch_operands = 0 : i64, tpu.core_type = #tpu.core_type<tc>, window_params = [{transform_indices = @transform_0, window_bounds = array<i64: 512, 128>}, {pipeline_mode = #tpu.pipeline_mode<synchronous>, transform_indices = @transform_1, window_bounds = array<i64: 1, 128>}, {pipeline_mode = #tpu.pipeline_mode<synchronous>, transform_indices = @transform_2, window_bounds = array<i64: 1, 128>}, {transform_indices = @transform_3, window_bounds = array<i64: 512, 128>}]} {
    %c0 = arith.constant 0 : index
    %c0_0 = arith.constant 0 : index
    %0 = vector.load %arg1[%c0, %c0_0] : memref<512x128xbf16, #tpu.memory_space<vmem>>, vector<512x128xbf16>
    %1 = arith.extf %0 : vector<512x128xbf16> to vector<512x128xf32>
    %c0_1 = arith.constant 0 : index
    %c0_2 = arith.constant 0 : index
    %2 = vector.load %arg2[%c0_1, %c0_2] : memref<1x128xf32, #tpu.memory_space<vmem>>, vector<1x128xf32>
    %3 = vector.broadcast %2 : vector<1x128xf32> to vector<512x128xf32>
    %4 = arith.mulf %1, %3 : vector<512x128xf32>
    %c0_3 = arith.constant 0 : index
    %c0_4 = arith.constant 0 : index
    %5 = vector.load %arg3[%c0_3, %c0_4] : memref<1x128xf32, #tpu.memory_space<vmem>>, vector<1x128xf32>
    %6 = vector.broadcast %5 : vector<1x128xf32> to vector<512x128xf32>
    %7 = arith.addf %4, %6 : vector<512x128xf32>
    %cst = arith.constant 0.000000e+00 : f32
    %8 = vector.broadcast %cst : f32 to vector<512x128xf32>
    %9 = arith.cmpf ogt, %7, %8 : vector<512x128xf32>
    %cst_5 = arith.constant 2.000000e-01 : f32
    %10 = vector.broadcast %cst_5 : f32 to vector<512x128xf32>
    %11 = arith.mulf %10, %7 : vector<512x128xf32>
    %12 = arith.select %9, %7, %11 : vector<512x128xi1>, vector<512x128xf32>
    %13 = arith.truncf %12 : vector<512x128xf32> to vector<512x128xbf16>
    %c0_6 = arith.constant 0 : index
    %c0_7 = arith.constant 0 : index
    %14 = vector.load %arg4[%c0_6, %c0_7] : memref<512x128xbf16, #tpu.memory_space<vmem>>, vector<512x128xbf16>
    tpu.vector_store %arg4[%c0_6, %c0_7], %13 {strides = array<i32>} : memref<512x128xbf16, #tpu.memory_space<vmem>>, vector<512x128xbf16>,
    return
  }
  func.func @transform_0(%arg0: i32) -> (i32, i32) {
    %c0_i32 = arith.constant 0 : i32
    %c0_i32_0 = arith.constant 0 : i32
    return %arg0, %c0_i32 : i32, i32
  }
  func.func @transform_1(%arg0: i32) -> (i32, i32) {
    %c0_i32 = arith.constant 0 : i32
    %c0_i32_0 = arith.constant 0 : i32
    %c0_i32_1 = arith.constant 0 : i32
    return %c0_i32, %c0_i32_0 : i32, i32
  }
  func.func @transform_2(%arg0: i32) -> (i32, i32) {
    %c0_i32 = arith.constant 0 : i32
    %c0_i32_0 = arith.constant 0 : i32
    %c0_i32_1 = arith.constant 0 : i32
    return %c0_i32, %c0_i32_0 : i32, i32
  }
  func.func @transform_3(%arg0: i32) -> (i32, i32) {
    %c0_i32 = arith.constant 0 : i32
    %c0_i32_0 = arith.constant 0 : i32
    return %arg0, %c0_i32 : i32, i32
  }
}

module attributes {stable_mosaic.version = 11 : i64} {
  func.func @_matmul_stats_kernel(%arg0: i32, %arg1: memref<128x256xbf16, #tpu.memory_space<vmem>>, %arg2: memref<256x128xbf16, #tpu.memory_space<vmem>>, %arg3: memref<128x128xbf16, #tpu.memory_space<vmem>>, %arg4: memref<1x128xf32, #tpu.memory_space<vmem>>, %arg5: memref<1x128xf32, #tpu.memory_space<vmem>>) attributes {dimension_semantics = [#tpu.dimension_semantics<arbitrary>], iteration_bounds = array<i64: 1>, scalar_prefetch = 0 : i64, scratch_operands = 0 : i64, tpu.core_type = #tpu.core_type<tc>, window_params = [{transform_indices = @transform_0, window_bounds = array<i64: 128, 256>}, {pipeline_mode = #tpu.pipeline_mode<synchronous>, transform_indices = @transform_1, window_bounds = array<i64: 256, 128>}, {transform_indices = @transform_2, window_bounds = array<i64: 128, 128>}, {pipeline_mode = #tpu.pipeline_mode<synchronous>, transform_indices = @transform_3, window_bounds = array<i64: 1, 128>}, {pipeline_mode = #tpu.pipeline_mode<synchronous>, transform_indices = @transform_4, window_bounds = array<i64: 1, 128>}]} {
    %c0_i32 = arith.constant 0 : i32
    %0 = arith.cmpi eq, %arg0, %c0_i32 : i32
    %1 = arith.extui %0 : i1 to i32
    %c0_i32_0 = arith.constant 0 : i32
    %2 = arith.cmpi ne, %1, %c0_i32_0 : i32
    scf.if %2 {
      %cst_16 = arith.constant 0.000000e+00 : f32
      %19 = vector.broadcast %cst_16 : f32 to vector<1x128xf32>
      %c0_17 = arith.constant 0 : index
      %c0_18 = arith.constant 0 : index
      %20 = vector.load %arg4[%c0_17, %c0_18] : memref<1x128xf32, #tpu.memory_space<vmem>>, vector<1x128xf32>
      tpu.vector_store %arg4[%c0_17, %c0_18], %19 {strides = array<i32>} : memref<1x128xf32, #tpu.memory_space<vmem>>, vector<1x128xf32>,
      %cst_19 = arith.constant 0.000000e+00 : f32
      %21 = vector.broadcast %cst_19 : f32 to vector<1x128xf32>
      %c0_20 = arith.constant 0 : index
      %c0_21 = arith.constant 0 : index
      %22 = vector.load %arg5[%c0_20, %c0_21] : memref<1x128xf32, #tpu.memory_space<vmem>>, vector<1x128xf32>
      tpu.vector_store %arg5[%c0_20, %c0_21], %21 {strides = array<i32>} : memref<1x128xf32, #tpu.memory_space<vmem>>, vector<1x128xf32>,
    } else {
    }
    %c0 = arith.constant 0 : index
    %c0_1 = arith.constant 0 : index
    %3 = vector.load %arg1[%c0, %c0_1] : memref<128x256xbf16, #tpu.memory_space<vmem>>, vector<128x256xbf16>
    %c0_2 = arith.constant 0 : index
    %c0_3 = arith.constant 0 : index
    %4 = vector.load %arg2[%c0_2, %c0_3] : memref<256x128xbf16, #tpu.memory_space<vmem>>, vector<256x128xbf16>
    %cst = arith.constant dense<0.000000e+00> : vector<128x128xf32>
    %5 = tpu.matmul %3, %4, %cst {dimension_numbers = #tpu.dot_dimension_numbers<[1], [0], [0], [1], [0, 0, 1, 1], [], []>} : vector<128x256xbf16>, vector<256x128xbf16>, vector<128x128xf32> -> vector<128x128xf32>
    %c0_4 = arith.constant 0 : index
    %c0_5 = arith.constant 0 : index
    %6 = vector.load %arg4[%c0_4, %c0_5] : memref<1x128xf32, #tpu.memory_space<vmem>>, vector<1x128xf32>
    %cst_6 = arith.constant dense<0.000000e+00> : vector<128xf32>
    %7 = vector.multi_reduction <add>, %5, %cst_6 [0] : vector<128x128xf32> to vector<128xf32>
    %8 = vector.shape_cast %7 : vector<128xf32> to vector<1x128xf32>
    %9 = arith.addf %6, %8 : vector<1x128xf32>
    %c0_7 = arith.constant 0 : index
    %c0_8 = arith.constant 0 : index
    %10 = vector.load %arg4[%c0_7, %c0_8] : memref<1x128xf32, #tpu.memory_space<vmem>>, vector<1x128xf32>
    tpu.vector_store %arg4[%c0_7, %c0_8], %9 {strides = array<i32>} : memref<1x128xf32, #tpu.memory_space<vmem>>, vector<1x128xf32>,
    %c0_9 = arith.constant 0 : index
    %c0_10 = arith.constant 0 : index
    %11 = vector.load %arg5[%c0_9, %c0_10] : memref<1x128xf32, #tpu.memory_space<vmem>>, vector<1x128xf32>
    %12 = arith.mulf %5, %5 : vector<128x128xf32>
    %cst_11 = arith.constant dense<0.000000e+00> : vector<128xf32>
    %13 = vector.multi_reduction <add>, %12, %cst_11 [0] : vector<128x128xf32> to vector<128xf32>
    %14 = vector.shape_cast %13 : vector<128xf32> to vector<1x128xf32>
    %15 = arith.addf %11, %14 : vector<1x128xf32>
    %c0_12 = arith.constant 0 : index
    %c0_13 = arith.constant 0 : index
    %16 = vector.load %arg5[%c0_12, %c0_13] : memref<1x128xf32, #tpu.memory_space<vmem>>, vector<1x128xf32>
    tpu.vector_store %arg5[%c0_12, %c0_13], %15 {strides = array<i32>} : memref<1x128xf32, #tpu.memory_space<vmem>>, vector<1x128xf32>,
    %17 = arith.truncf %5 : vector<128x128xf32> to vector<128x128xbf16>
    %c0_14 = arith.constant 0 : index
    %c0_15 = arith.constant 0 : index
    %18 = vector.load %arg3[%c0_14, %c0_15] : memref<128x128xbf16, #tpu.memory_space<vmem>>, vector<128x128xbf16>
    tpu.vector_store %arg3[%c0_14, %c0_15], %17 {strides = array<i32>} : memref<128x128xbf16, #tpu.memory_space<vmem>>, vector<128x128xbf16>,
    return
  }
  func.func @transform_0(%arg0: i32) -> (i32, i32) {
    %c0_i32 = arith.constant 0 : i32
    %c0_i32_0 = arith.constant 0 : i32
    return %arg0, %c0_i32 : i32, i32
  }
  func.func @transform_1(%arg0: i32) -> (i32, i32) {
    %c0_i32 = arith.constant 0 : i32
    %c0_i32_0 = arith.constant 0 : i32
    %c0_i32_1 = arith.constant 0 : i32
    return %c0_i32, %c0_i32_0 : i32, i32
  }
  func.func @transform_2(%arg0: i32) -> (i32, i32) {
    %c0_i32 = arith.constant 0 : i32
    %c0_i32_0 = arith.constant 0 : i32
    return %arg0, %c0_i32 : i32, i32
  }
  func.func @transform_3(%arg0: i32) -> (i32, i32) {
    %c0_i32 = arith.constant 0 : i32
    %c0_i32_0 = arith.constant 0 : i32
    %c0_i32_1 = arith.constant 0 : i32
    return %c0_i32, %c0_i32_0 : i32, i32
  }
  func.func @transform_4(%arg0: i32) -> (i32, i32) {
    %c0_i32 = arith.constant 0 : i32
    %c0_i32_0 = arith.constant 0 : i32
    %c0_i32_1 = arith.constant 0 : i32
    return %c0_i32, %c0_i32_0 : i32, i32
  }
}

module attributes {stable_mosaic.version = 11 : i64} {
  func.func @_bn_lrelu_kernel(%arg0: i32, %arg1: memref<128x128xbf16, #tpu.memory_space<vmem>>, %arg2: memref<1x128xf32, #tpu.memory_space<vmem>>, %arg3: memref<1x128xf32, #tpu.memory_space<vmem>>, %arg4: memref<128x128xbf16, #tpu.memory_space<vmem>>) attributes {dimension_semantics = [#tpu.dimension_semantics<parallel>], iteration_bounds = array<i64: 1>, scalar_prefetch = 0 : i64, scratch_operands = 0 : i64, tpu.core_type = #tpu.core_type<tc>, window_params = [{transform_indices = @transform_0, window_bounds = array<i64: 128, 128>}, {pipeline_mode = #tpu.pipeline_mode<synchronous>, transform_indices = @transform_1, window_bounds = array<i64: 1, 128>}, {pipeline_mode = #tpu.pipeline_mode<synchronous>, transform_indices = @transform_2, window_bounds = array<i64: 1, 128>}, {transform_indices = @transform_3, window_bounds = array<i64: 128, 128>}]} {
    %c0 = arith.constant 0 : index
    %c0_0 = arith.constant 0 : index
    %0 = vector.load %arg1[%c0, %c0_0] : memref<128x128xbf16, #tpu.memory_space<vmem>>, vector<128x128xbf16>
    %1 = arith.extf %0 : vector<128x128xbf16> to vector<128x128xf32>
    %c0_1 = arith.constant 0 : index
    %c0_2 = arith.constant 0 : index
    %2 = vector.load %arg2[%c0_1, %c0_2] : memref<1x128xf32, #tpu.memory_space<vmem>>, vector<1x128xf32>
    %3 = vector.broadcast %2 : vector<1x128xf32> to vector<128x128xf32>
    %4 = arith.mulf %1, %3 : vector<128x128xf32>
    %c0_3 = arith.constant 0 : index
    %c0_4 = arith.constant 0 : index
    %5 = vector.load %arg3[%c0_3, %c0_4] : memref<1x128xf32, #tpu.memory_space<vmem>>, vector<1x128xf32>
    %6 = vector.broadcast %5 : vector<1x128xf32> to vector<128x128xf32>
    %7 = arith.addf %4, %6 : vector<128x128xf32>
    %cst = arith.constant 0.000000e+00 : f32
    %8 = vector.broadcast %cst : f32 to vector<128x128xf32>
    %9 = arith.cmpf ogt, %7, %8 : vector<128x128xf32>
    %cst_5 = arith.constant 2.000000e-01 : f32
    %10 = vector.broadcast %cst_5 : f32 to vector<128x128xf32>
    %11 = arith.mulf %10, %7 : vector<128x128xf32>
    %12 = arith.select %9, %7, %11 : vector<128x128xi1>, vector<128x128xf32>
    %13 = arith.truncf %12 : vector<128x128xf32> to vector<128x128xbf16>
    %c0_6 = arith.constant 0 : index
    %c0_7 = arith.constant 0 : index
    %14 = vector.load %arg4[%c0_6, %c0_7] : memref<128x128xbf16, #tpu.memory_space<vmem>>, vector<128x128xbf16>
    tpu.vector_store %arg4[%c0_6, %c0_7], %13 {strides = array<i32>} : memref<128x128xbf16, #tpu.memory_space<vmem>>, vector<128x128xbf16>,
    return
  }
  func.func @transform_0(%arg0: i32) -> (i32, i32) {
    %c0_i32 = arith.constant 0 : i32
    %c0_i32_0 = arith.constant 0 : i32
    return %arg0, %c0_i32 : i32, i32
  }
  func.func @transform_1(%arg0: i32) -> (i32, i32) {
    %c0_i32 = arith.constant 0 : i32
    %c0_i32_0 = arith.constant 0 : i32
    %c0_i32_1 = arith.constant 0 : i32
    return %c0_i32, %c0_i32_0 : i32, i32
  }
  func.func @transform_2(%arg0: i32) -> (i32, i32) {
    %c0_i32 = arith.constant 0 : i32
    %c0_i32_0 = arith.constant 0 : i32
    %c0_i32_1 = arith.constant 0 : i32
    return %c0_i32, %c0_i32_0 : i32, i32
  }
  func.func @transform_3(%arg0: i32) -> (i32, i32) {
    %c0_i32 = arith.constant 0 : i32
    %c0_i32_0 = arith.constant 0 : i32
    return %arg0, %c0_i32 : i32, i32
  }
}

module attributes {stable_mosaic.version = 11 : i64} {
  func.func @_matmul_stats_kernel(%arg0: i32, %arg1: memref<32x512xbf16, #tpu.memory_space<vmem>>, %arg2: memref<512x128xbf16, #tpu.memory_space<vmem>>, %arg3: memref<32x128xbf16, #tpu.memory_space<vmem>>, %arg4: memref<1x128xf32, #tpu.memory_space<vmem>>, %arg5: memref<1x128xf32, #tpu.memory_space<vmem>>) attributes {dimension_semantics = [#tpu.dimension_semantics<arbitrary>], iteration_bounds = array<i64: 1>, scalar_prefetch = 0 : i64, scratch_operands = 0 : i64, tpu.core_type = #tpu.core_type<tc>, window_params = [{transform_indices = @transform_0, window_bounds = array<i64: 32, 512>}, {pipeline_mode = #tpu.pipeline_mode<synchronous>, transform_indices = @transform_1, window_bounds = array<i64: 512, 128>}, {transform_indices = @transform_2, window_bounds = array<i64: 32, 128>}, {pipeline_mode = #tpu.pipeline_mode<synchronous>, transform_indices = @transform_3, window_bounds = array<i64: 1, 128>}, {pipeline_mode = #tpu.pipeline_mode<synchronous>, transform_indices = @transform_4, window_bounds = array<i64: 1, 128>}]} {
    %c0_i32 = arith.constant 0 : i32
    %0 = arith.cmpi eq, %arg0, %c0_i32 : i32
    %1 = arith.extui %0 : i1 to i32
    %c0_i32_0 = arith.constant 0 : i32
    %2 = arith.cmpi ne, %1, %c0_i32_0 : i32
    scf.if %2 {
      %cst_16 = arith.constant 0.000000e+00 : f32
      %19 = vector.broadcast %cst_16 : f32 to vector<1x128xf32>
      %c0_17 = arith.constant 0 : index
      %c0_18 = arith.constant 0 : index
      %20 = vector.load %arg4[%c0_17, %c0_18] : memref<1x128xf32, #tpu.memory_space<vmem>>, vector<1x128xf32>
      tpu.vector_store %arg4[%c0_17, %c0_18], %19 {strides = array<i32>} : memref<1x128xf32, #tpu.memory_space<vmem>>, vector<1x128xf32>,
      %cst_19 = arith.constant 0.000000e+00 : f32
      %21 = vector.broadcast %cst_19 : f32 to vector<1x128xf32>
      %c0_20 = arith.constant 0 : index
      %c0_21 = arith.constant 0 : index
      %22 = vector.load %arg5[%c0_20, %c0_21] : memref<1x128xf32, #tpu.memory_space<vmem>>, vector<1x128xf32>
      tpu.vector_store %arg5[%c0_20, %c0_21], %21 {strides = array<i32>} : memref<1x128xf32, #tpu.memory_space<vmem>>, vector<1x128xf32>,
    } else {
    }
    %c0 = arith.constant 0 : index
    %c0_1 = arith.constant 0 : index
    %3 = vector.load %arg1[%c0, %c0_1] : memref<32x512xbf16, #tpu.memory_space<vmem>>, vector<32x512xbf16>
    %c0_2 = arith.constant 0 : index
    %c0_3 = arith.constant 0 : index
    %4 = vector.load %arg2[%c0_2, %c0_3] : memref<512x128xbf16, #tpu.memory_space<vmem>>, vector<512x128xbf16>
    %cst = arith.constant dense<0.000000e+00> : vector<32x128xf32>
    %5 = tpu.matmul %3, %4, %cst {dimension_numbers = #tpu.dot_dimension_numbers<[1], [0], [0], [1], [0, 0, 1, 1], [], []>} : vector<32x512xbf16>, vector<512x128xbf16>, vector<32x128xf32> -> vector<32x128xf32>
    %c0_4 = arith.constant 0 : index
    %c0_5 = arith.constant 0 : index
    %6 = vector.load %arg4[%c0_4, %c0_5] : memref<1x128xf32, #tpu.memory_space<vmem>>, vector<1x128xf32>
    %cst_6 = arith.constant dense<0.000000e+00> : vector<128xf32>
    %7 = vector.multi_reduction <add>, %5, %cst_6 [0] : vector<32x128xf32> to vector<128xf32>
    %8 = vector.shape_cast %7 : vector<128xf32> to vector<1x128xf32>
    %9 = arith.addf %6, %8 : vector<1x128xf32>
    %c0_7 = arith.constant 0 : index
    %c0_8 = arith.constant 0 : index
    %10 = vector.load %arg4[%c0_7, %c0_8] : memref<1x128xf32, #tpu.memory_space<vmem>>, vector<1x128xf32>
    tpu.vector_store %arg4[%c0_7, %c0_8], %9 {strides = array<i32>} : memref<1x128xf32, #tpu.memory_space<vmem>>, vector<1x128xf32>,
    %c0_9 = arith.constant 0 : index
    %c0_10 = arith.constant 0 : index
    %11 = vector.load %arg5[%c0_9, %c0_10] : memref<1x128xf32, #tpu.memory_space<vmem>>, vector<1x128xf32>
    %12 = arith.mulf %5, %5 : vector<32x128xf32>
    %cst_11 = arith.constant dense<0.000000e+00> : vector<128xf32>
    %13 = vector.multi_reduction <add>, %12, %cst_11 [0] : vector<32x128xf32> to vector<128xf32>
    %14 = vector.shape_cast %13 : vector<128xf32> to vector<1x128xf32>
    %15 = arith.addf %11, %14 : vector<1x128xf32>
    %c0_12 = arith.constant 0 : index
    %c0_13 = arith.constant 0 : index
    %16 = vector.load %arg5[%c0_12, %c0_13] : memref<1x128xf32, #tpu.memory_space<vmem>>, vector<1x128xf32>
    tpu.vector_store %arg5[%c0_12, %c0_13], %15 {strides = array<i32>} : memref<1x128xf32, #tpu.memory_space<vmem>>, vector<1x128xf32>,
    %17 = arith.truncf %5 : vector<32x128xf32> to vector<32x128xbf16>
    %c0_14 = arith.constant 0 : index
    %c0_15 = arith.constant 0 : index
    %18 = vector.load %arg3[%c0_14, %c0_15] : memref<32x128xbf16, #tpu.memory_space<vmem>>, vector<32x128xbf16>
    tpu.vector_store %arg3[%c0_14, %c0_15], %17 {strides = array<i32>} : memref<32x128xbf16, #tpu.memory_space<vmem>>, vector<32x128xbf16>,
    return
  }
  func.func @transform_0(%arg0: i32) -> (i32, i32) {
    %c0_i32 = arith.constant 0 : i32
    %c0_i32_0 = arith.constant 0 : i32
    return %arg0, %c0_i32 : i32, i32
  }
  func.func @transform_1(%arg0: i32) -> (i32, i32) {
    %c0_i32 = arith.constant 0 : i32
    %c0_i32_0 = arith.constant 0 : i32
    %c0_i32_1 = arith.constant 0 : i32
    return %c0_i32, %c0_i32_0 : i32, i32
  }
  func.func @transform_2(%arg0: i32) -> (i32, i32) {
    %c0_i32 = arith.constant 0 : i32
    %c0_i32_0 = arith.constant 0 : i32
    return %arg0, %c0_i32 : i32, i32
  }
  func.func @transform_3(%arg0: i32) -> (i32, i32) {
    %c0_i32 = arith.constant 0 : i32
    %c0_i32_0 = arith.constant 0 : i32
    %c0_i32_1 = arith.constant 0 : i32
    return %c0_i32, %c0_i32_0 : i32, i32
  }
  func.func @transform_4(%arg0: i32) -> (i32, i32) {
    %c0_i32 = arith.constant 0 : i32
    %c0_i32_0 = arith.constant 0 : i32
    %c0_i32_1 = arith.constant 0 : i32
    return %c0_i32, %c0_i32_0 : i32, i32
  }
}

module attributes {stable_mosaic.version = 11 : i64} {
  func.func @_bn_lrelu_kernel(%arg0: i32, %arg1: memref<32x128xbf16, #tpu.memory_space<vmem>>, %arg2: memref<1x128xf32, #tpu.memory_space<vmem>>, %arg3: memref<1x128xf32, #tpu.memory_space<vmem>>, %arg4: memref<32x128xbf16, #tpu.memory_space<vmem>>) attributes {dimension_semantics = [#tpu.dimension_semantics<parallel>], iteration_bounds = array<i64: 1>, scalar_prefetch = 0 : i64, scratch_operands = 0 : i64, tpu.core_type = #tpu.core_type<tc>, window_params = [{transform_indices = @transform_0, window_bounds = array<i64: 32, 128>}, {pipeline_mode = #tpu.pipeline_mode<synchronous>, transform_indices = @transform_1, window_bounds = array<i64: 1, 128>}, {pipeline_mode = #tpu.pipeline_mode<synchronous>, transform_indices = @transform_2, window_bounds = array<i64: 1, 128>}, {transform_indices = @transform_3, window_bounds = array<i64: 32, 128>}]} {
    %c0 = arith.constant 0 : index
    %c0_0 = arith.constant 0 : index
    %0 = vector.load %arg1[%c0, %c0_0] : memref<32x128xbf16, #tpu.memory_space<vmem>>, vector<32x128xbf16>
    %1 = arith.extf %0 : vector<32x128xbf16> to vector<32x128xf32>
    %c0_1 = arith.constant 0 : index
    %c0_2 = arith.constant 0 : index
    %2 = vector.load %arg2[%c0_1, %c0_2] : memref<1x128xf32, #tpu.memory_space<vmem>>, vector<1x128xf32>
    %3 = vector.broadcast %2 : vector<1x128xf32> to vector<32x128xf32>
    %4 = arith.mulf %1, %3 : vector<32x128xf32>
    %c0_3 = arith.constant 0 : index
    %c0_4 = arith.constant 0 : index
    %5 = vector.load %arg3[%c0_3, %c0_4] : memref<1x128xf32, #tpu.memory_space<vmem>>, vector<1x128xf32>
    %6 = vector.broadcast %5 : vector<1x128xf32> to vector<32x128xf32>
    %7 = arith.addf %4, %6 : vector<32x128xf32>
    %cst = arith.constant 0.000000e+00 : f32
    %8 = vector.broadcast %cst : f32 to vector<32x128xf32>
    %9 = arith.cmpf ogt, %7, %8 : vector<32x128xf32>
    %cst_5 = arith.constant 2.000000e-01 : f32
    %10 = vector.broadcast %cst_5 : f32 to vector<32x128xf32>
    %11 = arith.mulf %10, %7 : vector<32x128xf32>
    %12 = arith.select %9, %7, %11 : vector<32x128xi1>, vector<32x128xf32>
    %13 = arith.truncf %12 : vector<32x128xf32> to vector<32x128xbf16>
    %c0_6 = arith.constant 0 : index
    %c0_7 = arith.constant 0 : index
    %14 = vector.load %arg4[%c0_6, %c0_7] : memref<32x128xbf16, #tpu.memory_space<vmem>>, vector<32x128xbf16>
    tpu.vector_store %arg4[%c0_6, %c0_7], %13 {strides = array<i32>} : memref<32x128xbf16, #tpu.memory_space<vmem>>, vector<32x128xbf16>,
    return
  }
  func.func @transform_0(%arg0: i32) -> (i32, i32) {
    %c0_i32 = arith.constant 0 : i32
    %c0_i32_0 = arith.constant 0 : i32
    return %arg0, %c0_i32 : i32, i32
  }
  func.func @transform_1(%arg0: i32) -> (i32, i32) {
    %c0_i32 = arith.constant 0 : i32
    %c0_i32_0 = arith.constant 0 : i32
    %c0_i32_1 = arith.constant 0 : i32
    return %c0_i32, %c0_i32_0 : i32, i32
  }
  func.func @transform_2(%arg0: i32) -> (i32, i32) {
    %c0_i32 = arith.constant 0 : i32
    %c0_i32_0 = arith.constant 0 : i32
    %c0_i32_1 = arith.constant 0 : i32
    return %c0_i32, %c0_i32_0 : i32, i32
  }
  func.func @transform_3(%arg0: i32) -> (i32, i32) {
    %c0_i32 = arith.constant 0 : i32
    %c0_i32_0 = arith.constant 0 : i32
    return %arg0, %c0_i32 : i32, i32
  }
}

</mosaic_0001>

<llo_original>
// kernel: discriminator_forward.7
$region0: #{discriminator_forward.7}
  #allocation0 [shape = 'u32[]', space=smem, size = 0x4, offset = 0x4, fixed_abs, tag = 'smem constant byte address 0x4 - core index']
  #allocation1 [shape = 'u32[144,128]{1,0:T(1,128)}', space=vmem, size = 0x12000, scoped, tag = 'internal scratch']
  %s0 = inlined_call_operand.vmem [shape: bf16[2048,128], index: 0, kind: input, shape index: {}]
  %s1 = inlined_call_operand.vmem [shape: bf16[128,128], index: 1, kind: input, shape index: {}]
  %s2 = inlined_call_operand.vmem [shape: bf16[2048,128], index: 2, kind: output, shape index: {}]
  %s3 = sld [smem:[#allocation0]]
  $region41: #{discriminator_forward.7} parent=0
    _
  %s5 = ssub.s32 1, %s3
  %s6 = scalar_select 0, %s5, %s3
  loop: start=0, step=1, limit=6
  $region2: #{discriminator_forward.7} parent=0 // loop_pre_header
    _
  $region3: #{discriminator_forward.7} parent=0 // loop_header
    %s8 = sphi 0, %s12
    %p9 = scmp.ge.s32.totalorder %s8, 6
    %s18 = sphi 0, %s20
    %s21 = sphi 0, %s18
    %s22 = sphi 0, %s21
    %s38 = sphi 0, %s22
    %s42 = sphi 0, %s42
    %s44 = sphi 0, %s42
    %s45 = sphi 0, %s44
    %s59 = sphi 0, %s45
    %s65 = sphi 0, %s67
    %s68 = sphi 0, %s65
    %s69 = sphi 0, %s68
    %s85 = sphi 0, %s69
  $region4: #{discriminator_forward.7} parent=0 // loop_header_branch
    %11 = sbr.rel (%p9) target = $region8
  $region5: #{discriminator_forward.7} parent=0 // loop_body
    %s13 = ssub.s32 %s8, 1
    %s14 = ssub.s32 %s8, 2
    %s15 = sadd.s32 %s8, 1
    %s16 = ssub.s32 %s8, %s15
    %p17 = scmp.eq.s32.totalorder %s16, 0
    %s19 = sadd.s32 %s18, 1
    %s20 = scalar_select %p17, %s18, %s19
    %p23 = pneg %p17
    %p24 = scmp.eq.s32.totalorder %s8, 3
    %p25 = por %p23, %p24
    %p26 = scmp.ne.s32.totalorder %s18, %s21
    %p27 = scmp.eq.s32.totalorder %s8, 0
    %p28 = por %p26, %p27
    %p29 = scmp.ne.s32.totalorder %s18, %s21
    %p30 = scmp.eq.s32.totalorder %s13, 3
    %p31 = por %p29, %p30
    %p32 = scmp.ne.s32.totalorder %s21, %s22
    %p33 = scmp.eq.s32.totalorder %s13, 0
    %p34 = por %p32, %p33
    %p35 = scmp.ne.s32.totalorder %s21, %s22
    %p36 = scmp.eq.s32.totalorder %s14, 3
    %p37 = por %p35, %p36
    %p39 = scmp.ne.s32.totalorder %s22, %s38
    %p40 = scmp.eq.s32.totalorder %s14, 0
    %p41 = por %p39, %p40
    %s43 = sadd.s32 %s42, 1
    %p46 = scmp.eq.s32.totalorder %s8, 3
    %p47 = scmp.ne.s32.totalorder %s42, %s44
    %p48 = scmp.eq.s32.totalorder %s8, 0
    %p49 = por %p47, %p48
    %p50 = scmp.ne.s32.totalorder %s42, %s44
    %p51 = scmp.eq.s32.totalorder %s13, 3
    %p52 = por %p50, %p51
    %p53 = scmp.ne.s32.totalorder %s44, %s45
    %p54 = scmp.eq.s32.totalorder %s13, 0
    %p55 = por %p53, %p54
    %p56 = scmp.ne.s32.totalorder %s44, %s45
    %p57 = scmp.eq.s32.totalorder %s14, 3
    %p58 = por %p56, %p57
    %p60 = scmp.ne.s32.totalorder %s45, %s59
    %p61 = scmp.eq.s32.totalorder %s14, 0
    %p62 = por %p60, %p61
    %s63 = ssub.s32 %s8, %s15
    %p64 = scmp.eq.s32.totalorder %s63, 0
    %s66 = sadd.s32 %s65, 1
    %s67 = scalar_select %p64, %s65, %s66
    %p70 = pneg %p64
    %p71 = scmp.eq.s32.totalorder %s8, 3
    %p72 = por %p70, %p71
    %p73 = scmp.ne.s32.totalorder %s65, %s68
    %p74 = scmp.eq.s32.totalorder %s8, 0
    %p75 = por %p73, %p74
    %p76 = scmp.ne.s32.totalorder %s65, %s68
    %p77 = scmp.eq.s32.totalorder %s13, 3
    %p78 = por %p76, %p77
    %p79 = scmp.ne.s32.totalorder %s68, %s69
    %p80 = scmp.eq.s32.totalorder %s13, 0
    %p81 = por %p79, %p80
    %p82 = scmp.ne.s32.totalorder %s68, %s69
    %p83 = scmp.eq.s32.totalorder %s14, 3
    %p84 = por %p82, %p83
    %p86 = scmp.ne.s32.totalorder %s69, %s85
    %p87 = scmp.eq.s32.totalorder %s14, 0
    %p88 = por %p86, %p87
    %p89 = scmp.le.s32.totalorder 1, %s8
    %p90 = scmp.lt.s32.totalorder %s8, 5
    %p91 = pnand %p89, %p90
    %p92 = pneg %p91
    // Predicated region
    $region9: #{discriminator_forward.7} parent=5 // pred_check
      _
    $region10: #{discriminator_forward.7} parent=5 // pred_check_branch
      %94 = sbr.rel (%p91) target = $region12
    $region11: #{discriminator_forward.7} parent=5 // pred_region
      %s95 = ssub.s32 %s8, 1
      // Predicated region
      $region13: #{discriminator_forward.7} parent=11 // pred_check
        %p96 = pneg %p55
      $region14: #{discriminator_forward.7} parent=11 // pred_check_branch
        %98 = sbr.rel (%p96) target = $region16
      $region15: #{discriminator_forward.7} parent=11 // pred_region
        _
      $region16: #{discriminator_forward.7} parent=11 // pred_fallthru
        _
    $region12: #{discriminator_forward.7} parent=5 // pred_fallthru
      _
    %p99 = scmp.lt.s32.totalorder %s8, 4
    // Predicated region
    $region17: #{discriminator_forward.7} parent=5 // pred_check
      %p100 = pneg %p99
    $region18: #{discriminator_forward.7} parent=5 // pred_check_branch
      %102 = sbr.rel (%p100) target = $region20
    $region19: #{discriminator_forward.7} parent=5 // pred_region
      // Predicated region
      $region21: #{discriminator_forward.7} parent=19 // pred_check
        %p103 = pneg %p28
      $region22: #{discriminator_forward.7} parent=19 // pred_check_branch
        %105 = sbr.rel (%p103) target = $region24
      $region23: #{discriminator_forward.7} parent=19 // pred_region
        %s106 = smul.u32 64, %s8
        %p107 = scmp.lt.s32.totalorder %s106, 255
        %s108 = scalar_select %p107, %s106, 255
        %s109 = smul.addr %s108, 4
        %s110 = scalar_lea.vmem %s0, %s109
        %s111 = smul.u32 64, %s8
      $region24: #{discriminator_forward.7} parent=19 // pred_fallthru
        _
    $region20: #{discriminator_forward.7} parent=5 // pred_fallthru
      _
    %p112 = scmp.le.s32.totalorder 1, %s8
    %p113 = scmp.lt.s32.totalorder %s8, 5
    %p114 = pnand %p112, %p113
    %p115 = pneg %p114
    // Predicated region
    $region25: #{discriminator_forward.7} parent=5 // pred_check
      _
    $region26: #{discriminator_forward.7} parent=5 // pred_check_branch
      %117 = sbr.rel (%p114) target = $region28
    $region27: #{discriminator_forward.7} parent=5 // pred_region
      %s118 = ssub.s32 %s8, 1
      %s119 = smul.u32 64, %s13
      %p120 = scmp.lt.s32.totalorder %s119, 255
      %s121 = scalar_select %p120, %s119, 255
      %s122 = smul.addr %s121, 4
      %s123 = scalar_lea.vmem %s0, %s122
      %p124 = pneg %p34
      %p125 = pneg %p31
      %p126 = pneg %p55
      %p127 = pneg %p52
      %p128 = pneg %p81
      %p129 = pneg %p78
      %s130 = smul.u32 64, %s13
      %p131 = scmp.lt.s32.totalorder %s130, 255
      %s132 = scalar_select %p131, %s130, 255
      %s133 = smul.addr %s132, 4
      %s134 = scalar_lea.vmem %s2, %s133
      %s135 = smul.u32 64, %s13
      %p136 = scmp.lt.s32.totalorder %s135, 255
      %s137 = scalar_select %p136, %s135, 255
      %s138 = smul.addr %s137, 4
      %s139 = scalar_lea.vmem %s0, %s138
      %s140 = smul.u32 64, %s13
      %s141 = smul.u32 64, %s13
      %p142 = scmp.lt.s32.totalorder %s141, 255
      %s143 = scalar_select %p142, %s141, 255
      %s144 = smul.addr %s143, 4
      %s145 = scalar_lea.vmem %s2, %s144
      %s146 = smul.u32 64, %s13
      %v148 = vld [vmem:[%s139] sm:$0xf]
      %v149 = vld [vmem:[%s139 + $0x4] sm:$0xf]
      %v150 = vld [vmem:[%s139 + $0x8] sm:$0xf]
      %v151 = vld [vmem:[%s139 + $0xc] sm:$0xf]
      %v152 = vld [vmem:[%s139 + $0x10] sm:$0xf]
      %v153 = vld [vmem:[%s139 + $0x14] sm:$0xf]
      %v154 = vld [vmem:[%s139 + $0x18] sm:$0xf]
      %v155 = vld [vmem:[%s139 + $0x1c] sm:$0xf]
      %v156 = vld [vmem:[%s139 + $0x20] sm:$0xf]
      %v157 = vld [vmem:[%s139 + $0x24] sm:$0xf]
      %v158 = vld [vmem:[%s139 + $0x28] sm:$0xf]
      %v159 = vld [vmem:[%s139 + $0x2c] sm:$0xf]
      %v160 = vld [vmem:[%s139 + $0x30] sm:$0xf]
      %v161 = vld [vmem:[%s139 + $0x34] sm:$0xf]
      %v162 = vld [vmem:[%s139 + $0x38] sm:$0xf]
      %v163 = vld [vmem:[%s139 + $0x3c] sm:$0xf]
      %v164 = vld [vmem:[%s139 + $0x40] sm:$0xf]
      %v165 = vld [vmem:[%s139 + $0x44] sm:$0xf]
      %v166 = vld [vmem:[%s139 + $0x48] sm:$0xf]
      %v167 = vld [vmem:[%s139 + $0x4c] sm:$0xf]
      %v168 = vld [vmem:[%s139 + $0x50] sm:$0xf]
      %v169 = vld [vmem:[%s139 + $0x54] sm:$0xf]
      %v170 = vld [vmem:[%s139 + $0x58] sm:$0xf]
      %v171 = vld [vmem:[%s139 + $0x5c] sm:$0xf]
      %v172 = vld [vmem:[%s139 + $0x60] sm:$0xf]
      %v173 = vld [vmem:[%s139 + $0x64] sm:$0xf]
      %v174 = vld [vmem:[%s139 + $0x68] sm:$0xf]
      %v175 = vld [vmem:[%s139 + $0x6c] sm:$0xf]
      %v176 = vld [vmem:[%s139 + $0x70] sm:$0xf]
      %v177 = vld [vmem:[%s139 + $0x74] sm:$0xf]
      %v178 = vld [vmem:[%s139 + $0x78] sm:$0xf]
      %v179 = vld [vmem:[%s139 + $0x7c] sm:$0xf]
      %v180 = vld [vmem:[%s139 + $0x80] sm:$0xf]
      %v181 = vld [vmem:[%s139 + $0x84] sm:$0xf]
      %v182 = vld [vmem:[%s139 + $0x88] sm:$0xf]
      %v183 = vld [vmem:[%s139 + $0x8c] sm:$0xf]
      %v184 = vld [vmem:[%s139 + $0x90] sm:$0xf]
      %v185 = vld [vmem:[%s139 + $0x94] sm:$0xf]
      %v186 = vld [vmem:[%s139 + $0x98] sm:$0xf]
      %v187 = vld [vmem:[%s139 + $0x9c] sm:$0xf]
      %v188 = vld [vmem:[%s139 + $0xa0] sm:$0xf]
      %v189 = vld [vmem:[%s139 + $0xa4] sm:$0xf]
      %v190 = vld [vmem:[%s139 + $0xa8] sm:$0xf]
      %v191 = vld [vmem:[%s139 + $0xac] sm:$0xf]
      %v192 = vld [vmem:[%s139 + $0xb0] sm:$0xf]
      %v193 = vld [vmem:[%s139 + $0xb4] sm:$0xf]
      %v194 = vld [vmem:[%s139 + $0xb8] sm:$0xf]
      %v195 = vld [vmem:[%s139 + $0xbc] sm:$0xf]
      %v196 = vld [vmem:[%s139 + $0xc0] sm:$0xf]
      %v197 = vld [vmem:[%s139 + $0xc4] sm:$0xf]
      %v198 = vld [vmem:[%s139 + $0xc8] sm:$0xf]
      %v199 = vld [vmem:[%s139 + $0xcc] sm:$0xf]
      %v200 = vld [vmem:[%s139 + $0xd0] sm:$0xf]
      %v201 = vld [vmem:[%s139 + $0xd4] sm:$0xf]
      %v202 = vld [vmem:[%s139 + $0xd8] sm:$0xf]
      %v203 = vld [vmem:[%s139 + $0xdc] sm:$0xf]
      %v204 = vld [vmem:[%s139 + $0xe0] sm:$0xf]
      %v205 = vld [vmem:[%s139 + $0xe4] sm:$0xf]
      %v206 = vld [vmem:[%s139 + $0xe8] sm:$0xf]
      %v207 = vld [vmem:[%s139 + $0xec] sm:$0xf]
      %v208 = vld [vmem:[%s139 + $0xf0] sm:$0xf]
      %v209 = vld [vmem:[%s139 + $0xf4] sm:$0xf]
      %v210 = vld [vmem:[%s139 + $0xf8] sm:$0xf]
      %v211 = vld [vmem:[%s139 + $0xfc] sm:$0xf]
      %v212 = vld [vmem:[%s1] sm:$0xf]
      %v213 = vld [vmem:[%s1 + $0x4] sm:$0xf]
      %v214 = vld [vmem:[%s1 + $0x8] sm:$0xf]
      %v215 = vld [vmem:[%s1 + $0xc] sm:$0xf]
      %v216 = vld [vmem:[%s1 + $0x10] sm:$0xf]
      %v217 = vld [vmem:[%s1 + $0x14] sm:$0xf]
      %v218 = vld [vmem:[%s1 + $0x18] sm:$0xf]
      %v219 = vld [vmem:[%s1 + $0x1c] sm:$0xf]
      %v220 = vld [vmem:[%s1 + $0x20] sm:$0xf]
      %v221 = vld [vmem:[%s1 + $0x24] sm:$0xf]
      %v222 = vld [vmem:[%s1 + $0x28] sm:$0xf]
      %v223 = vld [vmem:[%s1 + $0x2c] sm:$0xf]
      %v224 = vld [vmem:[%s1 + $0x30] sm:$0xf]
      %v225 = vld [vmem:[%s1 + $0x34] sm:$0xf]
      %v226 = vld [vmem:[%s1 + $0x38] sm:$0xf]
      %v227 = vld [vmem:[%s1 + $0x3c] sm:$0xf]
      %v292 = vunpack.c.l.b16 %v148
      %v293 = vunpack.c.l.b16 %v149
      %v294 = vunpack.c.l.b16 %v150
      %v295 = vunpack.c.l.b16 %v151
      %v296 = vunpack.c.l.b16 %v152
      %v297 = vunpack.c.l.b16 %v153
      %v298 = vunpack.c.l.b16 %v154
      %v299 = vunpack.c.l.b16 %v155
      %v300 = vunpack.c.l.b16 %v156
      %v301 = vunpack.c.l.b16 %v157
      %v302 = vunpack.c.l.b16 %v158
      %v303 = vunpack.c.l.b16 %v159
      %v304 = vunpack.c.l.b16 %v160
      %v305 = vunpack.c.l.b16 %v161
      %v306 = vunpack.c.l.b16 %v162
      %v307 = vunpack.c.l.b16 %v163
      %v308 = vunpack.c.l.b16 %v164
      %v309 = vunpack.c.l.b16 %v165
      %v310 = vunpack.c.l.b16 %v166
      %v311 = vunpack.c.l.b16 %v167
      %v312 = vunpack.c.l.b16 %v168
      %v313 = vunpack.c.l.b16 %v169
      %v314 = vunpack.c.l.b16 %v170
      %v315 = vunpack.c.l.b16 %v171
      %v316 = vunpack.c.l.b16 %v172
      %v317 = vunpack.c.l.b16 %v173
      %v318 = vunpack.c.l.b16 %v174
      %v319 = vunpack.c.l.b16 %v175
      %v320 = vunpack.c.l.b16 %v176
      %v321 = vunpack.c.l.b16 %v177
      %v322 = vunpack.c.l.b16 %v178
      %v323 = vunpack.c.l.b16 %v179
      %v324 = vunpack.c.l.b16 %v180
      %v325 = vunpack.c.l.b16 %v181
      %v326 = vunpack.c.l.b16 %v182
      %v327 = vunpack.c.l.b16 %v183
      %v328 = vunpack.c.l.b16 %v184
      %v329 = vunpack.c.l.b16 %v185
      %v330 = vunpack.c.l.b16 %v186
      %v331 = vunpack.c.l.b16 %v187
      %v332 = vunpack.c.l.b16 %v188
      %v333 = vunpack.c.l.b16 %v189
      %v334 = vunpack.c.l.b16 %v190
      %v335 = vunpack.c.l.b16 %v191
      %v336 = vunpack.c.l.b16 %v192
      %v337 = vunpack.c.l.b16 %v193
      %v338 = vunpack.c.l.b16 %v194
      %v339 = vunpack.c.l.b16 %v195
      %v340 = vunpack.c.l.b16 %v196
      %v341 = vunpack.c.l.b16 %v197
      %v342 = vunpack.c.l.b16 %v198
      %v343 = vunpack.c.l.b16 %v199
      %v344 = vunpack.c.l.b16 %v200
      %v345 = vunpack.c.l.b16 %v201
      %v346 = vunpack.c.l.b16 %v202
      %v347 = vunpack.c.l.b16 %v203
      %v348 = vunpack.c.l.b16 %v204
      %v349 = vunpack.c.l.b16 %v205
      %v350 = vunpack.c.l.b16 %v206
      %v351 = vunpack.c.l.b16 %v207
      %v352 = vunpack.c.l.b16 %v208
      %v353 = vunpack.c.l.b16 %v209
      %v354 = vunpack.c.l.b16 %v210
      %v355 = vunpack.c.l.b16 %v211
      %v356 = vpack.c.b16 %v293, %v292
      %v357 = vpack.c.b16 %v295, %v294
      %v358 = vpack.c.b16 %v297, %v296
      %v359 = vpack.c.b16 %v299, %v298
      %v360 = vpack.c.b16 %v301, %v300
      %v361 = vpack.c.b16 %v303, %v302
      %v362 = vpack.c.b16 %v305, %v304
      %v363 = vpack.c.b16 %v307, %v306
      %v364 = vpack.c.b16 %v309, %v308
      %v365 = vpack.c.b16 %v311, %v310
      %v366 = vpack.c.b16 %v313, %v312
      %v367 = vpack.c.b16 %v315, %v314
      %v368 = vpack.c.b16 %v317, %v316
      %v369 = vpack.c.b16 %v319, %v318
      %v370 = vpack.c.b16 %v321, %v320
      %v371 = vpack.c.b16 %v323, %v322
      %v372 = vpack.c.b16 %v325, %v324
      %v373 = vpack.c.b16 %v327, %v326
      %v374 = vpack.c.b16 %v329, %v328
      %v375 = vpack.c.b16 %v331, %v330
      %v376 = vpack.c.b16 %v333, %v332
      %v377 = vpack.c.b16 %v335, %v334
      %v378 = vpack.c.b16 %v337, %v336
      %v379 = vpack.c.b16 %v339, %v338
      %v380 = vpack.c.b16 %v341, %v340
      %v381 = vpack.c.b16 %v343, %v342
      %v382 = vpack.c.b16 %v345, %v344
      %v383 = vpack.c.b16 %v347, %v346
      %v384 = vpack.c.b16 %v349, %v348
      %v385 = vpack.c.b16 %v351, %v350
      %v386 = vpack.c.b16 %v353, %v352
      %v387 = vpack.c.b16 %v355, %v354
      %v436 = vunpack.c.l.b16 %v212
      %v437 = vunpack.c.l.b16 %v213
      %v438 = vunpack.c.l.b16 %v214
      %v439 = vunpack.c.l.b16 %v215
      %v440 = vunpack.c.l.b16 %v216
      %v441 = vunpack.c.l.b16 %v217
      %v442 = vunpack.c.l.b16 %v218
      %v443 = vunpack.c.l.b16 %v219
      %v444 = vunpack.c.l.b16 %v220
      %v445 = vunpack.c.l.b16 %v221
      %v446 = vunpack.c.l.b16 %v222
      %v447 = vunpack.c.l.b16 %v223
      %v448 = vunpack.c.l.b16 %v224
      %v449 = vunpack.c.l.b16 %v225
      %v450 = vunpack.c.l.b16 %v226
      %v451 = vunpack.c.l.b16 %v227
      %v452 = vpack.c.b16 %v437, %v436
      %v453 = vpack.c.b16 %v439, %v438
      %v454 = vpack.c.b16 %v441, %v440
      %v455 = vpack.c.b16 %v443, %v442
      %v456 = vpack.c.b16 %v445, %v444
      %v457 = vpack.c.b16 %v447, %v446
      %v458 = vpack.c.b16 %v449, %v448
      %v459 = vpack.c.b16 %v451, %v450
      %468 = vmatprep.subr.bf16.mxu0 0
      %469 = vmatpush1.bf16.msra.mxu0 %v452
      %470 = vmatprep.subr.bf16.mxu0 0
      %471 = vmatpush1.bf16.msra.mxu0 %v453
      %472 = vmatprep.subr.bf16.mxu0 0
      %473 = vmatpush1.bf16.msra.mxu0 %v454
      %474 = vmatprep.subr.bf16.mxu0 0
      %475 = vmatpush1.bf16.msra.mxu0 %v455
      %476 = vmatprep.subr.bf16.mxu0 0
      %477 = vmatpush1.bf16.msra.mxu0 %v456
      %478 = vmatprep.subr.bf16.mxu0 0
      %479 = vmatpush1.bf16.msra.mxu0 %v457
      %480 = vmatprep.subr.bf16.mxu0 0
      %481 = vmatpush1.bf16.msra.mxu0 %v458
      %482 = vmatprep.subr.bf16.mxu0 0
      %483 = vmatpush1.bf16.msra.mxu0 %v459
      %484 = vmatprep.subr.bf16.mxu0 0
      %485 = vmatpush1.bf16.msra.mxu0 0
      %486 = vmatprep.subr.bf16.mxu0 0
      %487 = vmatpush1.bf16.msra.mxu0 0
      %488 = vmatprep.subr.bf16.mxu0 0
      %489 = vmatpush1.bf16.msra.mxu0 0
      %490 = vmatprep.subr.bf16.mxu0 0
      %491 = vmatpush1.bf16.msra.mxu0 0
      %492 = vmatprep.subr.bf16.mxu0 0
      %493 = vmatpush1.bf16.msra.mxu0 0
      %494 = vmatprep.subr.bf16.mxu0 0
      %495 = vmatpush1.bf16.msra.mxu0 0
      %496 = vmatprep.subr.bf16.mxu0 0
      %497 = vmatpush1.bf16.msra.mxu0 0
      %498 = vmatprep.subr.bf16.mxu0 0
      %499 = vmatpush1.bf16.msra.mxu0 0
      %500 = vmatprep.mubr.bf16.mxu0 0
      %501 = vmatmul.mubr.bf16.gmra.mrb[0].mxu0 %v356
      %v502 = vpop.f32.mrb[0].mxu0
      %v503 = vadd.f32 0.0, %v502
      %v504 = vpop.f32.mrb[0].mxu0
      %v505 = vpop.f32.mrb[0].mxu0
      %v506 = vadd.f32 0.0, %v505
      %v507 = vpop.f32.mrb[0].mxu0
      %508 = vmatprep.mubr.bf16.mxu0 0
      %509 = vmatmul.mubr.bf16.gmra.mrb[0].mxu0 %v357
      %v510 = vpop.f32.mrb[0].mxu0
      %v511 = vadd.f32 0.0, %v510
      %v512 = vpop.f32.mrb[0].mxu0
      %v513 = vpop.f32.mrb[0].mxu0
      %v514 = vadd.f32 0.0, %v513
      %v515 = vpop.f32.mrb[0].mxu0
      %516 = vmatprep.mubr.bf16.mxu0 0
      %517 = vmatmul.mubr.bf16.gmra.mrb[0].mxu0 %v358
      %v518 = vpop.f32.mrb[0].mxu0
      %v519 = vadd.f32 0.0, %v518
      %v520 = vpop.f32.mrb[0].mxu0
      %v521 = vpop.f32.mrb[0].mxu0
      %v522 = vadd.f32 0.0, %v521
      %v523 = vpop.f32.mrb[0].mxu0
      %524 = vmatprep.mubr.bf16.mxu0 0
      %525 = vmatmul.mubr.bf16.gmra.mrb[0].mxu0 %v359
      %v526 = vpop.f32.mrb[0].mxu0
      %v527 = vadd.f32 0.0, %v526
      %v528 = vpop.f32.mrb[0].mxu0
      %v529 = vpop.f32.mrb[0].mxu0
      %v530 = vadd.f32 0.0, %v529
      %v531 = vpop.f32.mrb[0].mxu0
      %532 = vmatprep.mubr.bf16.mxu0 0
      %533 = vmatmul.mubr.bf16.gmra.mrb[0].mxu0 %v360
      %v534 = vpop.f32.mrb[0].mxu0
      %v535 = vadd.f32 0.0, %v534
      %v536 = vpop.f32.mrb[0].mxu0
      %v537 = vpop.f32.mrb[0].mxu0
      %v538 = vadd.f32 0.0, %v537
      %v539 = vpop.f32.mrb[0].mxu0
      %540 = vmatprep.mubr.bf16.mxu0 0
      %541 = vmatmul.mubr.bf16.gmra.mrb[0].mxu0 %v361
      %v542 = vpop.f32.mrb[0].mxu0
      %v543 = vadd.f32 0.0, %v542
      %v544 = vpop.f32.mrb[0].mxu0
      %v545 = vpop.f32.mrb[0].mxu0
      %v546 = vadd.f32 0.0, %v545
      %v547 = vpop.f32.mrb[0].mxu0
      %548 = vmatprep.mubr.bf16.mxu0 0
      %549 = vmatmul.mubr.bf16.gmra.mrb[0].mxu0 %v362
      %v550 = vpop.f32.mrb[0].mxu0
      %v551 = vadd.f32 0.0, %v550
      %v552 = vpop.f32.mrb[0].mxu0
      %v553 = vpop.f32.mrb[0].mxu0
      %v554 = vadd.f32 0.0, %v553
      %v555 = vpop.f32.mrb[0].mxu0
      %556 = vmatprep.mubr.bf16.mxu0 0
      %557 = vmatmul.mubr.bf16.gmra.mrb[0].mxu0 %v363
      %v558 = vpop.f32.mrb[0].mxu0
      %v559 = vadd.f32 0.0, %v558
      %v560 = vpop.f32.mrb[0].mxu0
      %v561 = vpop.f32.mrb[0].mxu0
      %v562 = vadd.f32 0.0, %v561
      %v563 = vpop.f32.mrb[0].mxu0
      %564 = vmatprep.mubr.bf16.mxu0 0
      %565 = vmatmul.mubr.bf16.gmra.mrb[0].mxu0 %v364
      %v566 = vpop.f32.mrb[0].mxu0
      %v567 = vadd.f32 0.0, %v566
      %v568 = vpop.f32.mrb[0].mxu0
      %v569 = vpop.f32.mrb[0].mxu0
      %v570 = vadd.f32 0.0, %v569
      %v571 = vpop.f32.mrb[0].mxu0
      %572 = vmatprep.mubr.bf16.mxu0 0
      %573 = vmatmul.mubr.bf16.gmra.mrb[0].mxu0 %v365
      %v574 = vpop.f32.mrb[0].mxu0
      %v575 = vadd.f32 0.0, %v574
      %v576 = vpop.f32.mrb[0].mxu0
      %v577 = vpop.f32.mrb[0].mxu0
      %v578 = vadd.f32 0.0, %v577
      %v579 = vpop.f32.mrb[0].mxu0
      %580 = vmatprep.mubr.bf16.mxu0 0
      %581 = vmatmul.mubr.bf16.gmra.mrb[0].mxu0 %v366
      %v582 = vpop.f32.mrb[0].mxu0
      %v583 = vadd.f32 0.0, %v582
      %v584 = vpop.f32.mrb[0].mxu0
      %v585 = vpop.f32.mrb[0].mxu0
      %v586 = vadd.f32 0.0, %v585
      %v587 = vpop.f32.mrb[0].mxu0
      %588 = vmatprep.mubr.bf16.mxu0 0
      %589 = vmatmul.mubr.bf16.gmra.mrb[0].mxu0 %v367
      %v590 = vpop.f32.mrb[0].mxu0
      %v591 = vadd.f32 0.0, %v590
      %v592 = vpop.f32.mrb[0].mxu0
      %v593 = vpop.f32.mrb[0].mxu0
      %v594 = vadd.f32 0.0, %v593
      %v595 = vpop.f32.mrb[0].mxu0
      %596 = vmatprep.mubr.bf16.mxu0 0
      %597 = vmatmul.mubr.bf16.gmra.mrb[0].mxu0 %v368
      %v598 = vpop.f32.mrb[0].mxu0
      %v599 = vadd.f32 0.0, %v598
      %v600 = vpop.f32.mrb[0].mxu0
      %v601 = vpop.f32.mrb[0].mxu0
      %v602 = vadd.f32 0.0, %v601
      %v603 = vpop.f32.mrb[0].mxu0
      %604 = vmatprep.mubr.bf16.mxu0 0
      %605 = vmatmul.mubr.bf16.gmra.mrb[0].mxu0 %v369
      %v606 = vpop.f32.mrb[0].mxu0
      %v607 = vadd.f32 0.0, %v606
      %v608 = vpop.f32.mrb[0].mxu0
      %v609 = vpop.f32.mrb[0].mxu0
      %v610 = vadd.f32 0.0, %v609
      %v611 = vpop.f32.mrb[0].mxu0
      %612 = vmatprep.mubr.bf16.mxu0 0
      %613 = vmatmul.mubr.bf16.gmra.mrb[0].mxu0 %v370
      %v614 = vpop.f32.mrb[0].mxu0
      %v615 = vadd.f32 0.0, %v614
      %v616 = vpop.f32.mrb[0].mxu0
      %v617 = vpop.f32.mrb[0].mxu0
      %v618 = vadd.f32 0.0, %v617
      %v619 = vpop.f32.mrb[0].mxu0
      %620 = vmatprep.mubr.bf16.mxu0 0
      %621 = vmatmul.mubr.bf16.gmra.mrb[0].mxu0 %v371
      %v622 = vpop.f32.mrb[0].mxu0
      %v623 = vadd.f32 0.0, %v622
      %v624 = vpop.f32.mrb[0].mxu0
      %v625 = vpop.f32.mrb[0].mxu0
      %v626 = vadd.f32 0.0, %v625
      %v627 = vpop.f32.mrb[0].mxu0
      %628 = vmatprep.mubr.bf16.mxu0 0
      %629 = vmatmul.mubr.bf16.gmra.mrb[0].mxu0 %v372
      %v630 = vpop.f32.mrb[0].mxu0
      %v631 = vadd.f32 0.0, %v630
      %v632 = vpop.f32.mrb[0].mxu0
      %v633 = vpop.f32.mrb[0].mxu0
      %v634 = vadd.f32 0.0, %v633
      %v635 = vpop.f32.mrb[0].mxu0
      %636 = vmatprep.mubr.bf16.mxu0 0
      %637 = vmatmul.mubr.bf16.gmra.mrb[0].mxu0 %v373
      %v638 = vpop.f32.mrb[0].mxu0
      %v639 = vadd.f32 0.0, %v638
      %v640 = vpop.f32.mrb[0].mxu0
      %v641 = vpop.f32.mrb[0].mxu0
      %v642 = vadd.f32 0.0, %v641
      %v643 = vpop.f32.mrb[0].mxu0
      %644 = vmatprep.mubr.bf16.mxu0 0
      %645 = vmatmul.mubr.bf16.gmra.mrb[0].mxu0 %v374
      %v646 = vpop.f32.mrb[0].mxu0
      %v647 = vadd.f32 0.0, %v646
      %v648 = vpop.f32.mrb[0].mxu0
      %v649 = vpop.f32.mrb[0].mxu0
      %v650 = vadd.f32 0.0, %v649
      %v651 = vpop.f32.mrb[0].mxu0
      %652 = vmatprep.mubr.bf16.mxu0 0
      %653 = vmatmul.mubr.bf16.gmra.mrb[0].mxu0 %v375
      %v654 = vpop.f32.mrb[0].mxu0
      %v655 = vadd.f32 0.0, %v654
      %v656 = vpop.f32.mrb[0].mxu0
      %v657 = vpop.f32.mrb[0].mxu0
      %v658 = vadd.f32 0.0, %v657
      %v659 = vpop.f32.mrb[0].mxu0
      %660 = vmatprep.mubr.bf16.mxu0 0
      %661 = vmatmul.mubr.bf16.gmra.mrb[0].mxu0 %v376
      %v662 = vpop.f32.mrb[0].mxu0
      %v663 = vadd.f32 0.0, %v662
      %v664 = vpop.f32.mrb[0].mxu0
      %v665 = vpop.f32.mrb[0].mxu0
      %v666 = vadd.f32 0.0, %v665
      %v667 = vpop.f32.mrb[0].mxu0
      %668 = vmatprep.mubr.bf16.mxu0 0
      %669 = vmatmul.mubr.bf16.gmra.mrb[0].mxu0 %v377
      %v670 = vpop.f32.mrb[0].mxu0
      %v671 = vadd.f32 0.0, %v670
      %v672 = vpop.f32.mrb[0].mxu0
      %v673 = vpop.f32.mrb[0].mxu0
      %v674 = vadd.f32 0.0, %v673
      %v675 = vpop.f32.mrb[0].mxu0
      %676 = vmatprep.mubr.bf16.mxu0 0
      %677 = vmatmul.mubr.bf16.gmra.mrb[0].mxu0 %v378
      %v678 = vpop.f32.mrb[0].mxu0
      %v679 = vadd.f32 0.0, %v678
      %v680 = vpop.f32.mrb[0].mxu0
      %v681 = vpop.f32.mrb[0].mxu0
      %v682 = vadd.f32 0.0, %v681
      %v683 = vpop.f32.mrb[0].mxu0
      %684 = vmatprep.mubr.bf16.mxu0 0
      %685 = vmatmul.mubr.bf16.gmra.mrb[0].mxu0 %v379
      %v686 = vpop.f32.mrb[0].mxu0
      %v687 = vadd.f32 0.0, %v686
      %v688 = vpop.f32.mrb[0].mxu0
      %v689 = vpop.f32.mrb[0].mxu0
      %v690 = vadd.f32 0.0, %v689
      %v691 = vpop.f32.mrb[0].mxu0
      %692 = vmatprep.mubr.bf16.mxu0 0
      %693 = vmatmul.mubr.bf16.gmra.mrb[0].mxu0 %v380
      %v694 = vpop.f32.mrb[0].mxu0
      %v695 = vadd.f32 0.0, %v694
      %v696 = vpop.f32.mrb[0].mxu0
      %v697 = vpop.f32.mrb[0].mxu0
      %v698 = vadd.f32 0.0, %v697
      %v699 = vpop.f32.mrb[0].mxu0
      %700 = vmatprep.mubr.bf16.mxu0 0
      %701 = vmatmul.mubr.bf16.gmra.mrb[0].mxu0 %v381
      %v702 = vpop.f32.mrb[0].mxu0
      %v703 = vadd.f32 0.0, %v702
      %v704 = vpop.f32.mrb[0].mxu0
      %v705 = vpop.f32.mrb[0].mxu0
      %v706 = vadd.f32 0.0, %v705
      %v707 = vpop.f32.mrb[0].mxu0
      %708 = vmatprep.mubr.bf16.mxu0 0
      %709 = vmatmul.mubr.bf16.gmra.mrb[0].mxu0 %v382
      %v710 = vpop.f32.mrb[0].mxu0
      %v711 = vadd.f32 0.0, %v710
      %v712 = vpop.f32.mrb[0].mxu0
      %v713 = vpop.f32.mrb[0].mxu0
      %v714 = vadd.f32 0.0, %v713
      %v715 = vpop.f32.mrb[0].mxu0
      %716 = vmatprep.mubr.bf16.mxu0 0
      %717 = vmatmul.mubr.bf16.gmra.mrb[0].mxu0 %v383
      %v718 = vpop.f32.mrb[0].mxu0
      %v719 = vadd.f32 0.0, %v718
      %v720 = vpop.f32.mrb[0].mxu0
      %v721 = vpop.f32.mrb[0].mxu0
      %v722 = vadd.f32 0.0, %v721
      %v723 = vpop.f32.mrb[0].mxu0
      %724 = vmatprep.mubr.bf16.mxu0 0
      %725 = vmatmul.mubr.bf16.gmra.mrb[0].mxu0 %v384
      %v726 = vpop.f32.mrb[0].mxu0
      %v727 = vadd.f32 0.0, %v726
      %v728 = vpop.f32.mrb[0].mxu0
      %v729 = vpop.f32.mrb[0].mxu0
      %v730 = vadd.f32 0.0, %v729
      %v731 = vpop.f32.mrb[0].mxu0
      %732 = vmatprep.mubr.bf16.mxu0 0
      %733 = vmatmul.mubr.bf16.gmra.mrb[0].mxu0 %v385
      %v734 = vpop.f32.mrb[0].mxu0
      %v735 = vadd.f32 0.0, %v734
      %v736 = vpop.f32.mrb[0].mxu0
      %v737 = vpop.f32.mrb[0].mxu0
      %v738 = vadd.f32 0.0, %v737
      %v739 = vpop.f32.mrb[0].mxu0
      %740 = vmatprep.mubr.bf16.mxu0 0
      %741 = vmatmul.mubr.bf16.gmra.mrb[0].mxu0 %v386
      %v742 = vpop.f32.mrb[0].mxu0
      %v743 = vadd.f32 0.0, %v742
      %v744 = vpop.f32.mrb[0].mxu0
      %v745 = vpop.f32.mrb[0].mxu0
      %v746 = vadd.f32 0.0, %v745
      %v747 = vpop.f32.mrb[0].mxu0
      %748 = vmatprep.mubr.bf16.mxu0 0
      %749 = vmatmul.mubr.bf16.gmra.mrb[0].mxu0 %v387
      %v750 = vpop.f32.mrb[0].mxu0
      %v751 = vadd.f32 0.0, %v750
      %v752 = vpop.f32.mrb[0].mxu0
      %v753 = vpop.f32.mrb[0].mxu0
      %v754 = vadd.f32 0.0, %v753
      %v755 = vpop.f32.mrb[0].mxu0
      %756 = vdwg.mxu0
      %vm757 = vcmp.gt.f32.partialorder %v503, 0.0
      %vm758 = vcmp.gt.f32.partialorder %v506, 0.0
      %vm759 = vcmp.gt.f32.partialorder %v511, 0.0
      %vm760 = vcmp.gt.f32.partialorder %v514, 0.0
      %vm761 = vcmp.gt.f32.partialorder %v519, 0.0
      %vm762 = vcmp.gt.f32.partialorder %v522, 0.0
      %vm763 = vcmp.gt.f32.partialorder %v527, 0.0
      %vm764 = vcmp.gt.f32.partialorder %v530, 0.0
      %vm765 = vcmp.gt.f32.partialorder %v535, 0.0
      %vm766 = vcmp.gt.f32.partialorder %v538, 0.0
      %vm767 = vcmp.gt.f32.partialorder %v543, 0.0
      %vm768 = vcmp.gt.f32.partialorder %v546, 0.0
      %vm769 = vcmp.gt.f32.partialorder %v551, 0.0
      %vm770 = vcmp.gt.f32.partialorder %v554, 0.0
      %vm771 = vcmp.gt.f32.partialorder %v559, 0.0
      %vm772 = vcmp.gt.f32.partialorder %v562, 0.0
      %vm773 = vcmp.gt.f32.partialorder %v567, 0.0
      %vm774 = vcmp.gt.f32.partialorder %v570, 0.0
      %vm775 = vcmp.gt.f32.partialorder %v575, 0.0
      %vm776 = vcmp.gt.f32.partialorder %v578, 0.0
      %vm777 = vcmp.gt.f32.partialorder %v583, 0.0
      %vm778 = vcmp.gt.f32.partialorder %v586, 0.0
      %vm779 = vcmp.gt.f32.partialorder %v591, 0.0
      %vm780 = vcmp.gt.f32.partialorder %v594, 0.0
      %vm781 = vcmp.gt.f32.partialorder %v599, 0.0
      %vm782 = vcmp.gt.f32.partialorder %v602, 0.0
      %vm783 = vcmp.gt.f32.partialorder %v607, 0.0
      %vm784 = vcmp.gt.f32.partialorder %v610, 0.0
      %vm785 = vcmp.gt.f32.partialorder %v615, 0.0
      %vm786 = vcmp.gt.f32.partialorder %v618, 0.0
      %vm787 = vcmp.gt.f32.partialorder %v623, 0.0
      %vm788 = vcmp.gt.f32.partialorder %v626, 0.0
      %vm789 = vcmp.gt.f32.partialorder %v631, 0.0
      %vm790 = vcmp.gt.f32.partialorder %v634, 0.0
      %vm791 = vcmp.gt.f32.partialorder %v639, 0.0
      %vm792 = vcmp.gt.f32.partialorder %v642, 0.0
      %vm793 = vcmp.gt.f32.partialorder %v647, 0.0
      %vm794 = vcmp.gt.f32.partialorder %v650, 0.0
      %vm795 = vcmp.gt.f32.partialorder %v655, 0.0
      %vm796 = vcmp.gt.f32.partialorder %v658, 0.0
      %vm797 = vcmp.gt.f32.partialorder %v663, 0.0
      %vm798 = vcmp.gt.f32.partialorder %v666, 0.0
      %vm799 = vcmp.gt.f32.partialorder %v671, 0.0
      %vm800 = vcmp.gt.f32.partialorder %v674, 0.0
      %vm801 = vcmp.gt.f32.partialorder %v679, 0.0
      %vm802 = vcmp.gt.f32.partialorder %v682, 0.0
      %vm803 = vcmp.gt.f32.partialorder %v687, 0.0
      %vm804 = vcmp.gt.f32.partialorder %v690, 0.0
      %vm805 = vcmp.gt.f32.partialorder %v695, 0.0
      %vm806 = vcmp.gt.f32.partialorder %v698, 0.0
      %vm807 = vcmp.gt.f32.partialorder %v703, 0.0
      %vm808 = vcmp.gt.f32.partialorder %v706, 0.0
      %vm809 = vcmp.gt.f32.partialorder %v711, 0.0
      %vm810 = vcmp.gt.f32.partialorder %v714, 0.0
      %vm811 = vcmp.gt.f32.partialorder %v719, 0.0
      %vm812 = vcmp.gt.f32.partialorder %v722, 0.0
      %vm813 = vcmp.gt.f32.partialorder %v727, 0.0
      %vm814 = vcmp.gt.f32.partialorder %v730, 0.0
      %vm815 = vcmp.gt.f32.partialorder %v735, 0.0
      %vm816 = vcmp.gt.f32.partialorder %v738, 0.0
      %vm817 = vcmp.gt.f32.partialorder %v743, 0.0
      %vm818 = vcmp.gt.f32.partialorder %v746, 0.0
      %vm819 = vcmp.gt.f32.partialorder %v751, 0.0
      %vm820 = vcmp.gt.f32.partialorder %v754, 0.0
      %v821 = vmul.f32 %v503, 0.2
      %v822 = vmul.f32 %v506, 0.2
      %v823 = vmul.f32 %v511, 0.2
      %v824 = vmul.f32 %v514, 0.2
      %v825 = vmul.f32 %v519, 0.2
      %v826 = vmul.f32 %v522, 0.2
      %v827 = vmul.f32 %v527, 0.2
      %v828 = vmul.f32 %v530, 0.2
      %v829 = vmul.f32 %v535, 0.2
      %v830 = vmul.f32 %v538, 0.2
      %v831 = vmul.f32 %v543, 0.2
      %v832 = vmul.f32 %v546, 0.2
      %v833 = vmul.f32 %v551, 0.2
      %v834 = vmul.f32 %v554, 0.2
      %v835 = vmul.f32 %v559, 0.2
      %v836 = vmul.f32 %v562, 0.2
      %v837 = vmul.f32 %v567, 0.2
      %v838 = vmul.f32 %v570, 0.2
      %v839 = vmul.f32 %v575, 0.2
      %v840 = vmul.f32 %v578, 0.2
      %v841 = vmul.f32 %v583, 0.2
      %v842 = vmul.f32 %v586, 0.2
      %v843 = vmul.f32 %v591, 0.2
      %v844 = vmul.f32 %v594, 0.2
      %v845 = vmul.f32 %v599, 0.2
      %v846 = vmul.f32 %v602, 0.2
      %v847 = vmul.f32 %v607, 0.2
      %v848 = vmul.f32 %v610, 0.2
      %v849 = vmul.f32 %v615, 0.2
      %v850 = vmul.f32 %v618, 0.2
      %v851 = vmul.f32 %v623, 0.2
      %v852 = vmul.f32 %v626, 0.2
      %v853 = vmul.f32 %v631, 0.2
      %v854 = vmul.f32 %v634, 0.2
      %v855 = vmul.f32 %v639, 0.2
      %v856 = vmul.f32 %v642, 0.2
      %v857 = vmul.f32 %v647, 0.2
      %v858 = vmul.f32 %v650, 0.2
      %v859 = vmul.f32 %v655, 0.2
      %v860 = vmul.f32 %v658, 0.2
      %v861 = vmul.f32 %v663, 0.2
      %v862 = vmul.f32 %v666, 0.2
      %v863 = vmul.f32 %v671, 0.2
      %v864 = vmul.f32 %v674, 0.2
      %v865 = vmul.f32 %v679, 0.2
      %v866 = vmul.f32 %v682, 0.2
      %v867 = vmul.f32 %v687, 0.2
      %v868 = vmul.f32 %v690, 0.2
      %v869 = vmul.f32 %v695, 0.2
      %v870 = vmul.f32 %v698, 0.2
      %v871 = vmul.f32 %v703, 0.2
      %v872 = vmul.f32 %v706, 0.2
      %v873 = vmul.f32 %v711, 0.2
      %v874 = vmul.f32 %v714, 0.2
      %v875 = vmul.f32 %v719, 0.2
      %v876 = vmul.f32 %v722, 0.2
      %v877 = vmul.f32 %v727, 0.2
      %v878 = vmul.f32 %v730, 0.2
      %v879 = vmul.f32 %v735, 0.2
      %v880 = vmul.f32 %v738, 0.2
      %v881 = vmul.f32 %v743, 0.2
      %v882 = vmul.f32 %v746, 0.2
      %v883 = vmul.f32 %v751, 0.2
      %v884 = vmul.f32 %v754, 0.2
      %v885 = vsel %vm757, %v503, %v821
      %v886 = vsel %vm758, %v506, %v822
      %v887 = vsel %vm759, %v511, %v823
      %v888 = vsel %vm760, %v514, %v824
      %v889 = vsel %vm761, %v519, %v825
      %v890 = vsel %vm762, %v522, %v826
      %v891 = vsel %vm763, %v527, %v827
      %v892 = vsel %vm764, %v530, %v828
      %v893 = vsel %vm765, %v535, %v829
      %v894 = vsel %vm766, %v538, %v830
      %v895 = vsel %vm767, %v543, %v831
      %v896 = vsel %vm768, %v546, %v832
      %v897 = vsel %vm769, %v551, %v833
      %v898 = vsel %vm770, %v554, %v834
      %v899 = vsel %vm771, %v559, %v835
      %v900 = vsel %vm772, %v562, %v836
      %v901 = vsel %vm773, %v567, %v837
      %v902 = vsel %vm774, %v570, %v838
      %v903 = vsel %vm775, %v575, %v839
      %v904 = vsel %vm776, %v578, %v840
      %v905 = vsel %vm777, %v583, %v841
      %v906 = vsel %vm778, %v586, %v842
      %v907 = vsel %vm779, %v591, %v843
      %v908 = vsel %vm780, %v594, %v844
      %v909 = vsel %vm781, %v599, %v845
      %v910 = vsel %vm782, %v602, %v846
      %v911 = vsel %vm783, %v607, %v847
      %v912 = vsel %vm784, %v610, %v848
      %v913 = vsel %vm785, %v615, %v849
      %v914 = vsel %vm786, %v618, %v850
      %v915 = vsel %vm787, %v623, %v851
      %v916 = vsel %vm788, %v626, %v852
      %v917 = vsel %vm789, %v631, %v853
      %v918 = vsel %vm790, %v634, %v854
      %v919 = vsel %vm791, %v639, %v855
      %v920 = vsel %vm792, %v642, %v856
      %v921 = vsel %vm793, %v647, %v857
      %v922 = vsel %vm794, %v650, %v858
      %v923 = vsel %vm795, %v655, %v859
      %v924 = vsel %vm796, %v658, %v860
      %v925 = vsel %vm797, %v663, %v861
      %v926 = vsel %vm798, %v666, %v862
      %v927 = vsel %vm799, %v671, %v863
      %v928 = vsel %vm800, %v674, %v864
      %v929 = vsel %vm801, %v679, %v865
      %v930 = vsel %vm802, %v682, %v866
      %v931 = vsel %vm803, %v687, %v867
      %v932 = vsel %vm804, %v690, %v868
      %v933 = vsel %vm805, %v695, %v869
      %v934 = vsel %vm806, %v698, %v870
      %v935 = vsel %vm807, %v703, %v871
      %v936 = vsel %vm808, %v706, %v872
      %v937 = vsel %vm809, %v711, %v873
      %v938 = vsel %vm810, %v714, %v874
      %v939 = vsel %vm811, %v719, %v875
      %v940 = vsel %vm812, %v722, %v876
      %v941 = vsel %vm813, %v727, %v877
      %v942 = vsel %vm814, %v730, %v878
      %v943 = vsel %vm815, %v735, %v879
      %v944 = vsel %vm816, %v738, %v880
      %v945 = vsel %vm817, %v743, %v881
      %v946 = vsel %vm818, %v746, %v882
      %v947 = vsel %vm819, %v751, %v883
      %v948 = vsel %vm820, %v754, %v884
      %v949 = vpack.c.bf16 %v886, %v885
      %v950 = vpack.c.bf16 %v888, %v887
      %v951 = vpack.c.bf16 %v890, %v889
      %v952 = vpack.c.bf16 %v892, %v891
      %v953 = vpack.c.bf16 %v894, %v893
      %v954 = vpack.c.bf16 %v896, %v895
      %v955 = vpack.c.bf16 %v898, %v897
      %v956 = vpack.c.bf16 %v900, %v899
      %v957 = vpack.c.bf16 %v902, %v901
      %v958 = vpack.c.bf16 %v904, %v903
      %v959 = vpack.c.bf16 %v906, %v905
      %v960 = vpack.c.bf16 %v908, %v907
      %v961 = vpack.c.bf16 %v910, %v909
      %v962 = vpack.c.bf16 %v912, %v911
      %v963 = vpack.c.bf16 %v914, %v913
      %v964 = vpack.c.bf16 %v916, %v915
      %v965 = vpack.c.bf16 %v918, %v917
      %v966 = vpack.c.bf16 %v920, %v919
      %v967 = vpack.c.bf16 %v922, %v921
      %v968 = vpack.c.bf16 %v924, %v923
      %v969 = vpack.c.bf16 %v926, %v925
      %v970 = vpack.c.bf16 %v928, %v927
      %v971 = vpack.c.bf16 %v930, %v929
      %v972 = vpack.c.bf16 %v932, %v931
      %v973 = vpack.c.bf16 %v934, %v933
      %v974 = vpack.c.bf16 %v936, %v935
      %v975 = vpack.c.bf16 %v938, %v937
      %v976 = vpack.c.bf16 %v940, %v939
      %v977 = vpack.c.bf16 %v942, %v941
      %v978 = vpack.c.bf16 %v944, %v943
      %v979 = vpack.c.bf16 %v946, %v945
      %v980 = vpack.c.bf16 %v948, %v947
      %v1013 = vunpack.c.l.b16 %v949
      %v1014 = vunpack.c.h.b16 %v949
      %v1015 = vunpack.c.l.b16 %v950
      %v1016 = vunpack.c.h.b16 %v950
      %v1017 = vunpack.c.l.b16 %v951
      %v1018 = vunpack.c.h.b16 %v951
      %v1019 = vunpack.c.l.b16 %v952
      %v1020 = vunpack.c.h.b16 %v952
      %v1021 = vunpack.c.l.b16 %v953
      %v1022 = vunpack.c.h.b16 %v953
      %v1023 = vunpack.c.l.b16 %v954
      %v1024 = vunpack.c.h.b16 %v954
      %v1025 = vunpack.c.l.b16 %v955
      %v1026 = vunpack.c.h.b16 %v955
      %v1027 = vunpack.c.l.b16 %v956
      %v1028 = vunpack.c.h.b16 %v956
      %v1029 = vunpack.c.l.b16 %v957
      %v1030 = vunpack.c.h.b16 %v957
      %v1031 = vunpack.c.l.b16 %v958
      %v1032 = vunpack.c.h.b16 %v958
      %v1033 = vunpack.c.l.b16 %v959
      %v1034 = vunpack.c.h.b16 %v959
      %v1035 = vunpack.c.l.b16 %v960
      %v1036 = vunpack.c.h.b16 %v960
      %v1037 = vunpack.c.l.b16 %v961
      %v1038 = vunpack.c.h.b16 %v961
      %v1039 = vunpack.c.l.b16 %v962
      %v1040 = vunpack.c.h.b16 %v962
      %v1041 = vunpack.c.l.b16 %v963
      %v1042 = vunpack.c.h.b16 %v963
      %v1043 = vunpack.c.l.b16 %v964
      %v1044 = vunpack.c.h.b16 %v964
      %v1045 = vunpack.c.l.b16 %v965
      %v1046 = vunpack.c.h.b16 %v965
      %v1047 = vunpack.c.l.b16 %v966
      %v1048 = vunpack.c.h.b16 %v966
      %v1049 = vunpack.c.l.b16 %v967
      %v1050 = vunpack.c.h.b16 %v967
      %v1051 = vunpack.c.l.b16 %v968
      %v1052 = vunpack.c.h.b16 %v968
      %v1053 = vunpack.c.l.b16 %v969
      %v1054 = vunpack.c.h.b16 %v969
      %v1055 = vunpack.c.l.b16 %v970
      %v1056 = vunpack.c.h.b16 %v970
      %v1057 = vunpack.c.l.b16 %v971
      %v1058 = vunpack.c.h.b16 %v971
      %v1059 = vunpack.c.l.b16 %v972
      %v1060 = vunpack.c.h.b16 %v972
      %v1061 = vunpack.c.l.b16 %v973
      %v1062 = vunpack.c.h.b16 %v973
      %v1063 = vunpack.c.l.b16 %v974
      %v1064 = vunpack.c.h.b16 %v974
      %v1065 = vunpack.c.l.b16 %v975
      %v1066 = vunpack.c.h.b16 %v975
      %v1067 = vunpack.c.l.b16 %v976
      %v1068 = vunpack.c.h.b16 %v976
      %v1069 = vunpack.c.l.b16 %v977
      %v1070 = vunpack.c.h.b16 %v977
      %v1071 = vunpack.c.l.b16 %v978
      %v1072 = vunpack.c.h.b16 %v978
      %v1073 = vunpack.c.l.b16 %v979
      %v1074 = vunpack.c.h.b16 %v979
      %v1075 = vunpack.c.l.b16 %v980
      %v1076 = vunpack.c.h.b16 %v980
      %v1077 = vpack.c.b16 %v1013, %v1013
      %v1078 = vpack.c.b16 %v1014, %v1014
      %v1079 = vpack.c.b16 %v1015, %v1015
      %v1080 = vpack.c.b16 %v1016, %v1016
      %v1081 = vpack.c.b16 %v1017, %v1017
      %v1082 = vpack.c.b16 %v1018, %v1018
      %v1083 = vpack.c.b16 %v1019, %v1019
      %v1084 = vpack.c.b16 %v1020, %v1020
      %v1085 = vpack.c.b16 %v1021, %v1021
      %v1086 = vpack.c.b16 %v1022, %v1022
      %v1087 = vpack.c.b16 %v1023, %v1023
      %v1088 = vpack.c.b16 %v1024, %v1024
      %v1089 = vpack.c.b16 %v1025, %v1025
      %v1090 = vpack.c.b16 %v1026, %v1026
      %v1091 = vpack.c.b16 %v1027, %v1027
      %v1092 = vpack.c.b16 %v1028, %v1028
      %v1093 = vpack.c.b16 %v1029, %v1029
      %v1094 = vpack.c.b16 %v1030, %v1030
      %v1095 = vpack.c.b16 %v1031, %v1031
      %v1096 = vpack.c.b16 %v1032, %v1032
      %v1097 = vpack.c.b16 %v1033, %v1033
      %v1098 = vpack.c.b16 %v1034, %v1034
      %v1099 = vpack.c.b16 %v1035, %v1035
      %v1100 = vpack.c.b16 %v1036, %v1036
      %v1101 = vpack.c.b16 %v1037, %v1037
      %v1102 = vpack.c.b16 %v1038, %v1038
      %v1103 = vpack.c.b16 %v1039, %v1039
      %v1104 = vpack.c.b16 %v1040, %v1040
      %v1105 = vpack.c.b16 %v1041, %v1041
      %v1106 = vpack.c.b16 %v1042, %v1042
      %v1107 = vpack.c.b16 %v1043, %v1043
      %v1108 = vpack.c.b16 %v1044, %v1044
      %v1109 = vpack.c.b16 %v1045, %v1045
      %v1110 = vpack.c.b16 %v1046, %v1046
      %v1111 = vpack.c.b16 %v1047, %v1047
      %v1112 = vpack.c.b16 %v1048, %v1048
      %v1113 = vpack.c.b16 %v1049, %v1049
      %v1114 = vpack.c.b16 %v1050, %v1050
      %v1115 = vpack.c.b16 %v1051, %v1051
      %v1116 = vpack.c.b16 %v1052, %v1052
      %v1117 = vpack.c.b16 %v1053, %v1053
      %v1118 = vpack.c.b16 %v1054, %v1054
      %v1119 = vpack.c.b16 %v1055, %v1055
      %v1120 = vpack.c.b16 %v1056, %v1056
      %v1121 = vpack.c.b16 %v1057, %v1057
      %v1122 = vpack.c.b16 %v1058, %v1058
      %v1123 = vpack.c.b16 %v1059, %v1059
      %v1124 = vpack.c.b16 %v1060, %v1060
      %v1125 = vpack.c.b16 %v1061, %v1061
      %v1126 = vpack.c.b16 %v1062, %v1062
      %v1127 = vpack.c.b16 %v1063, %v1063
      %v1128 = vpack.c.b16 %v1064, %v1064
      %v1129 = vpack.c.b16 %v1065, %v1065
      %v1130 = vpack.c.b16 %v1066, %v1066
      %v1131 = vpack.c.b16 %v1067, %v1067
      %v1132 = vpack.c.b16 %v1068, %v1068
      %v1133 = vpack.c.b16 %v1069, %v1069
      %v1134 = vpack.c.b16 %v1070, %v1070
      %v1135 = vpack.c.b16 %v1071, %v1071
      %v1136 = vpack.c.b16 %v1072, %v1072
      %v1137 = vpack.c.b16 %v1073, %v1073
      %v1138 = vpack.c.b16 %v1074, %v1074
      %v1139 = vpack.c.b16 %v1075, %v1075
      %v1140 = vpack.c.b16 %v1076, %v1076
      %1205 = vst [vmem:[%s145] sm:$0xf] %v1077
      %1206 = vst [vmem:[%s145 + $0x4] sm:$0xf] %v1078
      %1207 = vst [vmem:[%s145 + $0x8] sm:$0xf] %v1079
      %1208 = vst [vmem:[%s145 + $0xc] sm:$0xf] %v1080
      %1209 = vst [vmem:[%s145 + $0x10] sm:$0xf] %v1081
      %1210 = vst [vmem:[%s145 + $0x14] sm:$0xf] %v1082
      %1211 = vst [vmem:[%s145 + $0x18] sm:$0xf] %v1083
      %1212 = vst [vmem:[%s145 + $0x1c] sm:$0xf] %v1084
      %1213 = vst [vmem:[%s145 + $0x20] sm:$0xf] %v1085
      %1214 = vst [vmem:[%s145 + $0x24] sm:$0xf] %v1086
      %1215 = vst [vmem:[%s145 + $0x28] sm:$0xf] %v1087
      %1216 = vst [vmem:[%s145 + $0x2c] sm:$0xf] %v1088
      %1217 = vst [vmem:[%s145 + $0x30] sm:$0xf] %v1089
      %1218 = vst [vmem:[%s145 + $0x34] sm:$0xf] %v1090
      %1219 = vst [vmem:[%s145 + $0x38] sm:$0xf] %v1091
      %1220 = vst [vmem:[%s145 + $0x3c] sm:$0xf] %v1092
      %1221 = vst [vmem:[%s145 + $0x40] sm:$0xf] %v1093
      %1222 = vst [vmem:[%s145 + $0x44] sm:$0xf] %v1094
      %1223 = vst [vmem:[%s145 + $0x48] sm:$0xf] %v1095
      %1224 = vst [vmem:[%s145 + $0x4c] sm:$0xf] %v1096
      %1225 = vst [vmem:[%s145 + $0x50] sm:$0xf] %v1097
      %1226 = vst [vmem:[%s145 + $0x54] sm:$0xf] %v1098
      %1227 = vst [vmem:[%s145 + $0x58] sm:$0xf] %v1099
      %1228 = vst [vmem:[%s145 + $0x5c] sm:$0xf] %v1100
      %1229 = vst [vmem:[%s145 + $0x60] sm:$0xf] %v1101
      %1230 = vst [vmem:[%s145 + $0x64] sm:$0xf] %v1102
      %1231 = vst [vmem:[%s145 + $0x68] sm:$0xf] %v1103
      %1232 = vst [vmem:[%s145 + $0x6c] sm:$0xf] %v1104
      %1233 = vst [vmem:[%s145 + $0x70] sm:$0xf] %v1105
      %1234 = vst [vmem:[%s145 + $0x74] sm:$0xf] %v1106
      %1235 = vst [vmem:[%s145 + $0x78] sm:$0xf] %v1107
      %1236 = vst [vmem:[%s145 + $0x7c] sm:$0xf] %v1108
      %1237 = vst [vmem:[%s145 + $0x80] sm:$0xf] %v1109
      %1238 = vst [vmem:[%s145 + $0x84] sm:$0xf] %v1110
      %1239 = vst [vmem:[%s145 + $0x88] sm:$0xf] %v1111
      %1240 = vst [vmem:[%s145 + $0x8c] sm:$0xf] %v1112
      %1241 = vst [vmem:[%s145 + $0x90] sm:$0xf] %v1113
      %1242 = vst [vmem:[%s145 + $0x94] sm:$0xf] %v1114
      %1243 = vst [vmem:[%s145 + $0x98] sm:$0xf] %v1115
      %1244 = vst [vmem:[%s145 + $0x9c] sm:$0xf] %v1116
      %1245 = vst [vmem:[%s145 + $0xa0] sm:$0xf] %v1117
      %1246 = vst [vmem:[%s145 + $0xa4] sm:$0xf] %v1118
      %1247 = vst [vmem:[%s145 + $0xa8] sm:$0xf] %v1119
      %1248 = vst [vmem:[%s145 + $0xac] sm:$0xf] %v1120
      %1249 = vst [vmem:[%s145 + $0xb0] sm:$0xf] %v1121
      %1250 = vst [vmem:[%s145 + $0xb4] sm:$0xf] %v1122
      %1251 = vst [vmem:[%s145 + $0xb8] sm:$0xf] %v1123
      %1252 = vst [vmem:[%s145 + $0xbc] sm:$0xf] %v1124
      %1253 = vst [vmem:[%s145 + $0xc0] sm:$0xf] %v1125
      %1254 = vst [vmem:[%s145 + $0xc4] sm:$0xf] %v1126
      %1255 = vst [vmem:[%s145 + $0xc8] sm:$0xf] %v1127
      %1256 = vst [vmem:[%s145 + $0xcc] sm:$0xf] %v1128
      %1257 = vst [vmem:[%s145 + $0xd0] sm:$0xf] %v1129
      %1258 = vst [vmem:[%s145 + $0xd4] sm:$0xf] %v1130
      %1259 = vst [vmem:[%s145 + $0xd8] sm:$0xf] %v1131
      %1260 = vst [vmem:[%s145 + $0xdc] sm:$0xf] %v1132
      %1261 = vst [vmem:[%s145 + $0xe0] sm:$0xf] %v1133
      %1262 = vst [vmem:[%s145 + $0xe4] sm:$0xf] %v1134
      %1263 = vst [vmem:[%s145 + $0xe8] sm:$0xf] %v1135
      %1264 = vst [vmem:[%s145 + $0xec] sm:$0xf] %v1136
      %1265 = vst [vmem:[%s145 + $0xf0] sm:$0xf] %v1137
      %1266 = vst [vmem:[%s145 + $0xf4] sm:$0xf] %v1138
      %1267 = vst [vmem:[%s145 + $0xf8] sm:$0xf] %v1139
      %1268 = vst [vmem:[%s145 + $0xfc] sm:$0xf] %v1140
      %s1269 = smul.u32 64, %s13
      %p1270 = scmp.lt.s32.totalorder %s1269, 255
      %s1271 = scalar_select %p1270, %s1269, 255
      %s1272 = smul.addr %s1271, 4
      %s1273 = scalar_lea.vmem %s2, %s1272
      // Predicated region
      $region29: #{discriminator_forward.7} parent=27 // pred_check
        %p1274 = pneg %p78
      $region30: #{discriminator_forward.7} parent=27 // pred_check_branch
        %1276 = sbr.rel (%p1274) target = $region32
      $region31: #{discriminator_forward.7} parent=27 // pred_region
        %s1277 = smul.u32 64, %s13
      $region32: #{discriminator_forward.7} parent=27 // pred_fallthru
        _
    $region28: #{discriminator_forward.7} parent=5 // pred_fallthru
      _
    %p1278 = scmp.le.s32.totalorder 2, %s8
    // Predicated region
    $region33: #{discriminator_forward.7} parent=5 // pred_check
      %p1279 = pneg %p1278
    $region34: #{discriminator_forward.7} parent=5 // pred_check_branch
      %1281 = sbr.rel (%p1279) target = $region36
    $region35: #{discriminator_forward.7} parent=5 // pred_region
      %s1282 = ssub.s32 %s8, 2
      // Predicated region
      $region37: #{discriminator_forward.7} parent=35 // pred_check
        %p1283 = pneg %p84
      $region38: #{discriminator_forward.7} parent=35 // pred_check_branch
        %1285 = sbr.rel (%p1283) target = $region40
      $region39: #{discriminator_forward.7} parent=35 // pred_region
        %s1286 = smul.u32 64, %s14
        %p1287 = scmp.lt.s32.totalorder %s1286, 255
        %s1288 = scalar_select %p1287, %s1286, 255
        %s1289 = smul.addr %s1288, 4
        %s1290 = scalar_lea.vmem %s2, %s1289
      $region40: #{discriminator_forward.7} parent=35 // pred_fallthru
        _
    $region36: #{discriminator_forward.7} parent=5 // pred_fallthru
      _
  $region6: #{discriminator_forward.7} parent=0 // loop_footer
    %s12 = sadd.s32 1, %s8
  $region7: #{discriminator_forward.7} parent=0 // loop_footer_branch
    %7 = sbr.rel target = $region3
  $region8: #{discriminator_forward.7} parent=0 // loop_exit
    _

// kernel: discriminator_forward.8
$region0: #{discriminator_forward.8}
  #allocation0 [shape = 'u32[]', space=smem, size = 0x4, offset = 0x4, fixed_abs, tag = 'smem constant byte address 0x4 - core index']
  #allocation1 [shape = 'u32[144,128]{1,0:T(1,128)}', space=vmem, size = 0x12000, scoped, tag = 'internal scratch']
  %s0 = inlined_call_operand.vmem [shape: bf16[512,128], index: 0, kind: input, shape index: {}]
  %s1 = inlined_call_operand.vmem [shape: bf16[128,128], index: 1, kind: input, shape index: {}]
  %s2 = inlined_call_operand.vmem [shape: bf16[512,128], index: 2, kind: output, shape index: {0}]
  %s3 = inlined_call_operand.vmem [shape: f32[1,128], index: 3, kind: output, shape index: {1}]
  %s4 = inlined_call_operand.vmem [shape: f32[1,128], index: 4, kind: output, shape index: {2}]
  %5 = xla_tuple %s2, %s3, %s4
  %s6 = sld [smem:[#allocation0]]
  $region38: #{discriminator_forward.8} parent=0
    _
  %s8 = ssub.s32 1, %s6
  %s9 = scalar_select 0, %s8, %s6
  // Predicated region
  $region2: #{discriminator_forward.8} parent=0 // pred_check
    _
  $region3: #{discriminator_forward.8} parent=0 // pred_check_branch
    %11 = sbr.rel (0) target = $region5
  $region4: #{discriminator_forward.8} parent=0 // pred_region
    _
  $region5: #{discriminator_forward.8} parent=0 // pred_fallthru
    _
  // Predicated region
  $region6: #{discriminator_forward.8} parent=0 // pred_check
    _
  $region7: #{discriminator_forward.8} parent=0 // pred_check_branch
    %13 = sbr.rel (0) target = $region9
  $region8: #{discriminator_forward.8} parent=0 // pred_region
    _
  $region9: #{discriminator_forward.8} parent=0 // pred_fallthru
    _
  %p15 = scmp.eq.s32.totalorder 0, 0
  // Predicated region
  $region10: #{discriminator_forward.8} parent=0 // pred_check
    %p16 = pneg %p15
  $region11: #{discriminator_forward.8} parent=0 // pred_check_branch
    %18 = sbr.rel (%p16) target = $region13
  $region12: #{discriminator_forward.8} parent=0 // pred_region
    %19 = vst [vmem:[%s3] sm:$0x1] 0.0
    %20 = vst [vmem:[%s4] sm:$0x1] 0.0
  $region13: #{discriminator_forward.8} parent=0 // pred_fallthru
    _
  %v21 = vld [vmem:[%s0] sm:$0xf]
  %v22 = vld [vmem:[%s0 + $0x4] sm:$0xf]
  %v23 = vld [vmem:[%s0 + $0x8] sm:$0xf]
  %v24 = vld [vmem:[%s0 + $0xc] sm:$0xf]
  %v25 = vld [vmem:[%s0 + $0x10] sm:$0xf]
  %v26 = vld [vmem:[%s0 + $0x14] sm:$0xf]
  %v27 = vld [vmem:[%s0 + $0x18] sm:$0xf]
  %v28 = vld [vmem:[%s0 + $0x1c] sm:$0xf]
  %v29 = vld [vmem:[%s0 + $0x20] sm:$0xf]
  %v30 = vld [vmem:[%s0 + $0x24] sm:$0xf]
  %v31 = vld [vmem:[%s0 + $0x28] sm:$0xf]
  %v32 = vld [vmem:[%s0 + $0x2c] sm:$0xf]
  %v33 = vld [vmem:[%s0 + $0x30] sm:$0xf]
  %v34 = vld [vmem:[%s0 + $0x34] sm:$0xf]
  %v35 = vld [vmem:[%s0 + $0x38] sm:$0xf]
  %v36 = vld [vmem:[%s0 + $0x3c] sm:$0xf]
  %v37 = vld [vmem:[%s0 + $0x40] sm:$0xf]
  %v38 = vld [vmem:[%s0 + $0x44] sm:$0xf]
  %v39 = vld [vmem:[%s0 + $0x48] sm:$0xf]
  %v40 = vld [vmem:[%s0 + $0x4c] sm:$0xf]
  %v41 = vld [vmem:[%s0 + $0x50] sm:$0xf]
  %v42 = vld [vmem:[%s0 + $0x54] sm:$0xf]
  %v43 = vld [vmem:[%s0 + $0x58] sm:$0xf]
  %v44 = vld [vmem:[%s0 + $0x5c] sm:$0xf]
  %v45 = vld [vmem:[%s0 + $0x60] sm:$0xf]
  %v46 = vld [vmem:[%s0 + $0x64] sm:$0xf]
  %v47 = vld [vmem:[%s0 + $0x68] sm:$0xf]
  %v48 = vld [vmem:[%s0 + $0x6c] sm:$0xf]
  %v49 = vld [vmem:[%s0 + $0x70] sm:$0xf]
  %v50 = vld [vmem:[%s0 + $0x74] sm:$0xf]
  %v51 = vld [vmem:[%s0 + $0x78] sm:$0xf]
  %v52 = vld [vmem:[%s0 + $0x7c] sm:$0xf]
  %v53 = vld [vmem:[%s0 + $0x80] sm:$0xf]
  %v54 = vld [vmem:[%s0 + $0x84] sm:$0xf]
  %v55 = vld [vmem:[%s0 + $0x88] sm:$0xf]
  %v56 = vld [vmem:[%s0 + $0x8c] sm:$0xf]
  %v57 = vld [vmem:[%s0 + $0x90] sm:$0xf]
  %v58 = vld [vmem:[%s0 + $0x94] sm:$0xf]
  %v59 = vld [vmem:[%s0 + $0x98] sm:$0xf]
  %v60 = vld [vmem:[%s0 + $0x9c] sm:$0xf]
  %v61 = vld [vmem:[%s0 + $0xa0] sm:$0xf]
  %v62 = vld [vmem:[%s0 + $0xa4] sm:$0xf]
  %v63 = vld [vmem:[%s0 + $0xa8] sm:$0xf]
  %v64 = vld [vmem:[%s0 + $0xac] sm:$0xf]
  %v65 = vld [vmem:[%s0 + $0xb0] sm:$0xf]
  %v66 = vld [vmem:[%s0 + $0xb4] sm:$0xf]
  %v67 = vld [vmem:[%s0 + $0xb8] sm:$0xf]
  %v68 = vld [vmem:[%s0 + $0xbc] sm:$0xf]
  %v69 = vld [vmem:[%s0 + $0xc0] sm:$0xf]
  %v70 = vld [vmem:[%s0 + $0xc4] sm:$0xf]
  %v71 = vld [vmem:[%s0 + $0xc8] sm:$0xf]
  %v72 = vld [vmem:[%s0 + $0xcc] sm:$0xf]
  %v73 = vld [vmem:[%s0 + $0xd0] sm:$0xf]
  %v74 = vld [vmem:[%s0 + $0xd4] sm:$0xf]
  %v75 = vld [vmem:[%s0 + $0xd8] sm:$0xf]
  %v76 = vld [vmem:[%s0 + $0xdc] sm:$0xf]
  %v77 = vld [vmem:[%s0 + $0xe0] sm:$0xf]
  %v78 = vld [vmem:[%s0 + $0xe4] sm:$0xf]
  %v79 = vld [vmem:[%s0 + $0xe8] sm:$0xf]
  %v80 = vld [vmem:[%s0 + $0xec] sm:$0xf]
  %v81 = vld [vmem:[%s0 + $0xf0] sm:$0xf]
  %v82 = vld [vmem:[%s0 + $0xf4] sm:$0xf]
  %v83 = vld [vmem:[%s0 + $0xf8] sm:$0xf]
  %v84 = vld [vmem:[%s0 + $0xfc] sm:$0xf]
  %v85 = vld [vmem:[%s1] sm:$0xf]
  %v86 = vld [vmem:[%s1 + $0x4] sm:$0xf]
  %v87 = vld [vmem:[%s1 + $0x8] sm:$0xf]
  %v88 = vld [vmem:[%s1 + $0xc] sm:$0xf]
  %v89 = vld [vmem:[%s1 + $0x10] sm:$0xf]
  %v90 = vld [vmem:[%s1 + $0x14] sm:$0xf]
  %v91 = vld [vmem:[%s1 + $0x18] sm:$0xf]
  %v92 = vld [vmem:[%s1 + $0x1c] sm:$0xf]
  %v93 = vld [vmem:[%s1 + $0x20] sm:$0xf]
  %v94 = vld [vmem:[%s1 + $0x24] sm:$0xf]
  %v95 = vld [vmem:[%s1 + $0x28] sm:$0xf]
  %v96 = vld [vmem:[%s1 + $0x2c] sm:$0xf]
  %v97 = vld [vmem:[%s1 + $0x30] sm:$0xf]
  %v98 = vld [vmem:[%s1 + $0x34] sm:$0xf]
  %v99 = vld [vmem:[%s1 + $0x38] sm:$0xf]
  %v100 = vld [vmem:[%s1 + $0x3c] sm:$0xf]
  %v165 = vunpack.c.l.b16 %v21
  %v166 = vunpack.c.l.b16 %v22
  %v167 = vunpack.c.l.b16 %v23
  %v168 = vunpack.c.l.b16 %v24
  %v169 = vunpack.c.l.b16 %v25
  %v170 = vunpack.c.l.b16 %v26
  %v171 = vunpack.c.l.b16 %v27
  %v172 = vunpack.c.l.b16 %v28
  %v173 = vunpack.c.l.b16 %v29
  %v174 = vunpack.c.l.b16 %v30
  %v175 = vunpack.c.l.b16 %v31
  %v176 = vunpack.c.l.b16 %v32
  %v177 = vunpack.c.l.b16 %v33
  %v178 = vunpack.c.l.b16 %v34
  %v179 = vunpack.c.l.b16 %v35
  %v180 = vunpack.c.l.b16 %v36
  %v181 = vunpack.c.l.b16 %v37
  %v182 = vunpack.c.l.b16 %v38
  %v183 = vunpack.c.l.b16 %v39
  %v184 = vunpack.c.l.b16 %v40
  %v185 = vunpack.c.l.b16 %v41
  %v186 = vunpack.c.l.b16 %v42
  %v187 = vunpack.c.l.b16 %v43
  %v188 = vunpack.c.l.b16 %v44
  %v189 = vunpack.c.l.b16 %v45
  %v190 = vunpack.c.l.b16 %v46
  %v191 = vunpack.c.l.b16 %v47
  %v192 = vunpack.c.l.b16 %v48
  %v193 = vunpack.c.l.b16 %v49
  %v194 = vunpack.c.l.b16 %v50
  %v195 = vunpack.c.l.b16 %v51
  %v196 = vunpack.c.l.b16 %v52
  %v197 = vunpack.c.l.b16 %v53
  %v198 = vunpack.c.l.b16 %v54
  %v199 = vunpack.c.l.b16 %v55
  %v200 = vunpack.c.l.b16 %v56
  %v201 = vunpack.c.l.b16 %v57
  %v202 = vunpack.c.l.b16 %v58
  %v203 = vunpack.c.l.b16 %v59
  %v204 = vunpack.c.l.b16 %v60
  %v205 = vunpack.c.l.b16 %v61
  %v206 = vunpack.c.l.b16 %v62
  %v207 = vunpack.c.l.b16 %v63
  %v208 = vunpack.c.l.b16 %v64
  %v209 = vunpack.c.l.b16 %v65
  %v210 = vunpack.c.l.b16 %v66
  %v211 = vunpack.c.l.b16 %v67
  %v212 = vunpack.c.l.b16 %v68
  %v213 = vunpack.c.l.b16 %v69
  %v214 = vunpack.c.l.b16 %v70
  %v215 = vunpack.c.l.b16 %v71
  %v216 = vunpack.c.l.b16 %v72
  %v217 = vunpack.c.l.b16 %v73
  %v218 = vunpack.c.l.b16 %v74
  %v219 = vunpack.c.l.b16 %v75
  %v220 = vunpack.c.l.b16 %v76
  %v221 = vunpack.c.l.b16 %v77
  %v222 = vunpack.c.l.b16 %v78
  %v223 = vunpack.c.l.b16 %v79
  %v224 = vunpack.c.l.b16 %v80
  %v225 = vunpack.c.l.b16 %v81
  %v226 = vunpack.c.l.b16 %v82
  %v227 = vunpack.c.l.b16 %v83
  %v228 = vunpack.c.l.b16 %v84
  %v229 = vpack.c.b16 %v166, %v165
  %v230 = vpack.c.b16 %v168, %v167
  %v231 = vpack.c.b16 %v170, %v169
  %v232 = vpack.c.b16 %v172, %v171
  %v233 = vpack.c.b16 %v174, %v173
  %v234 = vpack.c.b16 %v176, %v175
  %v235 = vpack.c.b16 %v178, %v177
  %v236 = vpack.c.b16 %v180, %v179
  %v237 = vpack.c.b16 %v182, %v181
  %v238 = vpack.c.b16 %v184, %v183
  %v239 = vpack.c.b16 %v186, %v185
  %v240 = vpack.c.b16 %v188, %v187
  %v241 = vpack.c.b16 %v190, %v189
  %v242 = vpack.c.b16 %v192, %v191
  %v243 = vpack.c.b16 %v194, %v193
  %v244 = vpack.c.b16 %v196, %v195
  %v245 = vpack.c.b16 %v198, %v197
  %v246 = vpack.c.b16 %v200, %v199
  %v247 = vpack.c.b16 %v202, %v201
  %v248 = vpack.c.b16 %v204, %v203
  %v249 = vpack.c.b16 %v206, %v205
  %v250 = vpack.c.b16 %v208, %v207
  %v251 = vpack.c.b16 %v210, %v209
  %v252 = vpack.c.b16 %v212, %v211
  %v253 = vpack.c.b16 %v214, %v213
  %v254 = vpack.c.b16 %v216, %v215
  %v255 = vpack.c.b16 %v218, %v217
  %v256 = vpack.c.b16 %v220, %v219
  %v257 = vpack.c.b16 %v222, %v221
  %v258 = vpack.c.b16 %v224, %v223
  %v259 = vpack.c.b16 %v226, %v225
  %v260 = vpack.c.b16 %v228, %v227
  %v309 = vunpack.c.l.b16 %v85
  %v310 = vunpack.c.l.b16 %v86
  %v311 = vunpack.c.l.b16 %v87
  %v312 = vunpack.c.l.b16 %v88
  %v313 = vunpack.c.l.b16 %v89
  %v314 = vunpack.c.l.b16 %v90
  %v315 = vunpack.c.l.b16 %v91
  %v316 = vunpack.c.l.b16 %v92
  %v317 = vunpack.c.l.b16 %v93
  %v318 = vunpack.c.l.b16 %v94
  %v319 = vunpack.c.l.b16 %v95
  %v320 = vunpack.c.l.b16 %v96
  %v321 = vunpack.c.l.b16 %v97
  %v322 = vunpack.c.l.b16 %v98
  %v323 = vunpack.c.l.b16 %v99
  %v324 = vunpack.c.l.b16 %v100
  %v325 = vpack.c.b16 %v310, %v309
  %v326 = vpack.c.b16 %v312, %v311
  %v327 = vpack.c.b16 %v314, %v313
  %v328 = vpack.c.b16 %v316, %v315
  %v329 = vpack.c.b16 %v318, %v317
  %v330 = vpack.c.b16 %v320, %v319
  %v331 = vpack.c.b16 %v322, %v321
  %v332 = vpack.c.b16 %v324, %v323
  %341 = vmatprep.subr.bf16.mxu0 0
  %342 = vmatpush1.bf16.msra.mxu0 %v325
  %343 = vmatprep.subr.bf16.mxu0 0
  %344 = vmatpush1.bf16.msra.mxu0 %v326
  %345 = vmatprep.subr.bf16.mxu0 0
  %346 = vmatpush1.bf16.msra.mxu0 %v327
  %347 = vmatprep.subr.bf16.mxu0 0
  %348 = vmatpush1.bf16.msra.mxu0 %v328
  %349 = vmatprep.subr.bf16.mxu0 0
  %350 = vmatpush1.bf16.msra.mxu0 %v329
  %351 = vmatprep.subr.bf16.mxu0 0
  %352 = vmatpush1.bf16.msra.mxu0 %v330
  %353 = vmatprep.subr.bf16.mxu0 0
  %354 = vmatpush1.bf16.msra.mxu0 %v331
  %355 = vmatprep.subr.bf16.mxu0 0
  %356 = vmatpush1.bf16.msra.mxu0 %v332
  %357 = vmatprep.subr.bf16.mxu0 0
  %358 = vmatpush1.bf16.msra.mxu0 0
  %359 = vmatprep.subr.bf16.mxu0 0
  %360 = vmatpush1.bf16.msra.mxu0 0
  %361 = vmatprep.subr.bf16.mxu0 0
  %362 = vmatpush1.bf16.msra.mxu0 0
  %363 = vmatprep.subr.bf16.mxu0 0
  %364 = vmatpush1.bf16.msra.mxu0 0
  %365 = vmatprep.subr.bf16.mxu0 0
  %366 = vmatpush1.bf16.msra.mxu0 0
  %367 = vmatprep.subr.bf16.mxu0 0
  %368 = vmatpush1.bf16.msra.mxu0 0
  %369 = vmatprep.subr.bf16.mxu0 0
  %370 = vmatpush1.bf16.msra.mxu0 0
  %371 = vmatprep.subr.bf16.mxu0 0
  %372 = vmatpush1.bf16.msra.mxu0 0
  %373 = vmatprep.mubr.bf16.mxu0 0
  %374 = vmatmul.mubr.bf16.gmra.mrb[0].mxu0 %v229
  %v375 = vpop.f32.mrb[0].mxu0
  %v376 = vadd.f32 0.0, %v375
  %v377 = vpop.f32.mrb[0].mxu0
  %v378 = vpop.f32.mrb[0].mxu0
  %v379 = vadd.f32 0.0, %v378
  %v380 = vpop.f32.mrb[0].mxu0
  %381 = vmatprep.mubr.bf16.mxu0 0
  %382 = vmatmul.mubr.bf16.gmra.mrb[0].mxu0 %v230
  %v383 = vpop.f32.mrb[0].mxu0
  %v384 = vadd.f32 0.0, %v383
  %v385 = vpop.f32.mrb[0].mxu0
  %v386 = vpop.f32.mrb[0].mxu0
  %v387 = vadd.f32 0.0, %v386
  %v388 = vpop.f32.mrb[0].mxu0
  %389 = vmatprep.mubr.bf16.mxu0 0
  %390 = vmatmul.mubr.bf16.gmra.mrb[0].mxu0 %v231
  %v391 = vpop.f32.mrb[0].mxu0
  %v392 = vadd.f32 0.0, %v391
  %v393 = vpop.f32.mrb[0].mxu0
  %v394 = vpop.f32.mrb[0].mxu0
  %v395 = vadd.f32 0.0, %v394
  %v396 = vpop.f32.mrb[0].mxu0
  %397 = vmatprep.mubr.bf16.mxu0 0
  %398 = vmatmul.mubr.bf16.gmra.mrb[0].mxu0 %v232
  %v399 = vpop.f32.mrb[0].mxu0
  %v400 = vadd.f32 0.0, %v399
  %v401 = vpop.f32.mrb[0].mxu0
  %v402 = vpop.f32.mrb[0].mxu0
  %v403 = vadd.f32 0.0, %v402
  %v404 = vpop.f32.mrb[0].mxu0
  %405 = vmatprep.mubr.bf16.mxu0 0
  %406 = vmatmul.mubr.bf16.gmra.mrb[0].mxu0 %v233
  %v407 = vpop.f32.mrb[0].mxu0
  %v408 = vadd.f32 0.0, %v407
  %v409 = vpop.f32.mrb[0].mxu0
  %v410 = vpop.f32.mrb[0].mxu0
  %v411 = vadd.f32 0.0, %v410
  %v412 = vpop.f32.mrb[0].mxu0
  %413 = vmatprep.mubr.bf16.mxu0 0
  %414 = vmatmul.mubr.bf16.gmra.mrb[0].mxu0 %v234
  %v415 = vpop.f32.mrb[0].mxu0
  %v416 = vadd.f32 0.0, %v415
  %v417 = vpop.f32.mrb[0].mxu0
  %v418 = vpop.f32.mrb[0].mxu0
  %v419 = vadd.f32 0.0, %v418
  %v420 = vpop.f32.mrb[0].mxu0
  %421 = vmatprep.mubr.bf16.mxu0 0
  %422 = vmatmul.mubr.bf16.gmra.mrb[0].mxu0 %v235
  %v423 = vpop.f32.mrb[0].mxu0
  %v424 = vadd.f32 0.0, %v423
  %v425 = vpop.f32.mrb[0].mxu0
  %v426 = vpop.f32.mrb[0].mxu0
  %v427 = vadd.f32 0.0, %v426
  %v428 = vpop.f32.mrb[0].mxu0
  %429 = vmatprep.mubr.bf16.mxu0 0
  %430 = vmatmul.mubr.bf16.gmra.mrb[0].mxu0 %v236
  %v431 = vpop.f32.mrb[0].mxu0
  %v432 = vadd.f32 0.0, %v431
  %v433 = vpop.f32.mrb[0].mxu0
  %v434 = vpop.f32.mrb[0].mxu0
  %v435 = vadd.f32 0.0, %v434
  %v436 = vpop.f32.mrb[0].mxu0
  %437 = vmatprep.mubr.bf16.mxu0 0
  %438 = vmatmul.mubr.bf16.gmra.mrb[0].mxu0 %v237
  %v439 = vpop.f32.mrb[0].mxu0
  %v440 = vadd.f32 0.0, %v439
  %v441 = vpop.f32.mrb[0].mxu0
  %v442 = vpop.f32.mrb[0].mxu0
  %v443 = vadd.f32 0.0, %v442
  %v444 = vpop.f32.mrb[0].mxu0
  %445 = vmatprep.mubr.bf16.mxu0 0
  %446 = vmatmul.mubr.bf16.gmra.mrb[0].mxu0 %v238
  %v447 = vpop.f32.mrb[0].mxu0
  %v448 = vadd.f32 0.0, %v447
  %v449 = vpop.f32.mrb[0].mxu0
  %v450 = vpop.f32.mrb[0].mxu0
  %v451 = vadd.f32 0.0, %v450
  %v452 = vpop.f32.mrb[0].mxu0
  %453 = vmatprep.mubr.bf16.mxu0 0
  %454 = vmatmul.mubr.bf16.gmra.mrb[0].mxu0 %v239
  %v455 = vpop.f32.mrb[0].mxu0
  %v456 = vadd.f32 0.0, %v455
  %v457 = vpop.f32.mrb[0].mxu0
  %v458 = vpop.f32.mrb[0].mxu0
  %v459 = vadd.f32 0.0, %v458
  %v460 = vpop.f32.mrb[0].mxu0
  %461 = vmatprep.mubr.bf16.mxu0 0
  %462 = vmatmul.mubr.bf16.gmra.mrb[0].mxu0 %v240
  %v463 = vpop.f32.mrb[0].mxu0
  %v464 = vadd.f32 0.0, %v463
  %v465 = vpop.f32.mrb[0].mxu0
  %v466 = vpop.f32.mrb[0].mxu0
  %v467 = vadd.f32 0.0, %v466
  %v468 = vpop.f32.mrb[0].mxu0
  %469 = vmatprep.mubr.bf16.mxu0 0
  %470 = vmatmul.mubr.bf16.gmra.mrb[0].mxu0 %v241
  %v471 = vpop.f32.mrb[0].mxu0
  %v472 = vadd.f32 0.0, %v471
  %v473 = vpop.f32.mrb[0].mxu0
  %v474 = vpop.f32.mrb[0].mxu0
  %v475 = vadd.f32 0.0, %v474
  %v476 = vpop.f32.mrb[0].mxu0
  %477 = vmatprep.mubr.bf16.mxu0 0
  %478 = vmatmul.mubr.bf16.gmra.mrb[0].mxu0 %v242
  %v479 = vpop.f32.mrb[0].mxu0
  %v480 = vadd.f32 0.0, %v479
  %v481 = vpop.f32.mrb[0].mxu0
  %v482 = vpop.f32.mrb[0].mxu0
  %v483 = vadd.f32 0.0, %v482
  %v484 = vpop.f32.mrb[0].mxu0
  %485 = vmatprep.mubr.bf16.mxu0 0
  %486 = vmatmul.mubr.bf16.gmra.mrb[0].mxu0 %v243
  %v487 = vpop.f32.mrb[0].mxu0
  %v488 = vadd.f32 0.0, %v487
  %v489 = vpop.f32.mrb[0].mxu0
  %v490 = vpop.f32.mrb[0].mxu0
  %v491 = vadd.f32 0.0, %v490
  %v492 = vpop.f32.mrb[0].mxu0
  %493 = vmatprep.mubr.bf16.mxu0 0
  %494 = vmatmul.mubr.bf16.gmra.mrb[0].mxu0 %v244
  %v495 = vpop.f32.mrb[0].mxu0
  %v496 = vadd.f32 0.0, %v495
  %v497 = vpop.f32.mrb[0].mxu0
  %v498 = vpop.f32.mrb[0].mxu0
  %v499 = vadd.f32 0.0, %v498
  %v500 = vpop.f32.mrb[0].mxu0
  %501 = vmatprep.mubr.bf16.mxu0 0
  %502 = vmatmul.mubr.bf16.gmra.mrb[0].mxu0 %v245
  %v503 = vpop.f32.mrb[0].mxu0
  %v504 = vadd.f32 0.0, %v503
  %v505 = vpop.f32.mrb[0].mxu0
  %v506 = vpop.f32.mrb[0].mxu0
  %v507 = vadd.f32 0.0, %v506
  %v508 = vpop.f32.mrb[0].mxu0
  %509 = vmatprep.mubr.bf16.mxu0 0
  %510 = vmatmul.mubr.bf16.gmra.mrb[0].mxu0 %v246
  %v511 = vpop.f32.mrb[0].mxu0
  %v512 = vadd.f32 0.0, %v511
  %v513 = vpop.f32.mrb[0].mxu0
  %v514 = vpop.f32.mrb[0].mxu0
  %v515 = vadd.f32 0.0, %v514
  %v516 = vpop.f32.mrb[0].mxu0
  %517 = vmatprep.mubr.bf16.mxu0 0
  %518 = vmatmul.mubr.bf16.gmra.mrb[0].mxu0 %v247
  %v519 = vpop.f32.mrb[0].mxu0
  %v520 = vadd.f32 0.0, %v519
  %v521 = vpop.f32.mrb[0].mxu0
  %v522 = vpop.f32.mrb[0].mxu0
  %v523 = vadd.f32 0.0, %v522
  %v524 = vpop.f32.mrb[0].mxu0
  %525 = vmatprep.mubr.bf16.mxu0 0
  %526 = vmatmul.mubr.bf16.gmra.mrb[0].mxu0 %v248
  %v527 = vpop.f32.mrb[0].mxu0
  %v528 = vadd.f32 0.0, %v527
  %v529 = vpop.f32.mrb[0].mxu0
  %v530 = vpop.f32.mrb[0].mxu0
  %v531 = vadd.f32 0.0, %v530
  %v532 = vpop.f32.mrb[0].mxu0
  %533 = vmatprep.mubr.bf16.mxu0 0
  %534 = vmatmul.mubr.bf16.gmra.mrb[0].mxu0 %v249
  %v535 = vpop.f32.mrb[0].mxu0
  %v536 = vadd.f32 0.0, %v535
  %v537 = vpop.f32.mrb[0].mxu0
  %v538 = vpop.f32.mrb[0].mxu0
  %v539 = vadd.f32 0.0, %v538
  %v540 = vpop.f32.mrb[0].mxu0
  %541 = vmatprep.mubr.bf16.mxu0 0
  %542 = vmatmul.mubr.bf16.gmra.mrb[0].mxu0 %v250
  %v543 = vpop.f32.mrb[0].mxu0
  %v544 = vadd.f32 0.0, %v543
  %v545 = vpop.f32.mrb[0].mxu0
  %v546 = vpop.f32.mrb[0].mxu0
  %v547 = vadd.f32 0.0, %v546
  %v548 = vpop.f32.mrb[0].mxu0
  %549 = vmatprep.mubr.bf16.mxu0 0
  %550 = vmatmul.mubr.bf16.gmra.mrb[0].mxu0 %v251
  %v551 = vpop.f32.mrb[0].mxu0
  %v552 = vadd.f32 0.0, %v551
  %v553 = vpop.f32.mrb[0].mxu0
  %v554 = vpop.f32.mrb[0].mxu0
  %v555 = vadd.f32 0.0, %v554
  %v556 = vpop.f32.mrb[0].mxu0
  %557 = vmatprep.mubr.bf16.mxu0 0
  %558 = vmatmul.mubr.bf16.gmra.mrb[0].mxu0 %v252
  %v559 = vpop.f32.mrb[0].mxu0
  %v560 = vadd.f32 0.0, %v559
  %v561 = vpop.f32.mrb[0].mxu0
  %v562 = vpop.f32.mrb[0].mxu0
  %v563 = vadd.f32 0.0, %v562
  %v564 = vpop.f32.mrb[0].mxu0
  %565 = vmatprep.mubr.bf16.mxu0 0
  %566 = vmatmul.mubr.bf16.gmra.mrb[0].mxu0 %v253
  %v567 = vpop.f32.mrb[0].mxu0
  %v568 = vadd.f32 0.0, %v567
  %v569 = vpop.f32.mrb[0].mxu0
  %v570 = vpop.f32.mrb[0].mxu0
  %v571 = vadd.f32 0.0, %v570
  %v572 = vpop.f32.mrb[0].mxu0
  %573 = vmatprep.mubr.bf16.mxu0 0
  %574 = vmatmul.mubr.bf16.gmra.mrb[0].mxu0 %v254
  %v575 = vpop.f32.mrb[0].mxu0
  %v576 = vadd.f32 0.0, %v575
  %v577 = vpop.f32.mrb[0].mxu0
  %v578 = vpop.f32.mrb[0].mxu0
  %v579 = vadd.f32 0.0, %v578
  %v580 = vpop.f32.mrb[0].mxu0
  %581 = vmatprep.mubr.bf16.mxu0 0
  %582 = vmatmul.mubr.bf16.gmra.mrb[0].mxu0 %v255
  %v583 = vpop.f32.mrb[0].mxu0
  %v584 = vadd.f32 0.0, %v583
  %v585 = vpop.f32.mrb[0].mxu0
  %v586 = vpop.f32.mrb[0].mxu0
  %v587 = vadd.f32 0.0, %v586
  %v588 = vpop.f32.mrb[0].mxu0
  %589 = vmatprep.mubr.bf16.mxu0 0
  %590 = vmatmul.mubr.bf16.gmra.mrb[0].mxu0 %v256
  %v591 = vpop.f32.mrb[0].mxu0
  %v592 = vadd.f32 0.0, %v591
  %v593 = vpop.f32.mrb[0].mxu0
  %v594 = vpop.f32.mrb[0].mxu0
  %v595 = vadd.f32 0.0, %v594
  %v596 = vpop.f32.mrb[0].mxu0
  %597 = vmatprep.mubr.bf16.mxu0 0
  %598 = vmatmul.mubr.bf16.gmra.mrb[0].mxu0 %v257
  %v599 = vpop.f32.mrb[0].mxu0
  %v600 = vadd.f32 0.0, %v599
  %v601 = vpop.f32.mrb[0].mxu0
  %v602 = vpop.f32.mrb[0].mxu0
  %v603 = vadd.f32 0.0, %v602
  %v604 = vpop.f32.mrb[0].mxu0
  %605 = vmatprep.mubr.bf16.mxu0 0
  %606 = vmatmul.mubr.bf16.gmra.mrb[0].mxu0 %v258
  %v607 = vpop.f32.mrb[0].mxu0
  %v608 = vadd.f32 0.0, %v607
  %v609 = vpop.f32.mrb[0].mxu0
  %v610 = vpop.f32.mrb[0].mxu0
  %v611 = vadd.f32 0.0, %v610
  %v612 = vpop.f32.mrb[0].mxu0
  %613 = vmatprep.mubr.bf16.mxu0 0
  %614 = vmatmul.mubr.bf16.gmra.mrb[0].mxu0 %v259
  %v615 = vpop.f32.mrb[0].mxu0
  %v616 = vadd.f32 0.0, %v615
  %v617 = vpop.f32.mrb[0].mxu0
  %v618 = vpop.f32.mrb[0].mxu0
  %v619 = vadd.f32 0.0, %v618
  %v620 = vpop.f32.mrb[0].mxu0
  %621 = vmatprep.mubr.bf16.mxu0 0
  %622 = vmatmul.mubr.bf16.gmra.mrb[0].mxu0 %v260
  %v623 = vpop.f32.mrb[0].mxu0
  %v624 = vadd.f32 0.0, %v623
  %v625 = vpop.f32.mrb[0].mxu0
  %v626 = vpop.f32.mrb[0].mxu0
  %v627 = vadd.f32 0.0, %v626
  %v628 = vpop.f32.mrb[0].mxu0
  %629 = vdwg.mxu0
  %v630 = vld [vmem:[%s3] sm:$0x1]
  %v631 = vadd.f32 %v376, %v379
  %v632 = vadd.f32 %v631, %v384
  %v633 = vadd.f32 %v632, %v387
  %v634 = vadd.f32 %v633, %v392
  %v635 = vadd.f32 %v634, %v395
  %v636 = vadd.f32 %v635, %v400
  %v637 = vadd.f32 %v636, %v403
  %v638 = vadd.f32 %v637, %v408
  %v639 = vadd.f32 %v638, %v411
  %v640 = vadd.f32 %v639, %v416
  %v641 = vadd.f32 %v640, %v419
  %v642 = vadd.f32 %v641, %v424
  %v643 = vadd.f32 %v642, %v427
  %v644 = vadd.f32 %v643, %v432
  %v645 = vadd.f32 %v644, %v435
  %v646 = vadd.f32 %v645, %v440
  %v647 = vadd.f32 %v646, %v443
  %v648 = vadd.f32 %v647, %v448
  %v649 = vadd.f32 %v648, %v451
  %v650 = vadd.f32 %v649, %v456
  %v651 = vadd.f32 %v650, %v459
  %v652 = vadd.f32 %v651, %v464
  %v653 = vadd.f32 %v652, %v467
  %v654 = vadd.f32 %v653, %v472
  %v655 = vadd.f32 %v654, %v475
  %v656 = vadd.f32 %v655, %v480
  %v657 = vadd.f32 %v656, %v483
  %v658 = vadd.f32 %v657, %v488
  %v659 = vadd.f32 %v658, %v491
  %v660 = vadd.f32 %v659, %v496
  %v661 = vadd.f32 %v660, %v499
  %v662 = vadd.f32 %v661, %v504
  %v663 = vadd.f32 %v662, %v507
  %v664 = vadd.f32 %v663, %v512
  %v665 = vadd.f32 %v664, %v515
  %v666 = vadd.f32 %v665, %v520
  %v667 = vadd.f32 %v666, %v523
  %v668 = vadd.f32 %v667, %v528
  %v669 = vadd.f32 %v668, %v531
  %v670 = vadd.f32 %v669, %v536
  %v671 = vadd.f32 %v670, %v539
  %v672 = vadd.f32 %v671, %v544
  %v673 = vadd.f32 %v672, %v547
  %v674 = vadd.f32 %v673, %v552
  %v675 = vadd.f32 %v674, %v555
  %v676 = vadd.f32 %v675, %v560
  %v677 = vadd.f32 %v676, %v563
  %v678 = vadd.f32 %v677, %v568
  %v679 = vadd.f32 %v678, %v571
  %v680 = vadd.f32 %v679, %v576
  %v681 = vadd.f32 %v680, %v579
  %v682 = vadd.f32 %v681, %v584
  %v683 = vadd.f32 %v682, %v587
  %v684 = vadd.f32 %v683, %v592
  %v685 = vadd.f32 %v684, %v595
  %v686 = vadd.f32 %v685, %v600
  %v687 = vadd.f32 %v686, %v603
  %v688 = vadd.f32 %v687, %v608
  %v689 = vadd.f32 %v688, %v611
  %v690 = vadd.f32 %v689, %v616
  %v691 = vadd.f32 %v690, %v619
  %v692 = vadd.f32 %v691, %v624
  %v693 = vadd.f32 %v692, %v627
  %v694 = vrot.slane %v693, 4
  %v695 = vadd.f32 %v693, %v694
  %v696 = vrot.slane %v695, 2
  %v697 = vadd.f32 %v695, %v696
  %v698 = vrot.slane %v697, 1
  %v699 = vadd.f32 %v697, %v698
  %v700 = vadd.f32 %v630, %v699
  %701 = vst [vmem:[%s3] sm:$0x1] %v700
  %v702 = vld [vmem:[%s4] sm:$0x1]
  %v703 = vmul.f32 %v376, %v376
  %v704 = vmul.f32 %v379, %v379
  %v705 = vmul.f32 %v384, %v384
  %v706 = vmul.f32 %v387, %v387
  %v707 = vmul.f32 %v392, %v392
  %v708 = vmul.f32 %v395, %v395
  %v709 = vmul.f32 %v400, %v400
  %v710 = vmul.f32 %v403, %v403
  %v711 = vmul.f32 %v408, %v408
  %v712 = vmul.f32 %v411, %v411
  %v713 = vmul.f32 %v416, %v416
  %v714 = vmul.f32 %v419, %v419
  %v715 = vmul.f32 %v424, %v424
  %v716 = vmul.f32 %v427, %v427
  %v717 = vmul.f32 %v432, %v432
  %v718 = vmul.f32 %v435, %v435
  %v719 = vmul.f32 %v440, %v440
  %v720 = vmul.f32 %v443, %v443
  %v721 = vmul.f32 %v448, %v448
  %v722 = vmul.f32 %v451, %v451
  %v723 = vmul.f32 %v456, %v456
  %v724 = vmul.f32 %v459, %v459
  %v725 = vmul.f32 %v464, %v464
  %v726 = vmul.f32 %v467, %v467
  %v727 = vmul.f32 %v472, %v472
  %v728 = vmul.f32 %v475, %v475
  %v729 = vmul.f32 %v480, %v480
  %v730 = vmul.f32 %v483, %v483
  %v731 = vmul.f32 %v488, %v488
  %v732 = vmul.f32 %v491, %v491
  %v733 = vmul.f32 %v496, %v496
  %v734 = vmul.f32 %v499, %v499
  %v735 = vmul.f32 %v504, %v504
  %v736 = vmul.f32 %v507, %v507
  %v737 = vmul.f32 %v512, %v512
  %v738 = vmul.f32 %v515, %v515
  %v739 = vmul.f32 %v520, %v520
  %v740 = vmul.f32 %v523, %v523
  %v741 = vmul.f32 %v528, %v528
  %v742 = vmul.f32 %v531, %v531
  %v743 = vmul.f32 %v536, %v536
  %v744 = vmul.f32 %v539, %v539
  %v745 = vmul.f32 %v544, %v544
  %v746 = vmul.f32 %v547, %v547
  %v747 = vmul.f32 %v552, %v552
  %v748 = vmul.f32 %v555, %v555
  %v749 = vmul.f32 %v560, %v560
  %v750 = vmul.f32 %v563, %v563
  %v751 = vmul.f32 %v568, %v568
  %v752 = vmul.f32 %v571, %v571
  %v753 = vmul.f32 %v576, %v576
  %v754 = vmul.f32 %v579, %v579
  %v755 = vmul.f32 %v584, %v584
  %v756 = vmul.f32 %v587, %v587
  %v757 = vmul.f32 %v592, %v592
  %v758 = vmul.f32 %v595, %v595
  %v759 = vmul.f32 %v600, %v600
  %v760 = vmul.f32 %v603, %v603
  %v761 = vmul.f32 %v608, %v608
  %v762 = vmul.f32 %v611, %v611
  %v763 = vmul.f32 %v616, %v616
  %v764 = vmul.f32 %v619, %v619
  %v765 = vmul.f32 %v624, %v624
  %v766 = vmul.f32 %v627, %v627
  %v767 = vadd.f32 %v703, %v704
  %v768 = vadd.f32 %v767, %v705
  %v769 = vadd.f32 %v768, %v706
  %v770 = vadd.f32 %v769, %v707
  %v771 = vadd.f32 %v770, %v708
  %v772 = vadd.f32 %v771, %v709
  %v773 = vadd.f32 %v772, %v710
  %v774 = vadd.f32 %v773, %v711
  %v775 = vadd.f32 %v774, %v712
  %v776 = vadd.f32 %v775, %v713
  %v777 = vadd.f32 %v776, %v714
  %v778 = vadd.f32 %v777, %v715
  %v779 = vadd.f32 %v778, %v716
  %v780 = vadd.f32 %v779, %v717
  %v781 = vadd.f32 %v780, %v718
  %v782 = vadd.f32 %v781, %v719
  %v783 = vadd.f32 %v782, %v720
  %v784 = vadd.f32 %v783, %v721
  %v785 = vadd.f32 %v784, %v722
  %v786 = vadd.f32 %v785, %v723
  %v787 = vadd.f32 %v786, %v724
  %v788 = vadd.f32 %v787, %v725
  %v789 = vadd.f32 %v788, %v726
  %v790 = vadd.f32 %v789, %v727
  %v791 = vadd.f32 %v790, %v728
  %v792 = vadd.f32 %v791, %v729
  %v793 = vadd.f32 %v792, %v730
  %v794 = vadd.f32 %v793, %v731
  %v795 = vadd.f32 %v794, %v732
  %v796 = vadd.f32 %v795, %v733
  %v797 = vadd.f32 %v796, %v734
  %v798 = vadd.f32 %v797, %v735
  %v799 = vadd.f32 %v798, %v736
  %v800 = vadd.f32 %v799, %v737
  %v801 = vadd.f32 %v800, %v738
  %v802 = vadd.f32 %v801, %v739
  %v803 = vadd.f32 %v802, %v740
  %v804 = vadd.f32 %v803, %v741
  %v805 = vadd.f32 %v804, %v742
  %v806 = vadd.f32 %v805, %v743
  %v807 = vadd.f32 %v806, %v744
  %v808 = vadd.f32 %v807, %v745
  %v809 = vadd.f32 %v808, %v746
  %v810 = vadd.f32 %v809, %v747
  %v811 = vadd.f32 %v810, %v748
  %v812 = vadd.f32 %v811, %v749
  %v813 = vadd.f32 %v812, %v750
  %v814 = vadd.f32 %v813, %v751
  %v815 = vadd.f32 %v814, %v752
  %v816 = vadd.f32 %v815, %v753
  %v817 = vadd.f32 %v816, %v754
  %v818 = vadd.f32 %v817, %v755
  %v819 = vadd.f32 %v818, %v756
  %v820 = vadd.f32 %v819, %v757
  %v821 = vadd.f32 %v820, %v758
  %v822 = vadd.f32 %v821, %v759
  %v823 = vadd.f32 %v822, %v760
  %v824 = vadd.f32 %v823, %v761
  %v825 = vadd.f32 %v824, %v762
  %v826 = vadd.f32 %v825, %v763
  %v827 = vadd.f32 %v826, %v764
  %v828 = vadd.f32 %v827, %v765
  %v829 = vadd.f32 %v828, %v766
  %v830 = vrot.slane %v829, 4
  %v831 = vadd.f32 %v829, %v830
  %v832 = vrot.slane %v831, 2
  %v833 = vadd.f32 %v831, %v832
  %v834 = vrot.slane %v833, 1
  %v835 = vadd.f32 %v833, %v834
  %v836 = vadd.f32 %v702, %v835
  %837 = vst [vmem:[%s4] sm:$0x1] %v836
  %v838 = vpack.c.bf16 %v379, %v376
  %v839 = vpack.c.bf16 %v387, %v384
  %v840 = vpack.c.bf16 %v395, %v392
  %v841 = vpack.c.bf16 %v403, %v400
  %v842 = vpack.c.bf16 %v411, %v408
  %v843 = vpack.c.bf16 %v419, %v416
  %v844 = vpack.c.bf16 %v427, %v424
  %v845 = vpack.c.bf16 %v435, %v432
  %v846 = vpack.c.bf16 %v443, %v440
  %v847 = vpack.c.bf16 %v451, %v448
  %v848 = vpack.c.bf16 %v459, %v456
  %v849 = vpack.c.bf16 %v467, %v464
  %v850 = vpack.c.bf16 %v475, %v472
  %v851 = vpack.c.bf16 %v483, %v480
  %v852 = vpack.c.bf16 %v491, %v488
  %v853 = vpack.c.bf16 %v499, %v496
  %v854 = vpack.c.bf16 %v507, %v504
  %v855 = vpack.c.bf16 %v515, %v512
  %v856 = vpack.c.bf16 %v523, %v520
  %v857 = vpack.c.bf16 %v531, %v528
  %v858 = vpack.c.bf16 %v539, %v536
  %v859 = vpack.c.bf16 %v547, %v544
  %v860 = vpack.c.bf16 %v555, %v552
  %v861 = vpack.c.bf16 %v563, %v560
  %v862 = vpack.c.bf16 %v571, %v568
  %v863 = vpack.c.bf16 %v579, %v576
  %v864 = vpack.c.bf16 %v587, %v584
  %v865 = vpack.c.bf16 %v595, %v592
  %v866 = vpack.c.bf16 %v603, %v600
  %v867 = vpack.c.bf16 %v611, %v608
  %v868 = vpack.c.bf16 %v619, %v616
  %v869 = vpack.c.bf16 %v627, %v624
  %v902 = vunpack.c.l.b16 %v838
  %v903 = vunpack.c.h.b16 %v838
  %v904 = vunpack.c.l.b16 %v839
  %v905 = vunpack.c.h.b16 %v839
  %v906 = vunpack.c.l.b16 %v840
  %v907 = vunpack.c.h.b16 %v840
  %v908 = vunpack.c.l.b16 %v841
  %v909 = vunpack.c.h.b16 %v841
  %v910 = vunpack.c.l.b16 %v842
  %v911 = vunpack.c.h.b16 %v842
  %v912 = vunpack.c.l.b16 %v843
  %v913 = vunpack.c.h.b16 %v843
  %v914 = vunpack.c.l.b16 %v844
  %v915 = vunpack.c.h.b16 %v844
  %v916 = vunpack.c.l.b16 %v845
  %v917 = vunpack.c.h.b16 %v845
  %v918 = vunpack.c.l.b16 %v846
  %v919 = vunpack.c.h.b16 %v846
  %v920 = vunpack.c.l.b16 %v847
  %v921 = vunpack.c.h.b16 %v847
  %v922 = vunpack.c.l.b16 %v848
  %v923 = vunpack.c.h.b16 %v848
  %v924 = vunpack.c.l.b16 %v849
  %v925 = vunpack.c.h.b16 %v849
  %v926 = vunpack.c.l.b16 %v850
  %v927 = vunpack.c.h.b16 %v850
  %v928 = vunpack.c.l.b16 %v851
  %v929 = vunpack.c.h.b16 %v851
  %v930 = vunpack.c.l.b16 %v852
  %v931 = vunpack.c.h.b16 %v852
  %v932 = vunpack.c.l.b16 %v853
  %v933 = vunpack.c.h.b16 %v853
  %v934 = vunpack.c.l.b16 %v854
  %v935 = vunpack.c.h.b16 %v854
  %v936 = vunpack.c.l.b16 %v855
  %v937 = vunpack.c.h.b16 %v855
  %v938 = vunpack.c.l.b16 %v856
  %v939 = vunpack.c.h.b16 %v856
  %v940 = vunpack.c.l.b16 %v857
  %v941 = vunpack.c.h.b16 %v857
  %v942 = vunpack.c.l.b16 %v858
  %v943 = vunpack.c.h.b16 %v858
  %v944 = vunpack.c.l.b16 %v859
  %v945 = vunpack.c.h.b16 %v859
  %v946 = vunpack.c.l.b16 %v860
  %v947 = vunpack.c.h.b16 %v860
  %v948 = vunpack.c.l.b16 %v861
  %v949 = vunpack.c.h.b16 %v861
  %v950 = vunpack.c.l.b16 %v862
  %v951 = vunpack.c.h.b16 %v862
  %v952 = vunpack.c.l.b16 %v863
  %v953 = vunpack.c.h.b16 %v863
  %v954 = vunpack.c.l.b16 %v864
  %v955 = vunpack.c.h.b16 %v864
  %v956 = vunpack.c.l.b16 %v865
  %v957 = vunpack.c.h.b16 %v865
  %v958 = vunpack.c.l.b16 %v866
  %v959 = vunpack.c.h.b16 %v866
  %v960 = vunpack.c.l.b16 %v867
  %v961 = vunpack.c.h.b16 %v867
  %v962 = vunpack.c.l.b16 %v868
  %v963 = vunpack.c.h.b16 %v868
  %v964 = vunpack.c.l.b16 %v869
  %v965 = vunpack.c.h.b16 %v869
  %v966 = vpack.c.b16 %v902, %v902
  %v967 = vpack.c.b16 %v903, %v903
  %v968 = vpack.c.b16 %v904, %v904
  %v969 = vpack.c.b16 %v905, %v905
  %v970 = vpack.c.b16 %v906, %v906
  %v971 = vpack.c.b16 %v907, %v907
  %v972 = vpack.c.b16 %v908, %v908
  %v973 = vpack.c.b16 %v909, %v909
  %v974 = vpack.c.b16 %v910, %v910
  %v975 = vpack.c.b16 %v911, %v911
  %v976 = vpack.c.b16 %v912, %v912
  %v977 = vpack.c.b16 %v913, %v913
  %v978 = vpack.c.b16 %v914, %v914
  %v979 = vpack.c.b16 %v915, %v915
  %v980 = vpack.c.b16 %v916, %v916
  %v981 = vpack.c.b16 %v917, %v917
  %v982 = vpack.c.b16 %v918, %v918
  %v983 = vpack.c.b16 %v919, %v919
  %v984 = vpack.c.b16 %v920, %v920
  %v985 = vpack.c.b16 %v921, %v921
  %v986 = vpack.c.b16 %v922, %v922
  %v987 = vpack.c.b16 %v923, %v923
  %v988 = vpack.c.b16 %v924, %v924
  %v989 = vpack.c.b16 %v925, %v925
  %v990 = vpack.c.b16 %v926, %v926
  %v991 = vpack.c.b16 %v927, %v927
  %v992 = vpack.c.b16 %v928, %v928
  %v993 = vpack.c.b16 %v929, %v929
  %v994 = vpack.c.b16 %v930, %v930
  %v995 = vpack.c.b16 %v931, %v931
  %v996 = vpack.c.b16 %v932, %v932
  %v997 = vpack.c.b16 %v933, %v933
  %v998 = vpack.c.b16 %v934, %v934
  %v999 = vpack.c.b16 %v935, %v935
  %v1000 = vpack.c.b16 %v936, %v936
  %v1001 = vpack.c.b16 %v937, %v937
  %v1002 = vpack.c.b16 %v938, %v938
  %v1003 = vpack.c.b16 %v939, %v939
  %v1004 = vpack.c.b16 %v940, %v940
  %v1005 = vpack.c.b16 %v941, %v941
  %v1006 = vpack.c.b16 %v942, %v942
  %v1007 = vpack.c.b16 %v943, %v943
  %v1008 = vpack.c.b16 %v944, %v944
  %v1009 = vpack.c.b16 %v945, %v945
  %v1010 = vpack.c.b16 %v946, %v946
  %v1011 = vpack.c.b16 %v947, %v947
  %v1012 = vpack.c.b16 %v948, %v948
  %v1013 = vpack.c.b16 %v949, %v949
  %v1014 = vpack.c.b16 %v950, %v950
  %v1015 = vpack.c.b16 %v951, %v951
  %v1016 = vpack.c.b16 %v952, %v952
  %v1017 = vpack.c.b16 %v953, %v953
  %v1018 = vpack.c.b16 %v954, %v954
  %v1019 = vpack.c.b16 %v955, %v955
  %v1020 = vpack.c.b16 %v956, %v956
  %v1021 = vpack.c.b16 %v957, %v957
  %v1022 = vpack.c.b16 %v958, %v958
  %v1023 = vpack.c.b16 %v959, %v959
  %v1024 = vpack.c.b16 %v960, %v960
  %v1025 = vpack.c.b16 %v961, %v961
  %v1026 = vpack.c.b16 %v962, %v962
  %v1027 = vpack.c.b16 %v963, %v963
  %v1028 = vpack.c.b16 %v964, %v964
  %v1029 = vpack.c.b16 %v965, %v965
  %1094 = vst [vmem:[%s2] sm:$0xf] %v966
  %1095 = vst [vmem:[%s2 + $0x4] sm:$0xf] %v967
  %1096 = vst [vmem:[%s2 + $0x8] sm:$0xf] %v968
  %1097 = vst [vmem:[%s2 + $0xc] sm:$0xf] %v969
  %1098 = vst [vmem:[%s2 + $0x10] sm:$0xf] %v970
  %1099 = vst [vmem:[%s2 + $0x14] sm:$0xf] %v971
  %1100 = vst [vmem:[%s2 + $0x18] sm:$0xf] %v972
  %1101 = vst [vmem:[%s2 + $0x1c] sm:$0xf] %v973
  %1102 = vst [vmem:[%s2 + $0x20] sm:$0xf] %v974
  %1103 = vst [vmem:[%s2 + $0x24] sm:$0xf] %v975
  %1104 = vst [vmem:[%s2 + $0x28] sm:$0xf] %v976
  %1105 = vst [vmem:[%s2 + $0x2c] sm:$0xf] %v977
  %1106 = vst [vmem:[%s2 + $0x30] sm:$0xf] %v978
  %1107 = vst [vmem:[%s2 + $0x34] sm:$0xf] %v979
  %1108 = vst [vmem:[%s2 + $0x38] sm:$0xf] %v980
  %1109 = vst [vmem:[%s2 + $0x3c] sm:$0xf] %v981
  %1110 = vst [vmem:[%s2 + $0x40] sm:$0xf] %v982
  %1111 = vst [vmem:[%s2 + $0x44] sm:$0xf] %v983
  %1112 = vst [vmem:[%s2 + $0x48] sm:$0xf] %v984
  %1113 = vst [vmem:[%s2 + $0x4c] sm:$0xf] %v985
  %1114 = vst [vmem:[%s2 + $0x50] sm:$0xf] %v986
  %1115 = vst [vmem:[%s2 + $0x54] sm:$0xf] %v987
  %1116 = vst [vmem:[%s2 + $0x58] sm:$0xf] %v988
  %1117 = vst [vmem:[%s2 + $0x5c] sm:$0xf] %v989
  %1118 = vst [vmem:[%s2 + $0x60] sm:$0xf] %v990
  %1119 = vst [vmem:[%s2 + $0x64] sm:$0xf] %v991
  %1120 = vst [vmem:[%s2 + $0x68] sm:$0xf] %v992
  %1121 = vst [vmem:[%s2 + $0x6c] sm:$0xf] %v993
  %1122 = vst [vmem:[%s2 + $0x70] sm:$0xf] %v994
  %1123 = vst [vmem:[%s2 + $0x74] sm:$0xf] %v995
  %1124 = vst [vmem:[%s2 + $0x78] sm:$0xf] %v996
  %1125 = vst [vmem:[%s2 + $0x7c] sm:$0xf] %v997
  %1126 = vst [vmem:[%s2 + $0x80] sm:$0xf] %v998
  %1127 = vst [vmem:[%s2 + $0x84] sm:$0xf] %v999
  %1128 = vst [vmem:[%s2 + $0x88] sm:$0xf] %v1000
  %1129 = vst [vmem:[%s2 + $0x8c] sm:$0xf] %v1001
  %1130 = vst [vmem:[%s2 + $0x90] sm:$0xf] %v1002
  %1131 = vst [vmem:[%s2 + $0x94] sm:$0xf] %v1003
  %1132 = vst [vmem:[%s2 + $0x98] sm:$0xf] %v1004
  %1133 = vst [vmem:[%s2 + $0x9c] sm:$0xf] %v1005
  %1134 = vst [vmem:[%s2 + $0xa0] sm:$0xf] %v1006
  %1135 = vst [vmem:[%s2 + $0xa4] sm:$0xf] %v1007
  %1136 = vst [vmem:[%s2 + $0xa8] sm:$0xf] %v1008
  %1137 = vst [vmem:[%s2 + $0xac] sm:$0xf] %v1009
  %1138 = vst [vmem:[%s2 + $0xb0] sm:$0xf] %v1010
  %1139 = vst [vmem:[%s2 + $0xb4] sm:$0xf] %v1011
  %1140 = vst [vmem:[%s2 + $0xb8] sm:$0xf] %v1012
  %1141 = vst [vmem:[%s2 + $0xbc] sm:$0xf] %v1013
  %1142 = vst [vmem:[%s2 + $0xc0] sm:$0xf] %v1014
  %1143 = vst [vmem:[%s2 + $0xc4] sm:$0xf] %v1015
  %1144 = vst [vmem:[%s2 + $0xc8] sm:$0xf] %v1016
  %1145 = vst [vmem:[%s2 + $0xcc] sm:$0xf] %v1017
  %1146 = vst [vmem:[%s2 + $0xd0] sm:$0xf] %v1018
  %1147 = vst [vmem:[%s2 + $0xd4] sm:$0xf] %v1019
  %1148 = vst [vmem:[%s2 + $0xd8] sm:$0xf] %v1020
  %1149 = vst [vmem:[%s2 + $0xdc] sm:$0xf] %v1021
  %1150 = vst [vmem:[%s2 + $0xe0] sm:$0xf] %v1022
  %1151 = vst [vmem:[%s2 + $0xe4] sm:$0xf] %v1023
  %1152 = vst [vmem:[%s2 + $0xe8] sm:$0xf] %v1024
  %1153 = vst [vmem:[%s2 + $0xec] sm:$0xf] %v1025
  %1154 = vst [vmem:[%s2 + $0xf0] sm:$0xf] %v1026
  %1155 = vst [vmem:[%s2 + $0xf4] sm:$0xf] %v1027
  %1156 = vst [vmem:[%s2 + $0xf8] sm:$0xf] %v1028
  %1157 = vst [vmem:[%s2 + $0xfc] sm:$0xf] %v1029
  // Predicated region
  $region14: #{discriminator_forward.8} parent=0 // pred_check
    _
  $region15: #{discriminator_forward.8} parent=0 // pred_check_branch
    %1159 = sbr.rel (0) target = $region17
  $region16: #{discriminator_forward.8} parent=0 // pred_region
    _
  $region17: #{discriminator_forward.8} parent=0 // pred_fallthru
    _
  // Predicated region
  $region18: #{discriminator_forward.8} parent=0 // pred_check
    _
  $region19: #{discriminator_forward.8} parent=0 // pred_check_branch
    %1161 = sbr.rel (0) target = $region21
  $region20: #{discriminator_forward.8} parent=0 // pred_region
    _
  $region21: #{discriminator_forward.8} parent=0 // pred_fallthru
    _
  // Predicated region
  $region22: #{discriminator_forward.8} parent=0 // pred_check
    _
  $region23: #{discriminator_forward.8} parent=0 // pred_check_branch
    %1163 = sbr.rel (0) target = $region25
  $region24: #{discriminator_forward.8} parent=0 // pred_region
    _
  $region25: #{discriminator_forward.8} parent=0 // pred_fallthru
    _
  // Predicated region
  $region26: #{discriminator_forward.8} parent=0 // pred_check
    _
  $region27: #{discriminator_forward.8} parent=0 // pred_check_branch
    %1165 = sbr.rel (0) target = $region29
  $region28: #{discriminator_forward.8} parent=0 // pred_region
    _
  $region29: #{discriminator_forward.8} parent=0 // pred_fallthru
    _
  // Predicated region
  $region30: #{discriminator_forward.8} parent=0 // pred_check
    _
  $region31: #{discriminator_forward.8} parent=0 // pred_check_branch
    %1167 = sbr.rel (0) target = $region33
  $region32: #{discriminator_forward.8} parent=0 // pred_region
    _
  $region33: #{discriminator_forward.8} parent=0 // pred_fallthru
    _
  // Predicated region
  $region34: #{discriminator_forward.8} parent=0 // pred_check
    _
  $region35: #{discriminator_forward.8} parent=0 // pred_check_branch
    %1169 = sbr.rel (0) target = $region37
  $region36: #{discriminator_forward.8} parent=0 // pred_region
    _
  $region37: #{discriminator_forward.8} parent=0 // pred_fallthru
    _

// kernel: discriminator_forward.9
$region0: #{discriminator_forward.9}
  #allocation0 [shape = 'u32[]', space=smem, size = 0x4, offset = 0x4, fixed_abs, tag = 'smem constant byte address 0x4 - core index']
  #allocation1 [shape = 'u32[144,128]{1,0:T(1,128)}', space=vmem, size = 0x12000, scoped, tag = 'internal scratch']
  %s0 = inlined_call_operand.vmem [shape: bf16[512,128], index: 0, kind: input, shape index: {}]
  %s1 = inlined_call_operand.vmem [shape: f32[1,128], index: 1, kind: input, shape index: {}]
  %s2 = inlined_call_operand.vmem [shape: f32[1,128], index: 2, kind: input, shape index: {}]
  %s3 = inlined_call_operand.vmem [shape: bf16[512,128], index: 3, kind: output, shape index: {}]
  %s4 = sld [smem:[#allocation0]]
  $region22: #{discriminator_forward.9} parent=0
    _
  %s6 = ssub.s32 1, %s4
  %s7 = scalar_select 0, %s6, %s4
  // Predicated region
  $region2: #{discriminator_forward.9} parent=0 // pred_check
    _
  $region3: #{discriminator_forward.9} parent=0 // pred_check_branch
    %9 = sbr.rel (0) target = $region5
  $region4: #{discriminator_forward.9} parent=0 // pred_region
    _
  $region5: #{discriminator_forward.9} parent=0 // pred_fallthru
    _
  // Predicated region
  $region6: #{discriminator_forward.9} parent=0 // pred_check
    _
  $region7: #{discriminator_forward.9} parent=0 // pred_check_branch
    %11 = sbr.rel (0) target = $region9
  $region8: #{discriminator_forward.9} parent=0 // pred_region
    _
  $region9: #{discriminator_forward.9} parent=0 // pred_fallthru
    _
  // Predicated region
  $region10: #{discriminator_forward.9} parent=0 // pred_check
    _
  $region11: #{discriminator_forward.9} parent=0 // pred_check_branch
    %13 = sbr.rel (0) target = $region13
  $region12: #{discriminator_forward.9} parent=0 // pred_region
    _
  $region13: #{discriminator_forward.9} parent=0 // pred_fallthru
    _
  %v14 = vld [vmem:[%s0] sm:$0xf]
  %v15 = vld [vmem:[%s0 + $0x4] sm:$0xf]
  %v16 = vld [vmem:[%s0 + $0x8] sm:$0xf]
  %v17 = vld [vmem:[%s0 + $0xc] sm:$0xf]
  %v18 = vld [vmem:[%s0 + $0x10] sm:$0xf]
  %v19 = vld [vmem:[%s0 + $0x14] sm:$0xf]
  %v20 = vld [vmem:[%s0 + $0x18] sm:$0xf]
  %v21 = vld [vmem:[%s0 + $0x1c] sm:$0xf]
  %v22 = vld [vmem:[%s0 + $0x20] sm:$0xf]
  %v23 = vld [vmem:[%s0 + $0x24] sm:$0xf]
  %v24 = vld [vmem:[%s0 + $0x28] sm:$0xf]
  %v25 = vld [vmem:[%s0 + $0x2c] sm:$0xf]
  %v26 = vld [vmem:[%s0 + $0x30] sm:$0xf]
  %v27 = vld [vmem:[%s0 + $0x34] sm:$0xf]
  %v28 = vld [vmem:[%s0 + $0x38] sm:$0xf]
  %v29 = vld [vmem:[%s0 + $0x3c] sm:$0xf]
  %v30 = vld [vmem:[%s0 + $0x40] sm:$0xf]
  %v31 = vld [vmem:[%s0 + $0x44] sm:$0xf]
  %v32 = vld [vmem:[%s0 + $0x48] sm:$0xf]
  %v33 = vld [vmem:[%s0 + $0x4c] sm:$0xf]
  %v34 = vld [vmem:[%s0 + $0x50] sm:$0xf]
  %v35 = vld [vmem:[%s0 + $0x54] sm:$0xf]
  %v36 = vld [vmem:[%s0 + $0x58] sm:$0xf]
  %v37 = vld [vmem:[%s0 + $0x5c] sm:$0xf]
  %v38 = vld [vmem:[%s0 + $0x60] sm:$0xf]
  %v39 = vld [vmem:[%s0 + $0x64] sm:$0xf]
  %v40 = vld [vmem:[%s0 + $0x68] sm:$0xf]
  %v41 = vld [vmem:[%s0 + $0x6c] sm:$0xf]
  %v42 = vld [vmem:[%s0 + $0x70] sm:$0xf]
  %v43 = vld [vmem:[%s0 + $0x74] sm:$0xf]
  %v44 = vld [vmem:[%s0 + $0x78] sm:$0xf]
  %v45 = vld [vmem:[%s0 + $0x7c] sm:$0xf]
  %v46 = vld [vmem:[%s0 + $0x80] sm:$0xf]
  %v47 = vld [vmem:[%s0 + $0x84] sm:$0xf]
  %v48 = vld [vmem:[%s0 + $0x88] sm:$0xf]
  %v49 = vld [vmem:[%s0 + $0x8c] sm:$0xf]
  %v50 = vld [vmem:[%s0 + $0x90] sm:$0xf]
  %v51 = vld [vmem:[%s0 + $0x94] sm:$0xf]
  %v52 = vld [vmem:[%s0 + $0x98] sm:$0xf]
  %v53 = vld [vmem:[%s0 + $0x9c] sm:$0xf]
  %v54 = vld [vmem:[%s0 + $0xa0] sm:$0xf]
  %v55 = vld [vmem:[%s0 + $0xa4] sm:$0xf]
  %v56 = vld [vmem:[%s0 + $0xa8] sm:$0xf]
  %v57 = vld [vmem:[%s0 + $0xac] sm:$0xf]
  %v58 = vld [vmem:[%s0 + $0xb0] sm:$0xf]
  %v59 = vld [vmem:[%s0 + $0xb4] sm:$0xf]
  %v60 = vld [vmem:[%s0 + $0xb8] sm:$0xf]
  %v61 = vld [vmem:[%s0 + $0xbc] sm:$0xf]
  %v62 = vld [vmem:[%s0 + $0xc0] sm:$0xf]
  %v63 = vld [vmem:[%s0 + $0xc4] sm:$0xf]
  %v64 = vld [vmem:[%s0 + $0xc8] sm:$0xf]
  %v65 = vld [vmem:[%s0 + $0xcc] sm:$0xf]
  %v66 = vld [vmem:[%s0 + $0xd0] sm:$0xf]
  %v67 = vld [vmem:[%s0 + $0xd4] sm:$0xf]
  %v68 = vld [vmem:[%s0 + $0xd8] sm:$0xf]
  %v69 = vld [vmem:[%s0 + $0xdc] sm:$0xf]
  %v70 = vld [vmem:[%s0 + $0xe0] sm:$0xf]
  %v71 = vld [vmem:[%s0 + $0xe4] sm:$0xf]
  %v72 = vld [vmem:[%s0 + $0xe8] sm:$0xf]
  %v73 = vld [vmem:[%s0 + $0xec] sm:$0xf]
  %v74 = vld [vmem:[%s0 + $0xf0] sm:$0xf]
  %v75 = vld [vmem:[%s0 + $0xf4] sm:$0xf]
  %v76 = vld [vmem:[%s0 + $0xf8] sm:$0xf]
  %v77 = vld [vmem:[%s0 + $0xfc] sm:$0xf]
  %v78 = vunpack.c.l.bf16 %v14
  %v79 = vunpack.c.l.bf16 %v15
  %v80 = vunpack.c.l.bf16 %v16
  %v81 = vunpack.c.l.bf16 %v17
  %v82 = vunpack.c.l.bf16 %v18
  %v83 = vunpack.c.l.bf16 %v19
  %v84 = vunpack.c.l.bf16 %v20
  %v85 = vunpack.c.l.bf16 %v21
  %v86 = vunpack.c.l.bf16 %v22
  %v87 = vunpack.c.l.bf16 %v23
  %v88 = vunpack.c.l.bf16 %v24
  %v89 = vunpack.c.l.bf16 %v25
  %v90 = vunpack.c.l.bf16 %v26
  %v91 = vunpack.c.l.bf16 %v27
  %v92 = vunpack.c.l.bf16 %v28
  %v93 = vunpack.c.l.bf16 %v29
  %v94 = vunpack.c.l.bf16 %v30
  %v95 = vunpack.c.l.bf16 %v31
  %v96 = vunpack.c.l.bf16 %v32
  %v97 = vunpack.c.l.bf16 %v33
  %v98 = vunpack.c.l.bf16 %v34
  %v99 = vunpack.c.l.bf16 %v35
  %v100 = vunpack.c.l.bf16 %v36
  %v101 = vunpack.c.l.bf16 %v37
  %v102 = vunpack.c.l.bf16 %v38
  %v103 = vunpack.c.l.bf16 %v39
  %v104 = vunpack.c.l.bf16 %v40
  %v105 = vunpack.c.l.bf16 %v41
  %v106 = vunpack.c.l.bf16 %v42
  %v107 = vunpack.c.l.bf16 %v43
  %v108 = vunpack.c.l.bf16 %v44
  %v109 = vunpack.c.l.bf16 %v45
  %v110 = vunpack.c.l.bf16 %v46
  %v111 = vunpack.c.l.bf16 %v47
  %v112 = vunpack.c.l.bf16 %v48
  %v113 = vunpack.c.l.bf16 %v49
  %v114 = vunpack.c.l.bf16 %v50
  %v115 = vunpack.c.l.bf16 %v51
  %v116 = vunpack.c.l.bf16 %v52
  %v117 = vunpack.c.l.bf16 %v53
  %v118 = vunpack.c.l.bf16 %v54
  %v119 = vunpack.c.l.bf16 %v55
  %v120 = vunpack.c.l.bf16 %v56
  %v121 = vunpack.c.l.bf16 %v57
  %v122 = vunpack.c.l.bf16 %v58
  %v123 = vunpack.c.l.bf16 %v59
  %v124 = vunpack.c.l.bf16 %v60
  %v125 = vunpack.c.l.bf16 %v61
  %v126 = vunpack.c.l.bf16 %v62
  %v127 = vunpack.c.l.bf16 %v63
  %v128 = vunpack.c.l.bf16 %v64
  %v129 = vunpack.c.l.bf16 %v65
  %v130 = vunpack.c.l.bf16 %v66
  %v131 = vunpack.c.l.bf16 %v67
  %v132 = vunpack.c.l.bf16 %v68
  %v133 = vunpack.c.l.bf16 %v69
  %v134 = vunpack.c.l.bf16 %v70
  %v135 = vunpack.c.l.bf16 %v71
  %v136 = vunpack.c.l.bf16 %v72
  %v137 = vunpack.c.l.bf16 %v73
  %v138 = vunpack.c.l.bf16 %v74
  %v139 = vunpack.c.l.bf16 %v75
  %v140 = vunpack.c.l.bf16 %v76
  %v141 = vunpack.c.l.bf16 %v77
  %v142 = vld [vmem:[%s1] sm:$0x1]
  %v144 = vlaneseq
  %v145 = vshrl.u32 %v144, 7
  %v146 = vsub.s32 0, %v145
  %v147 = vrot.slane %v142, %v146
  %v149 = vmul.f32 %v78, %v147
  %v150 = vmul.f32 %v79, %v147
  %v151 = vmul.f32 %v80, %v147
  %v152 = vmul.f32 %v81, %v147
  %v153 = vmul.f32 %v82, %v147
  %v154 = vmul.f32 %v83, %v147
  %v155 = vmul.f32 %v84, %v147
  %v156 = vmul.f32 %v85, %v147
  %v157 = vmul.f32 %v86, %v147
  %v158 = vmul.f32 %v87, %v147
  %v159 = vmul.f32 %v88, %v147
  %v160 = vmul.f32 %v89, %v147
  %v161 = vmul.f32 %v90, %v147
  %v162 = vmul.f32 %v91, %v147
  %v163 = vmul.f32 %v92, %v147
  %v164 = vmul.f32 %v93, %v147
  %v165 = vmul.f32 %v94, %v147
  %v166 = vmul.f32 %v95, %v147
  %v167 = vmul.f32 %v96, %v147
  %v168 = vmul.f32 %v97, %v147
  %v169 = vmul.f32 %v98, %v147
  %v170 = vmul.f32 %v99, %v147
  %v171 = vmul.f32 %v100, %v147
  %v172 = vmul.f32 %v101, %v147
  %v173 = vmul.f32 %v102, %v147
  %v174 = vmul.f32 %v103, %v147
  %v175 = vmul.f32 %v104, %v147
  %v176 = vmul.f32 %v105, %v147
  %v177 = vmul.f32 %v106, %v147
  %v178 = vmul.f32 %v107, %v147
  %v179 = vmul.f32 %v108, %v147
  %v180 = vmul.f32 %v109, %v147
  %v181 = vmul.f32 %v110, %v147
  %v182 = vmul.f32 %v111, %v147
  %v183 = vmul.f32 %v112, %v147
  %v184 = vmul.f32 %v113, %v147
  %v185 = vmul.f32 %v114, %v147
  %v186 = vmul.f32 %v115, %v147
  %v187 = vmul.f32 %v116, %v147
  %v188 = vmul.f32 %v117, %v147
  %v189 = vmul.f32 %v118, %v147
  %v190 = vmul.f32 %v119, %v147
  %v191 = vmul.f32 %v120, %v147
  %v192 = vmul.f32 %v121, %v147
  %v193 = vmul.f32 %v122, %v147
  %v194 = vmul.f32 %v123, %v147
  %v195 = vmul.f32 %v124, %v147
  %v196 = vmul.f32 %v125, %v147
  %v197 = vmul.f32 %v126, %v147
  %v198 = vmul.f32 %v127, %v147
  %v199 = vmul.f32 %v128, %v147
  %v200 = vmul.f32 %v129, %v147
  %v201 = vmul.f32 %v130, %v147
  %v202 = vmul.f32 %v131, %v147
  %v203 = vmul.f32 %v132, %v147
  %v204 = vmul.f32 %v133, %v147
  %v205 = vmul.f32 %v134, %v147
  %v206 = vmul.f32 %v135, %v147
  %v207 = vmul.f32 %v136, %v147
  %v208 = vmul.f32 %v137, %v147
  %v209 = vmul.f32 %v138, %v147
  %v210 = vmul.f32 %v139, %v147
  %v211 = vmul.f32 %v140, %v147
  %v212 = vmul.f32 %v141, %v147
  %v213 = vld [vmem:[%s2] sm:$0x1]
  %v215 = vlaneseq
  %v216 = vshrl.u32 %v215, 7
  %v217 = vsub.s32 0, %v216
  %v218 = vrot.slane %v213, %v217
  %v220 = vadd.f32 %v149, %v218
  %v221 = vadd.f32 %v150, %v218
  %v222 = vadd.f32 %v151, %v218
  %v223 = vadd.f32 %v152, %v218
  %v224 = vadd.f32 %v153, %v218
  %v225 = vadd.f32 %v154, %v218
  %v226 = vadd.f32 %v155, %v218
  %v227 = vadd.f32 %v156, %v218
  %v228 = vadd.f32 %v157, %v218
  %v229 = vadd.f32 %v158, %v218
  %v230 = vadd.f32 %v159, %v218
  %v231 = vadd.f32 %v160, %v218
  %v232 = vadd.f32 %v161, %v218
  %v233 = vadd.f32 %v162, %v218
  %v234 = vadd.f32 %v163, %v218
  %v235 = vadd.f32 %v164, %v218
  %v236 = vadd.f32 %v165, %v218
  %v237 = vadd.f32 %v166, %v218
  %v238 = vadd.f32 %v167, %v218
  %v239 = vadd.f32 %v168, %v218
  %v240 = vadd.f32 %v169, %v218
  %v241 = vadd.f32 %v170, %v218
  %v242 = vadd.f32 %v171, %v218
  %v243 = vadd.f32 %v172, %v218
  %v244 = vadd.f32 %v173, %v218
  %v245 = vadd.f32 %v174, %v218
  %v246 = vadd.f32 %v175, %v218
  %v247 = vadd.f32 %v176, %v218
  %v248 = vadd.f32 %v177, %v218
  %v249 = vadd.f32 %v178, %v218
  %v250 = vadd.f32 %v179, %v218
  %v251 = vadd.f32 %v180, %v218
  %v252 = vadd.f32 %v181, %v218
  %v253 = vadd.f32 %v182, %v218
  %v254 = vadd.f32 %v183, %v218
  %v255 = vadd.f32 %v184, %v218
  %v256 = vadd.f32 %v185, %v218
  %v257 = vadd.f32 %v186, %v218
  %v258 = vadd.f32 %v187, %v218
  %v259 = vadd.f32 %v188, %v218
  %v260 = vadd.f32 %v189, %v218
  %v261 = vadd.f32 %v190, %v218
  %v262 = vadd.f32 %v191, %v218
  %v263 = vadd.f32 %v192, %v218
  %v264 = vadd.f32 %v193, %v218
  %v265 = vadd.f32 %v194, %v218
  %v266 = vadd.f32 %v195, %v218
  %v267 = vadd.f32 %v196, %v218
  %v268 = vadd.f32 %v197, %v218
  %v269 = vadd.f32 %v198, %v218
  %v270 = vadd.f32 %v199, %v218
  %v271 = vadd.f32 %v200, %v218
  %v272 = vadd.f32 %v201, %v218
  %v273 = vadd.f32 %v202, %v218
  %v274 = vadd.f32 %v203, %v218
  %v275 = vadd.f32 %v204, %v218
  %v276 = vadd.f32 %v205, %v218
  %v277 = vadd.f32 %v206, %v218
  %v278 = vadd.f32 %v207, %v218
  %v279 = vadd.f32 %v208, %v218
  %v280 = vadd.f32 %v209, %v218
  %v281 = vadd.f32 %v210, %v218
  %v282 = vadd.f32 %v211, %v218
  %v283 = vadd.f32 %v212, %v218
  %vm284 = vcmp.gt.f32.partialorder %v220, 0.0
  %vm285 = vcmp.gt.f32.partialorder %v221, 0.0
  %vm286 = vcmp.gt.f32.partialorder %v222, 0.0
  %vm287 = vcmp.gt.f32.partialorder %v223, 0.0
  %vm288 = vcmp.gt.f32.partialorder %v224, 0.0
  %vm289 = vcmp.gt.f32.partialorder %v225, 0.0
  %vm290 = vcmp.gt.f32.partialorder %v226, 0.0
  %vm291 = vcmp.gt.f32.partialorder %v227, 0.0
  %vm292 = vcmp.gt.f32.partialorder %v228, 0.0
  %vm293 = vcmp.gt.f32.partialorder %v229, 0.0
  %vm294 = vcmp.gt.f32.partialorder %v230, 0.0
  %vm295 = vcmp.gt.f32.partialorder %v231, 0.0
  %vm296 = vcmp.gt.f32.partialorder %v232, 0.0
  %vm297 = vcmp.gt.f32.partialorder %v233, 0.0
  %vm298 = vcmp.gt.f32.partialorder %v234, 0.0
  %vm299 = vcmp.gt.f32.partialorder %v235, 0.0
  %vm300 = vcmp.gt.f32.partialorder %v236, 0.0
  %vm301 = vcmp.gt.f32.partialorder %v237, 0.0
  %vm302 = vcmp.gt.f32.partialorder %v238, 0.0
  %vm303 = vcmp.gt.f32.partialorder %v239, 0.0
  %vm304 = vcmp.gt.f32.partialorder %v240, 0.0
  %vm305 = vcmp.gt.f32.partialorder %v241, 0.0
  %vm306 = vcmp.gt.f32.partialorder %v242, 0.0
  %vm307 = vcmp.gt.f32.partialorder %v243, 0.0
  %vm308 = vcmp.gt.f32.partialorder %v244, 0.0
  %vm309 = vcmp.gt.f32.partialorder %v245, 0.0
  %vm310 = vcmp.gt.f32.partialorder %v246, 0.0
  %vm311 = vcmp.gt.f32.partialorder %v247, 0.0
  %vm312 = vcmp.gt.f32.partialorder %v248, 0.0
  %vm313 = vcmp.gt.f32.partialorder %v249, 0.0
  %vm314 = vcmp.gt.f32.partialorder %v250, 0.0
  %vm315 = vcmp.gt.f32.partialorder %v251, 0.0
  %vm316 = vcmp.gt.f32.partialorder %v252, 0.0
  %vm317 = vcmp.gt.f32.partialorder %v253, 0.0
  %vm318 = vcmp.gt.f32.partialorder %v254, 0.0
  %vm319 = vcmp.gt.f32.partialorder %v255, 0.0
  %vm320 = vcmp.gt.f32.partialorder %v256, 0.0
  %vm321 = vcmp.gt.f32.partialorder %v257, 0.0
  %vm322 = vcmp.gt.f32.partialorder %v258, 0.0
  %vm323 = vcmp.gt.f32.partialorder %v259, 0.0
  %vm324 = vcmp.gt.f32.partialorder %v260, 0.0
  %vm325 = vcmp.gt.f32.partialorder %v261, 0.0
  %vm326 = vcmp.gt.f32.partialorder %v262, 0.0
  %vm327 = vcmp.gt.f32.partialorder %v263, 0.0
  %vm328 = vcmp.gt.f32.partialorder %v264, 0.0
  %vm329 = vcmp.gt.f32.partialorder %v265, 0.0
  %vm330 = vcmp.gt.f32.partialorder %v266, 0.0
  %vm331 = vcmp.gt.f32.partialorder %v267, 0.0
  %vm332 = vcmp.gt.f32.partialorder %v268, 0.0
  %vm333 = vcmp.gt.f32.partialorder %v269, 0.0
  %vm334 = vcmp.gt.f32.partialorder %v270, 0.0
  %vm335 = vcmp.gt.f32.partialorder %v271, 0.0
  %vm336 = vcmp.gt.f32.partialorder %v272, 0.0
  %vm337 = vcmp.gt.f32.partialorder %v273, 0.0
  %vm338 = vcmp.gt.f32.partialorder %v274, 0.0
  %vm339 = vcmp.gt.f32.partialorder %v275, 0.0
  %vm340 = vcmp.gt.f32.partialorder %v276, 0.0
  %vm341 = vcmp.gt.f32.partialorder %v277, 0.0
  %vm342 = vcmp.gt.f32.partialorder %v278, 0.0
  %vm343 = vcmp.gt.f32.partialorder %v279, 0.0
  %vm344 = vcmp.gt.f32.partialorder %v280, 0.0
  %vm345 = vcmp.gt.f32.partialorder %v281, 0.0
  %vm346 = vcmp.gt.f32.partialorder %v282, 0.0
  %vm347 = vcmp.gt.f32.partialorder %v283, 0.0
  %v348 = vmul.f32 %v220, 0.2
  %v349 = vmul.f32 %v221, 0.2
  %v350 = vmul.f32 %v222, 0.2
  %v351 = vmul.f32 %v223, 0.2
  %v352 = vmul.f32 %v224, 0.2
  %v353 = vmul.f32 %v225, 0.2
  %v354 = vmul.f32 %v226, 0.2
  %v355 = vmul.f32 %v227, 0.2
  %v356 = vmul.f32 %v228, 0.2
  %v357 = vmul.f32 %v229, 0.2
  %v358 = vmul.f32 %v230, 0.2
  %v359 = vmul.f32 %v231, 0.2
  %v360 = vmul.f32 %v232, 0.2
  %v361 = vmul.f32 %v233, 0.2
  %v362 = vmul.f32 %v234, 0.2
  %v363 = vmul.f32 %v235, 0.2
  %v364 = vmul.f32 %v236, 0.2
  %v365 = vmul.f32 %v237, 0.2
  %v366 = vmul.f32 %v238, 0.2
  %v367 = vmul.f32 %v239, 0.2
  %v368 = vmul.f32 %v240, 0.2
  %v369 = vmul.f32 %v241, 0.2
  %v370 = vmul.f32 %v242, 0.2
  %v371 = vmul.f32 %v243, 0.2
  %v372 = vmul.f32 %v244, 0.2
  %v373 = vmul.f32 %v245, 0.2
  %v374 = vmul.f32 %v246, 0.2
  %v375 = vmul.f32 %v247, 0.2
  %v376 = vmul.f32 %v248, 0.2
  %v377 = vmul.f32 %v249, 0.2
  %v378 = vmul.f32 %v250, 0.2
  %v379 = vmul.f32 %v251, 0.2
  %v380 = vmul.f32 %v252, 0.2
  %v381 = vmul.f32 %v253, 0.2
  %v382 = vmul.f32 %v254, 0.2
  %v383 = vmul.f32 %v255, 0.2
  %v384 = vmul.f32 %v256, 0.2
  %v385 = vmul.f32 %v257, 0.2
  %v386 = vmul.f32 %v258, 0.2
  %v387 = vmul.f32 %v259, 0.2
  %v388 = vmul.f32 %v260, 0.2
  %v389 = vmul.f32 %v261, 0.2
  %v390 = vmul.f32 %v262, 0.2
  %v391 = vmul.f32 %v263, 0.2
  %v392 = vmul.f32 %v264, 0.2
  %v393 = vmul.f32 %v265, 0.2
  %v394 = vmul.f32 %v266, 0.2
  %v395 = vmul.f32 %v267, 0.2
  %v396 = vmul.f32 %v268, 0.2
  %v397 = vmul.f32 %v269, 0.2
  %v398 = vmul.f32 %v270, 0.2
  %v399 = vmul.f32 %v271, 0.2
  %v400 = vmul.f32 %v272, 0.2
  %v401 = vmul.f32 %v273, 0.2
  %v402 = vmul.f32 %v274, 0.2
  %v403 = vmul.f32 %v275, 0.2
  %v404 = vmul.f32 %v276, 0.2
  %v405 = vmul.f32 %v277, 0.2
  %v406 = vmul.f32 %v278, 0.2
  %v407 = vmul.f32 %v279, 0.2
  %v408 = vmul.f32 %v280, 0.2
  %v409 = vmul.f32 %v281, 0.2
  %v410 = vmul.f32 %v282, 0.2
  %v411 = vmul.f32 %v283, 0.2
  %v412 = vsel %vm284, %v220, %v348
  %v413 = vsel %vm285, %v221, %v349
  %v414 = vsel %vm286, %v222, %v350
  %v415 = vsel %vm287, %v223, %v351
  %v416 = vsel %vm288, %v224, %v352
  %v417 = vsel %vm289, %v225, %v353
  %v418 = vsel %vm290, %v226, %v354
  %v419 = vsel %vm291, %v227, %v355
  %v420 = vsel %vm292, %v228, %v356
  %v421 = vsel %vm293, %v229, %v357
  %v422 = vsel %vm294, %v230, %v358
  %v423 = vsel %vm295, %v231, %v359
  %v424 = vsel %vm296, %v232, %v360
  %v425 = vsel %vm297, %v233, %v361
  %v426 = vsel %vm298, %v234, %v362
  %v427 = vsel %vm299, %v235, %v363
  %v428 = vsel %vm300, %v236, %v364
  %v429 = vsel %vm301, %v237, %v365
  %v430 = vsel %vm302, %v238, %v366
  %v431 = vsel %vm303, %v239, %v367
  %v432 = vsel %vm304, %v240, %v368
  %v433 = vsel %vm305, %v241, %v369
  %v434 = vsel %vm306, %v242, %v370
  %v435 = vsel %vm307, %v243, %v371
  %v436 = vsel %vm308, %v244, %v372
  %v437 = vsel %vm309, %v245, %v373
  %v438 = vsel %vm310, %v246, %v374
  %v439 = vsel %vm311, %v247, %v375
  %v440 = vsel %vm312, %v248, %v376
  %v441 = vsel %vm313, %v249, %v377
  %v442 = vsel %vm314, %v250, %v378
  %v443 = vsel %vm315, %v251, %v379
  %v444 = vsel %vm316, %v252, %v380
  %v445 = vsel %vm317, %v253, %v381
  %v446 = vsel %vm318, %v254, %v382
  %v447 = vsel %vm319, %v255, %v383
  %v448 = vsel %vm320, %v256, %v384
  %v449 = vsel %vm321, %v257, %v385
  %v450 = vsel %vm322, %v258, %v386
  %v451 = vsel %vm323, %v259, %v387
  %v452 = vsel %vm324, %v260, %v388
  %v453 = vsel %vm325, %v261, %v389
  %v454 = vsel %vm326, %v262, %v390
  %v455 = vsel %vm327, %v263, %v391
  %v456 = vsel %vm328, %v264, %v392
  %v457 = vsel %vm329, %v265, %v393
  %v458 = vsel %vm330, %v266, %v394
  %v459 = vsel %vm331, %v267, %v395
  %v460 = vsel %vm332, %v268, %v396
  %v461 = vsel %vm333, %v269, %v397
  %v462 = vsel %vm334, %v270, %v398
  %v463 = vsel %vm335, %v271, %v399
  %v464 = vsel %vm336, %v272, %v400
  %v465 = vsel %vm337, %v273, %v401
  %v466 = vsel %vm338, %v274, %v402
  %v467 = vsel %vm339, %v275, %v403
  %v468 = vsel %vm340, %v276, %v404
  %v469 = vsel %vm341, %v277, %v405
  %v470 = vsel %vm342, %v278, %v406
  %v471 = vsel %vm343, %v279, %v407
  %v472 = vsel %vm344, %v280, %v408
  %v473 = vsel %vm345, %v281, %v409
  %v474 = vsel %vm346, %v282, %v410
  %v475 = vsel %vm347, %v283, %v411
  %v476 = vpack.c.bf16 %v413, %v412
  %v477 = vpack.c.bf16 %v415, %v414
  %v478 = vpack.c.bf16 %v417, %v416
  %v479 = vpack.c.bf16 %v419, %v418
  %v480 = vpack.c.bf16 %v421, %v420
  %v481 = vpack.c.bf16 %v423, %v422
  %v482 = vpack.c.bf16 %v425, %v424
  %v483 = vpack.c.bf16 %v427, %v426
  %v484 = vpack.c.bf16 %v429, %v428
  %v485 = vpack.c.bf16 %v431, %v430
  %v486 = vpack.c.bf16 %v433, %v432
  %v487 = vpack.c.bf16 %v435, %v434
  %v488 = vpack.c.bf16 %v437, %v436
  %v489 = vpack.c.bf16 %v439, %v438
  %v490 = vpack.c.bf16 %v441, %v440
  %v491 = vpack.c.bf16 %v443, %v442
  %v492 = vpack.c.bf16 %v445, %v444
  %v493 = vpack.c.bf16 %v447, %v446
  %v494 = vpack.c.bf16 %v449, %v448
  %v495 = vpack.c.bf16 %v451, %v450
  %v496 = vpack.c.bf16 %v453, %v452
  %v497 = vpack.c.bf16 %v455, %v454
  %v498 = vpack.c.bf16 %v457, %v456
  %v499 = vpack.c.bf16 %v459, %v458
  %v500 = vpack.c.bf16 %v461, %v460
  %v501 = vpack.c.bf16 %v463, %v462
  %v502 = vpack.c.bf16 %v465, %v464
  %v503 = vpack.c.bf16 %v467, %v466
  %v504 = vpack.c.bf16 %v469, %v468
  %v505 = vpack.c.bf16 %v471, %v470
  %v506 = vpack.c.bf16 %v473, %v472
  %v507 = vpack.c.bf16 %v475, %v474
  %v540 = vunpack.c.l.b16 %v476
  %v541 = vunpack.c.h.b16 %v476
  %v542 = vunpack.c.l.b16 %v477
  %v543 = vunpack.c.h.b16 %v477
  %v544 = vunpack.c.l.b16 %v478
  %v545 = vunpack.c.h.b16 %v478
  %v546 = vunpack.c.l.b16 %v479
  %v547 = vunpack.c.h.b16 %v479
  %v548 = vunpack.c.l.b16 %v480
  %v549 = vunpack.c.h.b16 %v480
  %v550 = vunpack.c.l.b16 %v481
  %v551 = vunpack.c.h.b16 %v481
  %v552 = vunpack.c.l.b16 %v482
  %v553 = vunpack.c.h.b16 %v482
  %v554 = vunpack.c.l.b16 %v483
  %v555 = vunpack.c.h.b16 %v483
  %v556 = vunpack.c.l.b16 %v484
  %v557 = vunpack.c.h.b16 %v484
  %v558 = vunpack.c.l.b16 %v485
  %v559 = vunpack.c.h.b16 %v485
  %v560 = vunpack.c.l.b16 %v486
  %v561 = vunpack.c.h.b16 %v486
  %v562 = vunpack.c.l.b16 %v487
  %v563 = vunpack.c.h.b16 %v487
  %v564 = vunpack.c.l.b16 %v488
  %v565 = vunpack.c.h.b16 %v488
  %v566 = vunpack.c.l.b16 %v489
  %v567 = vunpack.c.h.b16 %v489
  %v568 = vunpack.c.l.b16 %v490
  %v569 = vunpack.c.h.b16 %v490
  %v570 = vunpack.c.l.b16 %v491
  %v571 = vunpack.c.h.b16 %v491
  %v572 = vunpack.c.l.b16 %v492
  %v573 = vunpack.c.h.b16 %v492
  %v574 = vunpack.c.l.b16 %v493
  %v575 = vunpack.c.h.b16 %v493
  %v576 = vunpack.c.l.b16 %v494
  %v577 = vunpack.c.h.b16 %v494
  %v578 = vunpack.c.l.b16 %v495
  %v579 = vunpack.c.h.b16 %v495
  %v580 = vunpack.c.l.b16 %v496
  %v581 = vunpack.c.h.b16 %v496
  %v582 = vunpack.c.l.b16 %v497
  %v583 = vunpack.c.h.b16 %v497
  %v584 = vunpack.c.l.b16 %v498
  %v585 = vunpack.c.h.b16 %v498
  %v586 = vunpack.c.l.b16 %v499
  %v587 = vunpack.c.h.b16 %v499
  %v588 = vunpack.c.l.b16 %v500
  %v589 = vunpack.c.h.b16 %v500
  %v590 = vunpack.c.l.b16 %v501
  %v591 = vunpack.c.h.b16 %v501
  %v592 = vunpack.c.l.b16 %v502
  %v593 = vunpack.c.h.b16 %v502
  %v594 = vunpack.c.l.b16 %v503
  %v595 = vunpack.c.h.b16 %v503
  %v596 = vunpack.c.l.b16 %v504
  %v597 = vunpack.c.h.b16 %v504
  %v598 = vunpack.c.l.b16 %v505
  %v599 = vunpack.c.h.b16 %v505
  %v600 = vunpack.c.l.b16 %v506
  %v601 = vunpack.c.h.b16 %v506
  %v602 = vunpack.c.l.b16 %v507
  %v603 = vunpack.c.h.b16 %v507
  %v604 = vpack.c.b16 %v540, %v540
  %v605 = vpack.c.b16 %v541, %v541
  %v606 = vpack.c.b16 %v542, %v542
  %v607 = vpack.c.b16 %v543, %v543
  %v608 = vpack.c.b16 %v544, %v544
  %v609 = vpack.c.b16 %v545, %v545
  %v610 = vpack.c.b16 %v546, %v546
  %v611 = vpack.c.b16 %v547, %v547
  %v612 = vpack.c.b16 %v548, %v548
  %v613 = vpack.c.b16 %v549, %v549
  %v614 = vpack.c.b16 %v550, %v550
  %v615 = vpack.c.b16 %v551, %v551
  %v616 = vpack.c.b16 %v552, %v552
  %v617 = vpack.c.b16 %v553, %v553
  %v618 = vpack.c.b16 %v554, %v554
  %v619 = vpack.c.b16 %v555, %v555
  %v620 = vpack.c.b16 %v556, %v556
  %v621 = vpack.c.b16 %v557, %v557
  %v622 = vpack.c.b16 %v558, %v558
  %v623 = vpack.c.b16 %v559, %v559
  %v624 = vpack.c.b16 %v560, %v560
  %v625 = vpack.c.b16 %v561, %v561
  %v626 = vpack.c.b16 %v562, %v562
  %v627 = vpack.c.b16 %v563, %v563
  %v628 = vpack.c.b16 %v564, %v564
  %v629 = vpack.c.b16 %v565, %v565
  %v630 = vpack.c.b16 %v566, %v566
  %v631 = vpack.c.b16 %v567, %v567
  %v632 = vpack.c.b16 %v568, %v568
  %v633 = vpack.c.b16 %v569, %v569
  %v634 = vpack.c.b16 %v570, %v570
  %v635 = vpack.c.b16 %v571, %v571
  %v636 = vpack.c.b16 %v572, %v572
  %v637 = vpack.c.b16 %v573, %v573
  %v638 = vpack.c.b16 %v574, %v574
  %v639 = vpack.c.b16 %v575, %v575
  %v640 = vpack.c.b16 %v576, %v576
  %v641 = vpack.c.b16 %v577, %v577
  %v642 = vpack.c.b16 %v578, %v578
  %v643 = vpack.c.b16 %v579, %v579
  %v644 = vpack.c.b16 %v580, %v580
  %v645 = vpack.c.b16 %v581, %v581
  %v646 = vpack.c.b16 %v582, %v582
  %v647 = vpack.c.b16 %v583, %v583
  %v648 = vpack.c.b16 %v584, %v584
  %v649 = vpack.c.b16 %v585, %v585
  %v650 = vpack.c.b16 %v586, %v586
  %v651 = vpack.c.b16 %v587, %v587
  %v652 = vpack.c.b16 %v588, %v588
  %v653 = vpack.c.b16 %v589, %v589
  %v654 = vpack.c.b16 %v590, %v590
  %v655 = vpack.c.b16 %v591, %v591
  %v656 = vpack.c.b16 %v592, %v592
  %v657 = vpack.c.b16 %v593, %v593
  %v658 = vpack.c.b16 %v594, %v594
  %v659 = vpack.c.b16 %v595, %v595
  %v660 = vpack.c.b16 %v596, %v596
  %v661 = vpack.c.b16 %v597, %v597
  %v662 = vpack.c.b16 %v598, %v598
  %v663 = vpack.c.b16 %v599, %v599
  %v664 = vpack.c.b16 %v600, %v600
  %v665 = vpack.c.b16 %v601, %v601
  %v666 = vpack.c.b16 %v602, %v602
  %v667 = vpack.c.b16 %v603, %v603
  %732 = vst [vmem:[%s3] sm:$0xf] %v604
  %733 = vst [vmem:[%s3 + $0x4] sm:$0xf] %v605
  %734 = vst [vmem:[%s3 + $0x8] sm:$0xf] %v606
  %735 = vst [vmem:[%s3 + $0xc] sm:$0xf] %v607
  %736 = vst [vmem:[%s3 + $0x10] sm:$0xf] %v608
  %737 = vst [vmem:[%s3 + $0x14] sm:$0xf] %v609
  %738 = vst [vmem:[%s3 + $0x18] sm:$0xf] %v610
  %739 = vst [vmem:[%s3 + $0x1c] sm:$0xf] %v611
  %740 = vst [vmem:[%s3 + $0x20] sm:$0xf] %v612
  %741 = vst [vmem:[%s3 + $0x24] sm:$0xf] %v613
  %742 = vst [vmem:[%s3 + $0x28] sm:$0xf] %v614
  %743 = vst [vmem:[%s3 + $0x2c] sm:$0xf] %v615
  %744 = vst [vmem:[%s3 + $0x30] sm:$0xf] %v616
  %745 = vst [vmem:[%s3 + $0x34] sm:$0xf] %v617
  %746 = vst [vmem:[%s3 + $0x38] sm:$0xf] %v618
  %747 = vst [vmem:[%s3 + $0x3c] sm:$0xf] %v619
  %748 = vst [vmem:[%s3 + $0x40] sm:$0xf] %v620
  %749 = vst [vmem:[%s3 + $0x44] sm:$0xf] %v621
  %750 = vst [vmem:[%s3 + $0x48] sm:$0xf] %v622
  %751 = vst [vmem:[%s3 + $0x4c] sm:$0xf] %v623
  %752 = vst [vmem:[%s3 + $0x50] sm:$0xf] %v624
  %753 = vst [vmem:[%s3 + $0x54] sm:$0xf] %v625
  %754 = vst [vmem:[%s3 + $0x58] sm:$0xf] %v626
  %755 = vst [vmem:[%s3 + $0x5c] sm:$0xf] %v627
  %756 = vst [vmem:[%s3 + $0x60] sm:$0xf] %v628
  %757 = vst [vmem:[%s3 + $0x64] sm:$0xf] %v629
  %758 = vst [vmem:[%s3 + $0x68] sm:$0xf] %v630
  %759 = vst [vmem:[%s3 + $0x6c] sm:$0xf] %v631
  %760 = vst [vmem:[%s3 + $0x70] sm:$0xf] %v632
  %761 = vst [vmem:[%s3 + $0x74] sm:$0xf] %v633
  %762 = vst [vmem:[%s3 + $0x78] sm:$0xf] %v634
  %763 = vst [vmem:[%s3 + $0x7c] sm:$0xf] %v635
  %764 = vst [vmem:[%s3 + $0x80] sm:$0xf] %v636
  %765 = vst [vmem:[%s3 + $0x84] sm:$0xf] %v637
  %766 = vst [vmem:[%s3 + $0x88] sm:$0xf] %v638
  %767 = vst [vmem:[%s3 + $0x8c] sm:$0xf] %v639
  %768 = vst [vmem:[%s3 + $0x90] sm:$0xf] %v640
  %769 = vst [vmem:[%s3 + $0x94] sm:$0xf] %v641
  %770 = vst [vmem:[%s3 + $0x98] sm:$0xf] %v642
  %771 = vst [vmem:[%s3 + $0x9c] sm:$0xf] %v643
  %772 = vst [vmem:[%s3 + $0xa0] sm:$0xf] %v644
  %773 = vst [vmem:[%s3 + $0xa4] sm:$0xf] %v645
  %774 = vst [vmem:[%s3 + $0xa8] sm:$0xf] %v646
  %775 = vst [vmem:[%s3 + $0xac] sm:$0xf] %v647
  %776 = vst [vmem:[%s3 + $0xb0] sm:$0xf] %v648
  %777 = vst [vmem:[%s3 + $0xb4] sm:$0xf] %v649
  %778 = vst [vmem:[%s3 + $0xb8] sm:$0xf] %v650
  %779 = vst [vmem:[%s3 + $0xbc] sm:$0xf] %v651
  %780 = vst [vmem:[%s3 + $0xc0] sm:$0xf] %v652
  %781 = vst [vmem:[%s3 + $0xc4] sm:$0xf] %v653
  %782 = vst [vmem:[%s3 + $0xc8] sm:$0xf] %v654
  %783 = vst [vmem:[%s3 + $0xcc] sm:$0xf] %v655
  %784 = vst [vmem:[%s3 + $0xd0] sm:$0xf] %v656
  %785 = vst [vmem:[%s3 + $0xd4] sm:$0xf] %v657
  %786 = vst [vmem:[%s3 + $0xd8] sm:$0xf] %v658
  %787 = vst [vmem:[%s3 + $0xdc] sm:$0xf] %v659
  %788 = vst [vmem:[%s3 + $0xe0] sm:$0xf] %v660
  %789 = vst [vmem:[%s3 + $0xe4] sm:$0xf] %v661
  %790 = vst [vmem:[%s3 + $0xe8] sm:$0xf] %v662
  %791 = vst [vmem:[%s3 + $0xec] sm:$0xf] %v663
  %792 = vst [vmem:[%s3 + $0xf0] sm:$0xf] %v664
  %793 = vst [vmem:[%s3 + $0xf4] sm:$0xf] %v665
  %794 = vst [vmem:[%s3 + $0xf8] sm:$0xf] %v666
  %795 = vst [vmem:[%s3 + $0xfc] sm:$0xf] %v667
  // Predicated region
  $region14: #{discriminator_forward.9} parent=0 // pred_check
    _
  $region15: #{discriminator_forward.9} parent=0 // pred_check_branch
    %797 = sbr.rel (0) target = $region17
  $region16: #{discriminator_forward.9} parent=0 // pred_region
    _
  $region17: #{discriminator_forward.9} parent=0 // pred_fallthru
    _
  // Predicated region
  $region18: #{discriminator_forward.9} parent=0 // pred_check
    _
  $region19: #{discriminator_forward.9} parent=0 // pred_check_branch
    %799 = sbr.rel (0) target = $region21
  $region20: #{discriminator_forward.9} parent=0 // pred_region
    _
  $region21: #{discriminator_forward.9} parent=0 // pred_fallthru
    _

// kernel: discriminator_forward.10
$region0: #{discriminator_forward.10}
  #allocation0 [shape = 'u32[]', space=smem, size = 0x4, offset = 0x4, fixed_abs, tag = 'smem constant byte address 0x4 - core index']
  #allocation1 [shape = 'u32[144,128]{1,0:T(1,128)}', space=vmem, size = 0x12000, scoped, tag = 'internal scratch']
  %s0 = inlined_call_operand.vmem [shape: bf16[128,256], index: 0, kind: input, shape index: {}]
  %s1 = inlined_call_operand.vmem [shape: bf16[256,128], index: 1, kind: input, shape index: {}]
  %s2 = inlined_call_operand.vmem [shape: bf16[128,128], index: 2, kind: output, shape index: {0}]
  %s3 = inlined_call_operand.vmem [shape: f32[1,128], index: 3, kind: output, shape index: {1}]
  %s4 = inlined_call_operand.vmem [shape: f32[1,128], index: 4, kind: output, shape index: {2}]
  %5 = xla_tuple %s2, %s3, %s4
  %s6 = sld [smem:[#allocation0]]
  $region38: #{discriminator_forward.10} parent=0
    _
  %s8 = ssub.s32 1, %s6
  %s9 = scalar_select 0, %s8, %s6
  // Predicated region
  $region2: #{discriminator_forward.10} parent=0 // pred_check
    _
  $region3: #{discriminator_forward.10} parent=0 // pred_check_branch
    %11 = sbr.rel (0) target = $region5
  $region4: #{discriminator_forward.10} parent=0 // pred_region
    _
  $region5: #{discriminator_forward.10} parent=0 // pred_fallthru
    _
  // Predicated region
  $region6: #{discriminator_forward.10} parent=0 // pred_check
    _
  $region7: #{discriminator_forward.10} parent=0 // pred_check_branch
    %13 = sbr.rel (0) target = $region9
  $region8: #{discriminator_forward.10} parent=0 // pred_region
    _
  $region9: #{discriminator_forward.10} parent=0 // pred_fallthru
    _
  %p15 = scmp.eq.s32.totalorder 0, 0
  // Predicated region
  $region10: #{discriminator_forward.10} parent=0 // pred_check
    %p16 = pneg %p15
  $region11: #{discriminator_forward.10} parent=0 // pred_check_branch
    %18 = sbr.rel (%p16) target = $region13
  $region12: #{discriminator_forward.10} parent=0 // pred_region
    %19 = vst [vmem:[%s3] sm:$0x1] 0.0
    %20 = vst [vmem:[%s4] sm:$0x1] 0.0
  $region13: #{discriminator_forward.10} parent=0 // pred_fallthru
    _
  %v21 = vld [vmem:[%s0] sm:$0xff]
  %v22 = vld [vmem:[%s0 + $0x8] sm:$0xff]
  %v23 = vld [vmem:[%s0 + $0x10] sm:$0xff]
  %v24 = vld [vmem:[%s0 + $0x18] sm:$0xff]
  %v25 = vld [vmem:[%s0 + $0x20] sm:$0xff]
  %v26 = vld [vmem:[%s0 + $0x28] sm:$0xff]
  %v27 = vld [vmem:[%s0 + $0x30] sm:$0xff]
  %v28 = vld [vmem:[%s0 + $0x38] sm:$0xff]
  %v29 = vld [vmem:[%s0 + $0x40] sm:$0xff]
  %v30 = vld [vmem:[%s0 + $0x48] sm:$0xff]
  %v31 = vld [vmem:[%s0 + $0x50] sm:$0xff]
  %v32 = vld [vmem:[%s0 + $0x58] sm:$0xff]
  %v33 = vld [vmem:[%s0 + $0x60] sm:$0xff]
  %v34 = vld [vmem:[%s0 + $0x68] sm:$0xff]
  %v35 = vld [vmem:[%s0 + $0x70] sm:$0xff]
  %v36 = vld [vmem:[%s0 + $0x78] sm:$0xff]
  %v37 = vld [vmem:[%s1] sm:$0xf]
  %v38 = vld [vmem:[%s1 + $0x4] sm:$0xf]
  %v39 = vld [vmem:[%s1 + $0x8] sm:$0xf]
  %v40 = vld [vmem:[%s1 + $0xc] sm:$0xf]
  %v41 = vld [vmem:[%s1 + $0x10] sm:$0xf]
  %v42 = vld [vmem:[%s1 + $0x14] sm:$0xf]
  %v43 = vld [vmem:[%s1 + $0x18] sm:$0xf]
  %v44 = vld [vmem:[%s1 + $0x1c] sm:$0xf]
  %v45 = vld [vmem:[%s1 + $0x20] sm:$0xf]
  %v46 = vld [vmem:[%s1 + $0x24] sm:$0xf]
  %v47 = vld [vmem:[%s1 + $0x28] sm:$0xf]
  %v48 = vld [vmem:[%s1 + $0x2c] sm:$0xf]
  %v49 = vld [vmem:[%s1 + $0x30] sm:$0xf]
  %v50 = vld [vmem:[%s1 + $0x34] sm:$0xf]
  %v51 = vld [vmem:[%s1 + $0x38] sm:$0xf]
  %v52 = vld [vmem:[%s1 + $0x3c] sm:$0xf]
  %v53 = vld [vmem:[%s1 + $0x40] sm:$0xf]
  %v54 = vld [vmem:[%s1 + $0x44] sm:$0xf]
  %v55 = vld [vmem:[%s1 + $0x48] sm:$0xf]
  %v56 = vld [vmem:[%s1 + $0x4c] sm:$0xf]
  %v57 = vld [vmem:[%s1 + $0x50] sm:$0xf]
  %v58 = vld [vmem:[%s1 + $0x54] sm:$0xf]
  %v59 = vld [vmem:[%s1 + $0x58] sm:$0xf]
  %v60 = vld [vmem:[%s1 + $0x5c] sm:$0xf]
  %v61 = vld [vmem:[%s1 + $0x60] sm:$0xf]
  %v62 = vld [vmem:[%s1 + $0x64] sm:$0xf]
  %v63 = vld [vmem:[%s1 + $0x68] sm:$0xf]
  %v64 = vld [vmem:[%s1 + $0x6c] sm:$0xf]
  %v65 = vld [vmem:[%s1 + $0x70] sm:$0xf]
  %v66 = vld [vmem:[%s1 + $0x74] sm:$0xf]
  %v67 = vld [vmem:[%s1 + $0x78] sm:$0xf]
  %v68 = vld [vmem:[%s1 + $0x7c] sm:$0xf]
  %v85 = vunpack.c.l.b16 %v21
  %v86 = vunpack.c.h.b16 %v21
  %v87 = vunpack.c.l.b16 %v22
  %v88 = vunpack.c.h.b16 %v22
  %v89 = vunpack.c.l.b16 %v23
  %v90 = vunpack.c.h.b16 %v23
  %v91 = vunpack.c.l.b16 %v24
  %v92 = vunpack.c.h.b16 %v24
  %v93 = vunpack.c.l.b16 %v25
  %v94 = vunpack.c.h.b16 %v25
  %v95 = vunpack.c.l.b16 %v26
  %v96 = vunpack.c.h.b16 %v26
  %v97 = vunpack.c.l.b16 %v27
  %v98 = vunpack.c.h.b16 %v27
  %v99 = vunpack.c.l.b16 %v28
  %v100 = vunpack.c.h.b16 %v28
  %v101 = vunpack.c.l.b16 %v29
  %v102 = vunpack.c.h.b16 %v29
  %v103 = vunpack.c.l.b16 %v30
  %v104 = vunpack.c.h.b16 %v30
  %v105 = vunpack.c.l.b16 %v31
  %v106 = vunpack.c.h.b16 %v31
  %v107 = vunpack.c.l.b16 %v32
  %v108 = vunpack.c.h.b16 %v32
  %v109 = vunpack.c.l.b16 %v33
  %v110 = vunpack.c.h.b16 %v33
  %v111 = vunpack.c.l.b16 %v34
  %v112 = vunpack.c.h.b16 %v34
  %v113 = vunpack.c.l.b16 %v35
  %v114 = vunpack.c.h.b16 %v35
  %v115 = vunpack.c.l.b16 %v36
  %v116 = vunpack.c.h.b16 %v36
  %v117 = vpack.c.b16 %v87, %v85
  %v118 = vpack.c.b16 %v88, %v86
  %v119 = vpack.c.b16 %v91, %v89
  %v120 = vpack.c.b16 %v92, %v90
  %v121 = vpack.c.b16 %v95, %v93
  %v122 = vpack.c.b16 %v96, %v94
  %v123 = vpack.c.b16 %v99, %v97
  %v124 = vpack.c.b16 %v100, %v98
  %v125 = vpack.c.b16 %v103, %v101
  %v126 = vpack.c.b16 %v104, %v102
  %v127 = vpack.c.b16 %v107, %v105
  %v128 = vpack.c.b16 %v108, %v106
  %v129 = vpack.c.b16 %v111, %v109
  %v130 = vpack.c.b16 %v112, %v110
  %v131 = vpack.c.b16 %v115, %v113
  %v132 = vpack.c.b16 %v116, %v114
  %v181 = vunpack.c.l.b16 %v37
  %v182 = vunpack.c.l.b16 %v38
  %v183 = vunpack.c.l.b16 %v39
  %v184 = vunpack.c.l.b16 %v40
  %v185 = vunpack.c.l.b16 %v41
  %v186 = vunpack.c.l.b16 %v42
  %v187 = vunpack.c.l.b16 %v43
  %v188 = vunpack.c.l.b16 %v44
  %v189 = vunpack.c.l.b16 %v45
  %v190 = vunpack.c.l.b16 %v46
  %v191 = vunpack.c.l.b16 %v47
  %v192 = vunpack.c.l.b16 %v48
  %v193 = vunpack.c.l.b16 %v49
  %v194 = vunpack.c.l.b16 %v50
  %v195 = vunpack.c.l.b16 %v51
  %v196 = vunpack.c.l.b16 %v52
  %v197 = vunpack.c.l.b16 %v53
  %v198 = vunpack.c.l.b16 %v54
  %v199 = vunpack.c.l.b16 %v55
  %v200 = vunpack.c.l.b16 %v56
  %v201 = vunpack.c.l.b16 %v57
  %v202 = vunpack.c.l.b16 %v58
  %v203 = vunpack.c.l.b16 %v59
  %v204 = vunpack.c.l.b16 %v60
  %v205 = vunpack.c.l.b16 %v61
  %v206 = vunpack.c.l.b16 %v62
  %v207 = vunpack.c.l.b16 %v63
  %v208 = vunpack.c.l.b16 %v64
  %v209 = vunpack.c.l.b16 %v65
  %v210 = vunpack.c.l.b16 %v66
  %v211 = vunpack.c.l.b16 %v67
  %v212 = vunpack.c.l.b16 %v68
  %v213 = vpack.c.b16 %v182, %v181
  %v214 = vpack.c.b16 %v184, %v183
  %v215 = vpack.c.b16 %v186, %v185
  %v216 = vpack.c.b16 %v188, %v187
  %v217 = vpack.c.b16 %v190, %v189
  %v218 = vpack.c.b16 %v192, %v191
  %v219 = vpack.c.b16 %v194, %v193
  %v220 = vpack.c.b16 %v196, %v195
  %v221 = vpack.c.b16 %v198, %v197
  %v222 = vpack.c.b16 %v200, %v199
  %v223 = vpack.c.b16 %v202, %v201
  %v224 = vpack.c.b16 %v204, %v203
  %v225 = vpack.c.b16 %v206, %v205
  %v226 = vpack.c.b16 %v208, %v207
  %v227 = vpack.c.b16 %v210, %v209
  %v228 = vpack.c.b16 %v212, %v211
  %245 = vmatprep.subr.bf16.mxu0 0
  %246 = vmatpush1.bf16.msra.mxu0 %v213
  %247 = vmatprep.subr.bf16.mxu0 0
  %248 = vmatpush1.bf16.msra.mxu0 %v214
  %249 = vmatprep.subr.bf16.mxu0 0
  %250 = vmatpush1.bf16.msra.mxu0 %v215
  %251 = vmatprep.subr.bf16.mxu0 0
  %252 = vmatpush1.bf16.msra.mxu0 %v216
  %253 = vmatprep.subr.bf16.mxu0 0
  %254 = vmatpush1.bf16.msra.mxu0 %v217
  %255 = vmatprep.subr.bf16.mxu0 0
  %256 = vmatpush1.bf16.msra.mxu0 %v218
  %257 = vmatprep.subr.bf16.mxu0 0
  %258 = vmatpush1.bf16.msra.mxu0 %v219
  %259 = vmatprep.subr.bf16.mxu0 0
  %260 = vmatpush1.bf16.msra.mxu0 %v220
  %261 = vmatprep.subr.bf16.mxu0 0
  %262 = vmatpush1.bf16.msra.mxu0 %v221
  %263 = vmatprep.subr.bf16.mxu0 0
  %264 = vmatpush1.bf16.msra.mxu0 %v222
  %265 = vmatprep.subr.bf16.mxu0 0
  %266 = vmatpush1.bf16.msra.mxu0 %v223
  %267 = vmatprep.subr.bf16.mxu0 0
  %268 = vmatpush1.bf16.msra.mxu0 %v224
  %269 = vmatprep.subr.bf16.mxu0 0
  %270 = vmatpush1.bf16.msra.mxu0 %v225
  %271 = vmatprep.subr.bf16.mxu0 0
  %272 = vmatpush1.bf16.msra.mxu0 %v226
  %273 = vmatprep.subr.bf16.mxu0 0
  %274 = vmatpush1.bf16.msra.mxu0 %v227
  %275 = vmatprep.subr.bf16.mxu0 0
  %276 = vmatpush1.bf16.msra.mxu0 %v228
  %277 = vmatprep.mubr.bf16.mxu0 %v118
  %278 = vmatmul.mubr.bf16.gmra.mrb[0].mxu0 %v117
  %v279 = vpop.f32.mrb[0].mxu0
  %v280 = vadd.f32 0.0, %v279
  %v281 = vpop.f32.mrb[0].mxu0
  %v282 = vpop.f32.mrb[0].mxu0
  %v283 = vadd.f32 0.0, %v282
  %v284 = vpop.f32.mrb[0].mxu0
  %285 = vmatprep.mubr.bf16.mxu0 %v120
  %286 = vmatmul.mubr.bf16.gmra.mrb[0].mxu0 %v119
  %v287 = vpop.f32.mrb[0].mxu0
  %v288 = vadd.f32 0.0, %v287
  %v289 = vpop.f32.mrb[0].mxu0
  %v290 = vpop.f32.mrb[0].mxu0
  %v291 = vadd.f32 0.0, %v290
  %v292 = vpop.f32.mrb[0].mxu0
  %293 = vmatprep.mubr.bf16.mxu0 %v122
  %294 = vmatmul.mubr.bf16.gmra.mrb[0].mxu0 %v121
  %v295 = vpop.f32.mrb[0].mxu0
  %v296 = vadd.f32 0.0, %v295
  %v297 = vpop.f32.mrb[0].mxu0
  %v298 = vpop.f32.mrb[0].mxu0
  %v299 = vadd.f32 0.0, %v298
  %v300 = vpop.f32.mrb[0].mxu0
  %301 = vmatprep.mubr.bf16.mxu0 %v124
  %302 = vmatmul.mubr.bf16.gmra.mrb[0].mxu0 %v123
  %v303 = vpop.f32.mrb[0].mxu0
  %v304 = vadd.f32 0.0, %v303
  %v305 = vpop.f32.mrb[0].mxu0
  %v306 = vpop.f32.mrb[0].mxu0
  %v307 = vadd.f32 0.0, %v306
  %v308 = vpop.f32.mrb[0].mxu0
  %309 = vmatprep.mubr.bf16.mxu0 %v126
  %310 = vmatmul.mubr.bf16.gmra.mrb[0].mxu0 %v125
  %v311 = vpop.f32.mrb[0].mxu0
  %v312 = vadd.f32 0.0, %v311
  %v313 = vpop.f32.mrb[0].mxu0
  %v314 = vpop.f32.mrb[0].mxu0
  %v315 = vadd.f32 0.0, %v314
  %v316 = vpop.f32.mrb[0].mxu0
  %317 = vmatprep.mubr.bf16.mxu0 %v128
  %318 = vmatmul.mubr.bf16.gmra.mrb[0].mxu0 %v127
  %v319 = vpop.f32.mrb[0].mxu0
  %v320 = vadd.f32 0.0, %v319
  %v321 = vpop.f32.mrb[0].mxu0
  %v322 = vpop.f32.mrb[0].mxu0
  %v323 = vadd.f32 0.0, %v322
  %v324 = vpop.f32.mrb[0].mxu0
  %325 = vmatprep.mubr.bf16.mxu0 %v130
  %326 = vmatmul.mubr.bf16.gmra.mrb[0].mxu0 %v129
  %v327 = vpop.f32.mrb[0].mxu0
  %v328 = vadd.f32 0.0, %v327
  %v329 = vpop.f32.mrb[0].mxu0
  %v330 = vpop.f32.mrb[0].mxu0
  %v331 = vadd.f32 0.0, %v330
  %v332 = vpop.f32.mrb[0].mxu0
  %333 = vmatprep.mubr.bf16.mxu0 %v132
  %334 = vmatmul.mubr.bf16.gmra.mrb[0].mxu0 %v131
  %v335 = vpop.f32.mrb[0].mxu0
  %v336 = vadd.f32 0.0, %v335
  %v337 = vpop.f32.mrb[0].mxu0
  %v338 = vpop.f32.mrb[0].mxu0
  %v339 = vadd.f32 0.0, %v338
  %v340 = vpop.f32.mrb[0].mxu0
  %341 = vdwg.mxu0
  %v342 = vld [vmem:[%s3] sm:$0x1]
  %v343 = vadd.f32 %v280, %v283
  %v344 = vadd.f32 %v343, %v288
  %v345 = vadd.f32 %v344, %v291
  %v346 = vadd.f32 %v345, %v296
  %v347 = vadd.f32 %v346, %v299
  %v348 = vadd.f32 %v347, %v304
  %v349 = vadd.f32 %v348, %v307
  %v350 = vadd.f32 %v349, %v312
  %v351 = vadd.f32 %v350, %v315
  %v352 = vadd.f32 %v351, %v320
  %v353 = vadd.f32 %v352, %v323
  %v354 = vadd.f32 %v353, %v328
  %v355 = vadd.f32 %v354, %v331
  %v356 = vadd.f32 %v355, %v336
  %v357 = vadd.f32 %v356, %v339
  %v358 = vrot.slane %v357, 4
  %v359 = vadd.f32 %v357, %v358
  %v360 = vrot.slane %v359, 2
  %v361 = vadd.f32 %v359, %v360
  %v362 = vrot.slane %v361, 1
  %v363 = vadd.f32 %v361, %v362
  %v364 = vadd.f32 %v342, %v363
  %365 = vst [vmem:[%s3] sm:$0x1] %v364
  %v366 = vld [vmem:[%s4] sm:$0x1]
  %v367 = vmul.f32 %v280, %v280
  %v368 = vmul.f32 %v283, %v283
  %v369 = vmul.f32 %v288, %v288
  %v370 = vmul.f32 %v291, %v291
  %v371 = vmul.f32 %v296, %v296
  %v372 = vmul.f32 %v299, %v299
  %v373 = vmul.f32 %v304, %v304
  %v374 = vmul.f32 %v307, %v307
  %v375 = vmul.f32 %v312, %v312
  %v376 = vmul.f32 %v315, %v315
  %v377 = vmul.f32 %v320, %v320
  %v378 = vmul.f32 %v323, %v323
  %v379 = vmul.f32 %v328, %v328
  %v380 = vmul.f32 %v331, %v331
  %v381 = vmul.f32 %v336, %v336
  %v382 = vmul.f32 %v339, %v339
  %v383 = vadd.f32 %v367, %v368
  %v384 = vadd.f32 %v383, %v369
  %v385 = vadd.f32 %v384, %v370
  %v386 = vadd.f32 %v385, %v371
  %v387 = vadd.f32 %v386, %v372
  %v388 = vadd.f32 %v387, %v373
  %v389 = vadd.f32 %v388, %v374
  %v390 = vadd.f32 %v389, %v375
  %v391 = vadd.f32 %v390, %v376
  %v392 = vadd.f32 %v391, %v377
  %v393 = vadd.f32 %v392, %v378
  %v394 = vadd.f32 %v393, %v379
  %v395 = vadd.f32 %v394, %v380
  %v396 = vadd.f32 %v395, %v381
  %v397 = vadd.f32 %v396, %v382
  %v398 = vrot.slane %v397, 4
  %v399 = vadd.f32 %v397, %v398
  %v400 = vrot.slane %v399, 2
  %v401 = vadd.f32 %v399, %v400
  %v402 = vrot.slane %v401, 1
  %v403 = vadd.f32 %v401, %v402
  %v404 = vadd.f32 %v366, %v403
  %405 = vst [vmem:[%s4] sm:$0x1] %v404
  %v406 = vpack.c.bf16 %v283, %v280
  %v407 = vpack.c.bf16 %v291, %v288
  %v408 = vpack.c.bf16 %v299, %v296
  %v409 = vpack.c.bf16 %v307, %v304
  %v410 = vpack.c.bf16 %v315, %v312
  %v411 = vpack.c.bf16 %v323, %v320
  %v412 = vpack.c.bf16 %v331, %v328
  %v413 = vpack.c.bf16 %v339, %v336
  %v422 = vunpack.c.l.b16 %v406
  %v423 = vunpack.c.h.b16 %v406
  %v424 = vunpack.c.l.b16 %v407
  %v425 = vunpack.c.h.b16 %v407
  %v426 = vunpack.c.l.b16 %v408
  %v427 = vunpack.c.h.b16 %v408
  %v428 = vunpack.c.l.b16 %v409
  %v429 = vunpack.c.h.b16 %v409
  %v430 = vunpack.c.l.b16 %v410
  %v431 = vunpack.c.h.b16 %v410
  %v432 = vunpack.c.l.b16 %v411
  %v433 = vunpack.c.h.b16 %v411
  %v434 = vunpack.c.l.b16 %v412
  %v435 = vunpack.c.h.b16 %v412
  %v436 = vunpack.c.l.b16 %v413
  %v437 = vunpack.c.h.b16 %v413
  %v438 = vpack.c.b16 %v422, %v422
  %v439 = vpack.c.b16 %v423, %v423
  %v440 = vpack.c.b16 %v424, %v424
  %v441 = vpack.c.b16 %v425, %v425
  %v442 = vpack.c.b16 %v426, %v426
  %v443 = vpack.c.b16 %v427, %v427
  %v444 = vpack.c.b16 %v428, %v428
  %v445 = vpack.c.b16 %v429, %v429
  %v446 = vpack.c.b16 %v430, %v430
  %v447 = vpack.c.b16 %v431, %v431
  %v448 = vpack.c.b16 %v432, %v432
  %v449 = vpack.c.b16 %v433, %v433
  %v450 = vpack.c.b16 %v434, %v434
  %v451 = vpack.c.b16 %v435, %v435
  %v452 = vpack.c.b16 %v436, %v436
  %v453 = vpack.c.b16 %v437, %v437
  %470 = vst [vmem:[%s2] sm:$0xf] %v438
  %471 = vst [vmem:[%s2 + $0x4] sm:$0xf] %v439
  %472 = vst [vmem:[%s2 + $0x8] sm:$0xf] %v440
  %473 = vst [vmem:[%s2 + $0xc] sm:$0xf] %v441
  %474 = vst [vmem:[%s2 + $0x10] sm:$0xf] %v442
  %475 = vst [vmem:[%s2 + $0x14] sm:$0xf] %v443
  %476 = vst [vmem:[%s2 + $0x18] sm:$0xf] %v444
  %477 = vst [vmem:[%s2 + $0x1c] sm:$0xf] %v445
  %478 = vst [vmem:[%s2 + $0x20] sm:$0xf] %v446
  %479 = vst [vmem:[%s2 + $0x24] sm:$0xf] %v447
  %480 = vst [vmem:[%s2 + $0x28] sm:$0xf] %v448
  %481 = vst [vmem:[%s2 + $0x2c] sm:$0xf] %v449
  %482 = vst [vmem:[%s2 + $0x30] sm:$0xf] %v450
  %483 = vst [vmem:[%s2 + $0x34] sm:$0xf] %v451
  %484 = vst [vmem:[%s2 + $0x38] sm:$0xf] %v452
  %485 = vst [vmem:[%s2 + $0x3c] sm:$0xf] %v453
  // Predicated region
  $region14: #{discriminator_forward.10} parent=0 // pred_check
    _
  $region15: #{discriminator_forward.10} parent=0 // pred_check_branch
    %487 = sbr.rel (0) target = $region17
  $region16: #{discriminator_forward.10} parent=0 // pred_region
    _
  $region17: #{discriminator_forward.10} parent=0 // pred_fallthru
    _
  // Predicated region
  $region18: #{discriminator_forward.10} parent=0 // pred_check
    _
  $region19: #{discriminator_forward.10} parent=0 // pred_check_branch
    %489 = sbr.rel (0) target = $region21
  $region20: #{discriminator_forward.10} parent=0 // pred_region
    _
  $region21: #{discriminator_forward.10} parent=0 // pred_fallthru
    _
  // Predicated region
  $region22: #{discriminator_forward.10} parent=0 // pred_check
    _
  $region23: #{discriminator_forward.10} parent=0 // pred_check_branch
    %491 = sbr.rel (0) target = $region25
  $region24: #{discriminator_forward.10} parent=0 // pred_region
    _
  $region25: #{discriminator_forward.10} parent=0 // pred_fallthru
    _
  // Predicated region
  $region26: #{discriminator_forward.10} parent=0 // pred_check
    _
  $region27: #{discriminator_forward.10} parent=0 // pred_check_branch
    %493 = sbr.rel (0) target = $region29
  $region28: #{discriminator_forward.10} parent=0 // pred_region
    _
  $region29: #{discriminator_forward.10} parent=0 // pred_fallthru
    _
  // Predicated region
  $region30: #{discriminator_forward.10} parent=0 // pred_check
    _
  $region31: #{discriminator_forward.10} parent=0 // pred_check_branch
    %495 = sbr.rel (0) target = $region33
  $region32: #{discriminator_forward.10} parent=0 // pred_region
    _
  $region33: #{discriminator_forward.10} parent=0 // pred_fallthru
    _
  // Predicated region
  $region34: #{discriminator_forward.10} parent=0 // pred_check
    _
  $region35: #{discriminator_forward.10} parent=0 // pred_check_branch
    %497 = sbr.rel (0) target = $region37
  $region36: #{discriminator_forward.10} parent=0 // pred_region
    _
  $region37: #{discriminator_forward.10} parent=0 // pred_fallthru
    _

// kernel: discriminator_forward.11
$region0: #{discriminator_forward.11}
  #allocation0 [shape = 'u32[]', space=smem, size = 0x4, offset = 0x4, fixed_abs, tag = 'smem constant byte address 0x4 - core index']
  #allocation1 [shape = 'u32[144,128]{1,0:T(1,128)}', space=vmem, size = 0x12000, scoped, tag = 'internal scratch']
  %s0 = inlined_call_operand.vmem [shape: bf16[128,128], index: 0, kind: input, shape index: {}]
  %s1 = inlined_call_operand.vmem [shape: f32[1,128], index: 1, kind: input, shape index: {}]
  %s2 = inlined_call_operand.vmem [shape: f32[1,128], index: 2, kind: input, shape index: {}]
  %s3 = inlined_call_operand.vmem [shape: bf16[128,128], index: 3, kind: output, shape index: {}]
  %s4 = sld [smem:[#allocation0]]
  $region22: #{discriminator_forward.11} parent=0
    _
  %s6 = ssub.s32 1, %s4
  %s7 = scalar_select 0, %s6, %s4
  // Predicated region
  $region2: #{discriminator_forward.11} parent=0 // pred_check
    _
  $region3: #{discriminator_forward.11} parent=0 // pred_check_branch
    %9 = sbr.rel (0) target = $region5
  $region4: #{discriminator_forward.11} parent=0 // pred_region
    _
  $region5: #{discriminator_forward.11} parent=0 // pred_fallthru
    _
  // Predicated region
  $region6: #{discriminator_forward.11} parent=0 // pred_check
    _
  $region7: #{discriminator_forward.11} parent=0 // pred_check_branch
    %11 = sbr.rel (0) target = $region9
  $region8: #{discriminator_forward.11} parent=0 // pred_region
    _
  $region9: #{discriminator_forward.11} parent=0 // pred_fallthru
    _
  // Predicated region
  $region10: #{discriminator_forward.11} parent=0 // pred_check
    _
  $region11: #{discriminator_forward.11} parent=0 // pred_check_branch
    %13 = sbr.rel (0) target = $region13
  $region12: #{discriminator_forward.11} parent=0 // pred_region
    _
  $region13: #{discriminator_forward.11} parent=0 // pred_fallthru
    _
  %v14 = vld [vmem:[%s0] sm:$0xf]
  %v15 = vld [vmem:[%s0 + $0x4] sm:$0xf]
  %v16 = vld [vmem:[%s0 + $0x8] sm:$0xf]
  %v17 = vld [vmem:[%s0 + $0xc] sm:$0xf]
  %v18 = vld [vmem:[%s0 + $0x10] sm:$0xf]
  %v19 = vld [vmem:[%s0 + $0x14] sm:$0xf]
  %v20 = vld [vmem:[%s0 + $0x18] sm:$0xf]
  %v21 = vld [vmem:[%s0 + $0x1c] sm:$0xf]
  %v22 = vld [vmem:[%s0 + $0x20] sm:$0xf]
  %v23 = vld [vmem:[%s0 + $0x24] sm:$0xf]
  %v24 = vld [vmem:[%s0 + $0x28] sm:$0xf]
  %v25 = vld [vmem:[%s0 + $0x2c] sm:$0xf]
  %v26 = vld [vmem:[%s0 + $0x30] sm:$0xf]
  %v27 = vld [vmem:[%s0 + $0x34] sm:$0xf]
  %v28 = vld [vmem:[%s0 + $0x38] sm:$0xf]
  %v29 = vld [vmem:[%s0 + $0x3c] sm:$0xf]
  %v30 = vunpack.c.l.bf16 %v14
  %v31 = vunpack.c.l.bf16 %v15
  %v32 = vunpack.c.l.bf16 %v16
  %v33 = vunpack.c.l.bf16 %v17
  %v34 = vunpack.c.l.bf16 %v18
  %v35 = vunpack.c.l.bf16 %v19
  %v36 = vunpack.c.l.bf16 %v20
  %v37 = vunpack.c.l.bf16 %v21
  %v38 = vunpack.c.l.bf16 %v22
  %v39 = vunpack.c.l.bf16 %v23
  %v40 = vunpack.c.l.bf16 %v24
  %v41 = vunpack.c.l.bf16 %v25
  %v42 = vunpack.c.l.bf16 %v26
  %v43 = vunpack.c.l.bf16 %v27
  %v44 = vunpack.c.l.bf16 %v28
  %v45 = vunpack.c.l.bf16 %v29
  %v46 = vld [vmem:[%s1] sm:$0x1]
  %v48 = vlaneseq
  %v49 = vshrl.u32 %v48, 7
  %v50 = vsub.s32 0, %v49
  %v51 = vrot.slane %v46, %v50
  %v53 = vmul.f32 %v30, %v51
  %v54 = vmul.f32 %v31, %v51
  %v55 = vmul.f32 %v32, %v51
  %v56 = vmul.f32 %v33, %v51
  %v57 = vmul.f32 %v34, %v51
  %v58 = vmul.f32 %v35, %v51
  %v59 = vmul.f32 %v36, %v51
  %v60 = vmul.f32 %v37, %v51
  %v61 = vmul.f32 %v38, %v51
  %v62 = vmul.f32 %v39, %v51
  %v63 = vmul.f32 %v40, %v51
  %v64 = vmul.f32 %v41, %v51
  %v65 = vmul.f32 %v42, %v51
  %v66 = vmul.f32 %v43, %v51
  %v67 = vmul.f32 %v44, %v51
  %v68 = vmul.f32 %v45, %v51
  %v69 = vld [vmem:[%s2] sm:$0x1]
  %v71 = vlaneseq
  %v72 = vshrl.u32 %v71, 7
  %v73 = vsub.s32 0, %v72
  %v74 = vrot.slane %v69, %v73
  %v76 = vadd.f32 %v53, %v74
  %v77 = vadd.f32 %v54, %v74
  %v78 = vadd.f32 %v55, %v74
  %v79 = vadd.f32 %v56, %v74
  %v80 = vadd.f32 %v57, %v74
  %v81 = vadd.f32 %v58, %v74
  %v82 = vadd.f32 %v59, %v74
  %v83 = vadd.f32 %v60, %v74
  %v84 = vadd.f32 %v61, %v74
  %v85 = vadd.f32 %v62, %v74
  %v86 = vadd.f32 %v63, %v74
  %v87 = vadd.f32 %v64, %v74
  %v88 = vadd.f32 %v65, %v74
  %v89 = vadd.f32 %v66, %v74
  %v90 = vadd.f32 %v67, %v74
  %v91 = vadd.f32 %v68, %v74
  %vm92 = vcmp.gt.f32.partialorder %v76, 0.0
  %vm93 = vcmp.gt.f32.partialorder %v77, 0.0
  %vm94 = vcmp.gt.f32.partialorder %v78, 0.0
  %vm95 = vcmp.gt.f32.partialorder %v79, 0.0
  %vm96 = vcmp.gt.f32.partialorder %v80, 0.0
  %vm97 = vcmp.gt.f32.partialorder %v81, 0.0
  %vm98 = vcmp.gt.f32.partialorder %v82, 0.0
  %vm99 = vcmp.gt.f32.partialorder %v83, 0.0
  %vm100 = vcmp.gt.f32.partialorder %v84, 0.0
  %vm101 = vcmp.gt.f32.partialorder %v85, 0.0
  %vm102 = vcmp.gt.f32.partialorder %v86, 0.0
  %vm103 = vcmp.gt.f32.partialorder %v87, 0.0
  %vm104 = vcmp.gt.f32.partialorder %v88, 0.0
  %vm105 = vcmp.gt.f32.partialorder %v89, 0.0
  %vm106 = vcmp.gt.f32.partialorder %v90, 0.0
  %vm107 = vcmp.gt.f32.partialorder %v91, 0.0
  %v108 = vmul.f32 %v76, 0.2
  %v109 = vmul.f32 %v77, 0.2
  %v110 = vmul.f32 %v78, 0.2
  %v111 = vmul.f32 %v79, 0.2
  %v112 = vmul.f32 %v80, 0.2
  %v113 = vmul.f32 %v81, 0.2
  %v114 = vmul.f32 %v82, 0.2
  %v115 = vmul.f32 %v83, 0.2
  %v116 = vmul.f32 %v84, 0.2
  %v117 = vmul.f32 %v85, 0.2
  %v118 = vmul.f32 %v86, 0.2
  %v119 = vmul.f32 %v87, 0.2
  %v120 = vmul.f32 %v88, 0.2
  %v121 = vmul.f32 %v89, 0.2
  %v122 = vmul.f32 %v90, 0.2
  %v123 = vmul.f32 %v91, 0.2
  %v124 = vsel %vm92, %v76, %v108
  %v125 = vsel %vm93, %v77, %v109
  %v126 = vsel %vm94, %v78, %v110
  %v127 = vsel %vm95, %v79, %v111
  %v128 = vsel %vm96, %v80, %v112
  %v129 = vsel %vm97, %v81, %v113
  %v130 = vsel %vm98, %v82, %v114
  %v131 = vsel %vm99, %v83, %v115
  %v132 = vsel %vm100, %v84, %v116
  %v133 = vsel %vm101, %v85, %v117
  %v134 = vsel %vm102, %v86, %v118
  %v135 = vsel %vm103, %v87, %v119
  %v136 = vsel %vm104, %v88, %v120
  %v137 = vsel %vm105, %v89, %v121
  %v138 = vsel %vm106, %v90, %v122
  %v139 = vsel %vm107, %v91, %v123
  %v140 = vpack.c.bf16 %v125, %v124
  %v141 = vpack.c.bf16 %v127, %v126
  %v142 = vpack.c.bf16 %v129, %v128
  %v143 = vpack.c.bf16 %v131, %v130
  %v144 = vpack.c.bf16 %v133, %v132
  %v145 = vpack.c.bf16 %v135, %v134
  %v146 = vpack.c.bf16 %v137, %v136
  %v147 = vpack.c.bf16 %v139, %v138
  %v156 = vunpack.c.l.b16 %v140
  %v157 = vunpack.c.h.b16 %v140
  %v158 = vunpack.c.l.b16 %v141
  %v159 = vunpack.c.h.b16 %v141
  %v160 = vunpack.c.l.b16 %v142
  %v161 = vunpack.c.h.b16 %v142
  %v162 = vunpack.c.l.b16 %v143
  %v163 = vunpack.c.h.b16 %v143
  %v164 = vunpack.c.l.b16 %v144
  %v165 = vunpack.c.h.b16 %v144
  %v166 = vunpack.c.l.b16 %v145
  %v167 = vunpack.c.h.b16 %v145
  %v168 = vunpack.c.l.b16 %v146
  %v169 = vunpack.c.h.b16 %v146
  %v170 = vunpack.c.l.b16 %v147
  %v171 = vunpack.c.h.b16 %v147
  %v172 = vpack.c.b16 %v156, %v156
  %v173 = vpack.c.b16 %v157, %v157
  %v174 = vpack.c.b16 %v158, %v158
  %v175 = vpack.c.b16 %v159, %v159
  %v176 = vpack.c.b16 %v160, %v160
  %v177 = vpack.c.b16 %v161, %v161
  %v178 = vpack.c.b16 %v162, %v162
  %v179 = vpack.c.b16 %v163, %v163
  %v180 = vpack.c.b16 %v164, %v164
  %v181 = vpack.c.b16 %v165, %v165
  %v182 = vpack.c.b16 %v166, %v166
  %v183 = vpack.c.b16 %v167, %v167
  %v184 = vpack.c.b16 %v168, %v168
  %v185 = vpack.c.b16 %v169, %v169
  %v186 = vpack.c.b16 %v170, %v170
  %v187 = vpack.c.b16 %v171, %v171
  %204 = vst [vmem:[%s3] sm:$0xf] %v172
  %205 = vst [vmem:[%s3 + $0x4] sm:$0xf] %v173
  %206 = vst [vmem:[%s3 + $0x8] sm:$0xf] %v174
  %207 = vst [vmem:[%s3 + $0xc] sm:$0xf] %v175
  %208 = vst [vmem:[%s3 + $0x10] sm:$0xf] %v176
  %209 = vst [vmem:[%s3 + $0x14] sm:$0xf] %v177
  %210 = vst [vmem:[%s3 + $0x18] sm:$0xf] %v178
  %211 = vst [vmem:[%s3 + $0x1c] sm:$0xf] %v179
  %212 = vst [vmem:[%s3 + $0x20] sm:$0xf] %v180
  %213 = vst [vmem:[%s3 + $0x24] sm:$0xf] %v181
  %214 = vst [vmem:[%s3 + $0x28] sm:$0xf] %v182
  %215 = vst [vmem:[%s3 + $0x2c] sm:$0xf] %v183
  %216 = vst [vmem:[%s3 + $0x30] sm:$0xf] %v184
  %217 = vst [vmem:[%s3 + $0x34] sm:$0xf] %v185
  %218 = vst [vmem:[%s3 + $0x38] sm:$0xf] %v186
  %219 = vst [vmem:[%s3 + $0x3c] sm:$0xf] %v187
  // Predicated region
  $region14: #{discriminator_forward.11} parent=0 // pred_check
    _
  $region15: #{discriminator_forward.11} parent=0 // pred_check_branch
    %221 = sbr.rel (0) target = $region17
  $region16: #{discriminator_forward.11} parent=0 // pred_region
    _
  $region17: #{discriminator_forward.11} parent=0 // pred_fallthru
    _
  // Predicated region
  $region18: #{discriminator_forward.11} parent=0 // pred_check
    _
  $region19: #{discriminator_forward.11} parent=0 // pred_check_branch
    %223 = sbr.rel (0) target = $region21
  $region20: #{discriminator_forward.11} parent=0 // pred_region
    _
  $region21: #{discriminator_forward.11} parent=0 // pred_fallthru
    _

// kernel: discriminator_forward.13
$region0: #{discriminator_forward.13}
  #allocation0 [shape = 'u32[]', space=smem, size = 0x4, offset = 0x4, fixed_abs, tag = 'smem constant byte address 0x4 - core index']
  #allocation1 [shape = 'u32[144,128]{1,0:T(1,128)}', space=vmem, size = 0x12000, scoped, tag = 'internal scratch']
  %s0 = inlined_call_operand.vmem [shape: bf16[32,128], index: 0, kind: input, shape index: {}]
  %s1 = inlined_call_operand.vmem [shape: f32[1,128], index: 1, kind: input, shape index: {}]
  %s2 = inlined_call_operand.vmem [shape: f32[1,128], index: 2, kind: input, shape index: {}]
  %s3 = inlined_call_operand.vmem [shape: bf16[32,128], index: 3, kind: output, shape index: {}]
  %s4 = sld [smem:[#allocation0]]
  $region22: #{discriminator_forward.13} parent=0
    _
  %s6 = ssub.s32 1, %s4
  %s7 = scalar_select 0, %s6, %s4
  // Predicated region
  $region2: #{discriminator_forward.13} parent=0 // pred_check
    _
  $region3: #{discriminator_forward.13} parent=0 // pred_check_branch
    %9 = sbr.rel (0) target = $region5
  $region4: #{discriminator_forward.13} parent=0 // pred_region
    _
  $region5: #{discriminator_forward.13} parent=0 // pred_fallthru
    _
  // Predicated region
  $region6: #{discriminator_forward.13} parent=0 // pred_check
    _
  $region7: #{discriminator_forward.13} parent=0 // pred_check_branch
    %11 = sbr.rel (0) target = $region9
  $region8: #{discriminator_forward.13} parent=0 // pred_region
    _
  $region9: #{discriminator_forward.13} parent=0 // pred_fallthru
    _
  // Predicated region
  $region10: #{discriminator_forward.13} parent=0 // pred_check
    _
  $region11: #{discriminator_forward.13} parent=0 // pred_check_branch
    %13 = sbr.rel (0) target = $region13
  $region12: #{discriminator_forward.13} parent=0 // pred_region
    _
  $region13: #{discriminator_forward.13} parent=0 // pred_fallthru
    _
  %v14 = vld [vmem:[%s0] sm:$0xf]
  %v15 = vld [vmem:[%s0 + $0x4] sm:$0xf]
  %v16 = vld [vmem:[%s0 + $0x8] sm:$0xf]
  %v17 = vld [vmem:[%s0 + $0xc] sm:$0xf]
  %v18 = vunpack.c.l.bf16 %v14
  %v19 = vunpack.c.l.bf16 %v15
  %v20 = vunpack.c.l.bf16 %v16
  %v21 = vunpack.c.l.bf16 %v17
  %v22 = vld [vmem:[%s1] sm:$0x1]
  %v24 = vlaneseq
  %v25 = vshrl.u32 %v24, 7
  %v26 = vsub.s32 0, %v25
  %v27 = vrot.slane %v22, %v26
  %v29 = vmul.f32 %v18, %v27
  %v30 = vmul.f32 %v19, %v27
  %v31 = vmul.f32 %v20, %v27
  %v32 = vmul.f32 %v21, %v27
  %v33 = vld [vmem:[%s2] sm:$0x1]
  %v35 = vlaneseq
  %v36 = vshrl.u32 %v35, 7
  %v37 = vsub.s32 0, %v36
  %v38 = vrot.slane %v33, %v37
  %v40 = vadd.f32 %v29, %v38
  %v41 = vadd.f32 %v30, %v38
  %v42 = vadd.f32 %v31, %v38
  %v43 = vadd.f32 %v32, %v38
  %vm44 = vcmp.gt.f32.partialorder %v40, 0.0
  %vm45 = vcmp.gt.f32.partialorder %v41, 0.0
  %vm46 = vcmp.gt.f32.partialorder %v42, 0.0
  %vm47 = vcmp.gt.f32.partialorder %v43, 0.0
  %v48 = vmul.f32 %v40, 0.2
  %v49 = vmul.f32 %v41, 0.2
  %v50 = vmul.f32 %v42, 0.2
  %v51 = vmul.f32 %v43, 0.2
  %v52 = vsel %vm44, %v40, %v48
  %v53 = vsel %vm45, %v41, %v49
  %v54 = vsel %vm46, %v42, %v50
  %v55 = vsel %vm47, %v43, %v51
  %v56 = vpack.c.bf16 %v53, %v52
  %v57 = vpack.c.bf16 %v55, %v54
  %v60 = vunpack.c.l.b16 %v56
  %v61 = vunpack.c.h.b16 %v56
  %v62 = vunpack.c.l.b16 %v57
  %v63 = vunpack.c.h.b16 %v57
  %v64 = vpack.c.b16 %v60, %v60
  %v65 = vpack.c.b16 %v61, %v61
  %v66 = vpack.c.b16 %v62, %v62
  %v67 = vpack.c.b16 %v63, %v63
  %72 = vst [vmem:[%s3] sm:$0xf] %v64
  %73 = vst [vmem:[%s3 + $0x4] sm:$0xf] %v65
  %74 = vst [vmem:[%s3 + $0x8] sm:$0xf] %v66
  %75 = vst [vmem:[%s3 + $0xc] sm:$0xf] %v67
  // Predicated region
  $region14: #{discriminator_forward.13} parent=0 // pred_check
    _
  $region15: #{discriminator_forward.13} parent=0 // pred_check_branch
    %77 = sbr.rel (0) target = $region17
  $region16: #{discriminator_forward.13} parent=0 // pred_region
    _
  $region17: #{discriminator_forward.13} parent=0 // pred_fallthru
    _
  // Predicated region
  $region18: #{discriminator_forward.13} parent=0 // pred_check
    _
  $region19: #{discriminator_forward.13} parent=0 // pred_check_branch
    %79 = sbr.rel (0) target = $region21
  $region20: #{discriminator_forward.13} parent=0 // pred_region
    _
  $region21: #{discriminator_forward.13} parent=0 // pred_fallthru
    _

// kernel: discriminator_forward.12
$region0: #{discriminator_forward.12}
  #allocation0 [shape = 'u32[]', space=smem, size = 0x4, offset = 0x4, fixed_abs, tag = 'smem constant byte address 0x4 - core index']
  #allocation1 [shape = 'u32[144,128]{1,0:T(1,128)}', space=vmem, size = 0x12000, scoped, tag = 'internal scratch']
  %s0 = inlined_call_operand.vmem [shape: bf16[32,512], index: 0, kind: input, shape index: {}]
  %s1 = inlined_call_operand.vmem [shape: bf16[512,128], index: 1, kind: input, shape index: {}]
  %s2 = inlined_call_operand.vmem [shape: bf16[32,128], index: 2, kind: output, shape index: {0}]
  %s3 = inlined_call_operand.vmem [shape: f32[1,128], index: 3, kind: output, shape index: {1}]
  %s4 = inlined_call_operand.vmem [shape: f32[1,128], index: 4, kind: output, shape index: {2}]
  %5 = xla_tuple %s2, %s3, %s4
  %s6 = sld [smem:[#allocation0]]
  $region38: #{discriminator_forward.12} parent=0
    _
  %s8 = ssub.s32 1, %s6
  %s9 = scalar_select 0, %s8, %s6
  // Predicated region
  $region2: #{discriminator_forward.12} parent=0 // pred_check
    _
  $region3: #{discriminator_forward.12} parent=0 // pred_check_branch
    %11 = sbr.rel (0) target = $region5
  $region4: #{discriminator_forward.12} parent=0 // pred_region
    _
  $region5: #{discriminator_forward.12} parent=0 // pred_fallthru
    _
  // Predicated region
  $region6: #{discriminator_forward.12} parent=0 // pred_check
    _
  $region7: #{discriminator_forward.12} parent=0 // pred_check_branch
    %13 = sbr.rel (0) target = $region9
  $region8: #{discriminator_forward.12} parent=0 // pred_region
    _
  $region9: #{discriminator_forward.12} parent=0 // pred_fallthru
    _
  %p15 = scmp.eq.s32.totalorder 0, 0
  // Predicated region
  $region10: #{discriminator_forward.12} parent=0 // pred_check
    %p16 = pneg %p15
  $region11: #{discriminator_forward.12} parent=0 // pred_check_branch
    %18 = sbr.rel (%p16) target = $region13
  $region12: #{discriminator_forward.12} parent=0 // pred_region
    %19 = vst [vmem:[%s3] sm:$0x1] 0.0
    %20 = vst [vmem:[%s4] sm:$0x1] 0.0
  $region13: #{discriminator_forward.12} parent=0 // pred_fallthru
    _
  %v21 = vld [vmem:[%s0] sm:$0xff]
  %v22 = vld [vmem:[%s0 + $0x8] sm:$0xff]
  %v23 = vld [vmem:[%s0 + $0x10] sm:$0xff]
  %v24 = vld [vmem:[%s0 + $0x18] sm:$0xff]
  %v25 = vld [vmem:[%s0 + $0x20] sm:$0xff]
  %v26 = vld [vmem:[%s0 + $0x28] sm:$0xff]
  %v27 = vld [vmem:[%s0 + $0x30] sm:$0xff]
  %v28 = vld [vmem:[%s0 + $0x38] sm:$0xff]
  %v29 = vld [vmem:[%s1] sm:$0xf]
  %v30 = vld [vmem:[%s1 + $0x4] sm:$0xf]
  %v31 = vld [vmem:[%s1 + $0x8] sm:$0xf]
  %v32 = vld [vmem:[%s1 + $0xc] sm:$0xf]
  %v33 = vld [vmem:[%s1 + $0x10] sm:$0xf]
  %v34 = vld [vmem:[%s1 + $0x14] sm:$0xf]
  %v35 = vld [vmem:[%s1 + $0x18] sm:$0xf]
  %v36 = vld [vmem:[%s1 + $0x1c] sm:$0xf]
  %v37 = vld [vmem:[%s1 + $0x20] sm:$0xf]
  %v38 = vld [vmem:[%s1 + $0x24] sm:$0xf]
  %v39 = vld [vmem:[%s1 + $0x28] sm:$0xf]
  %v40 = vld [vmem:[%s1 + $0x2c] sm:$0xf]
  %v41 = vld [vmem:[%s1 + $0x30] sm:$0xf]
  %v42 = vld [vmem:[%s1 + $0x34] sm:$0xf]
  %v43 = vld [vmem:[%s1 + $0x38] sm:$0xf]
  %v44 = vld [vmem:[%s1 + $0x3c] sm:$0xf]
  %v45 = vld [vmem:[%s1 + $0x40] sm:$0xf]
  %v46 = vld [vmem:[%s1 + $0x44] sm:$0xf]
  %v47 = vld [vmem:[%s1 + $0x48] sm:$0xf]
  %v48 = vld [vmem:[%s1 + $0x4c] sm:$0xf]
  %v49 = vld [vmem:[%s1 + $0x50] sm:$0xf]
  %v50 = vld [vmem:[%s1 + $0x54] sm:$0xf]
  %v51 = vld [vmem:[%s1 + $0x58] sm:$0xf]
  %v52 = vld [vmem:[%s1 + $0x5c] sm:$0xf]
  %v53 = vld [vmem:[%s1 + $0x60] sm:$0xf]
  %v54 = vld [vmem:[%s1 + $0x64] sm:$0xf]
  %v55 = vld [vmem:[%s1 + $0x68] sm:$0xf]
  %v56 = vld [vmem:[%s1 + $0x6c] sm:$0xf]
  %v57 = vld [vmem:[%s1 + $0x70] sm:$0xf]
  %v58 = vld [vmem:[%s1 + $0x74] sm:$0xf]
  %v59 = vld [vmem:[%s1 + $0x78] sm:$0xf]
  %v60 = vld [vmem:[%s1 + $0x7c] sm:$0xf]
  %v61 = vld [vmem:[%s1 + $0x80] sm:$0xf]
  %v62 = vld [vmem:[%s1 + $0x84] sm:$0xf]
  %v63 = vld [vmem:[%s1 + $0x88] sm:$0xf]
  %v64 = vld [vmem:[%s1 + $0x8c] sm:$0xf]
  %v65 = vld [vmem:[%s1 + $0x90] sm:$0xf]
  %v66 = vld [vmem:[%s1 + $0x94] sm:$0xf]
  %v67 = vld [vmem:[%s1 + $0x98] sm:$0xf]
  %v68 = vld [vmem:[%s1 + $0x9c] sm:$0xf]
  %v69 = vld [vmem:[%s1 + $0xa0] sm:$0xf]
  %v70 = vld [vmem:[%s1 + $0xa4] sm:$0xf]
  %v71 = vld [vmem:[%s1 + $0xa8] sm:$0xf]
  %v72 = vld [vmem:[%s1 + $0xac] sm:$0xf]
  %v73 = vld [vmem:[%s1 + $0xb0] sm:$0xf]
  %v74 = vld [vmem:[%s1 + $0xb4] sm:$0xf]
  %v75 = vld [vmem:[%s1 + $0xb8] sm:$0xf]
  %v76 = vld [vmem:[%s1 + $0xbc] sm:$0xf]
  %v77 = vld [vmem:[%s1 + $0xc0] sm:$0xf]
  %v78 = vld [vmem:[%s1 + $0xc4] sm:$0xf]
  %v79 = vld [vmem:[%s1 + $0xc8] sm:$0xf]
  %v80 = vld [vmem:[%s1 + $0xcc] sm:$0xf]
  %v81 = vld [vmem:[%s1 + $0xd0] sm:$0xf]
  %v82 = vld [vmem:[%s1 + $0xd4] sm:$0xf]
  %v83 = vld [vmem:[%s1 + $0xd8] sm:$0xf]
  %v84 = vld [vmem:[%s1 + $0xdc] sm:$0xf]
  %v85 = vld [vmem:[%s1 + $0xe0] sm:$0xf]
  %v86 = vld [vmem:[%s1 + $0xe4] sm:$0xf]
  %v87 = vld [vmem:[%s1 + $0xe8] sm:$0xf]
  %v88 = vld [vmem:[%s1 + $0xec] sm:$0xf]
  %v89 = vld [vmem:[%s1 + $0xf0] sm:$0xf]
  %v90 = vld [vmem:[%s1 + $0xf4] sm:$0xf]
  %v91 = vld [vmem:[%s1 + $0xf8] sm:$0xf]
  %v92 = vld [vmem:[%s1 + $0xfc] sm:$0xf]
  %v101 = vunpack.c.l.b16 %v21
  %v102 = vunpack.c.h.b16 %v21
  %v103 = vunpack.c.l.b16 %v22
  %v104 = vunpack.c.h.b16 %v22
  %v105 = vunpack.c.l.b16 %v23
  %v106 = vunpack.c.h.b16 %v23
  %v107 = vunpack.c.l.b16 %v24
  %v108 = vunpack.c.h.b16 %v24
  %v109 = vunpack.c.l.b16 %v25
  %v110 = vunpack.c.h.b16 %v25
  %v111 = vunpack.c.l.b16 %v26
  %v112 = vunpack.c.h.b16 %v26
  %v113 = vunpack.c.l.b16 %v27
  %v114 = vunpack.c.h.b16 %v27
  %v115 = vunpack.c.l.b16 %v28
  %v116 = vunpack.c.h.b16 %v28
  %v117 = vpack.c.b16 %v105, %v101
  %v118 = vpack.c.b16 %v106, %v102
  %v119 = vpack.c.b16 %v107, %v103
  %v120 = vpack.c.b16 %v108, %v104
  %v121 = vpack.c.b16 %v113, %v109
  %v122 = vpack.c.b16 %v114, %v110
  %v123 = vpack.c.b16 %v115, %v111
  %v124 = vpack.c.b16 %v116, %v112
  %v197 = vunpack.c.l.b16 %v29
  %v198 = vunpack.c.l.b16 %v30
  %v199 = vunpack.c.l.b16 %v31
  %v200 = vunpack.c.l.b16 %v32
  %v201 = vunpack.c.l.b16 %v33
  %v202 = vunpack.c.l.b16 %v34
  %v203 = vunpack.c.l.b16 %v35
  %v204 = vunpack.c.l.b16 %v36
  %v205 = vunpack.c.l.b16 %v37
  %v206 = vunpack.c.l.b16 %v38
  %v207 = vunpack.c.l.b16 %v39
  %v208 = vunpack.c.l.b16 %v40
  %v209 = vunpack.c.l.b16 %v41
  %v210 = vunpack.c.l.b16 %v42
  %v211 = vunpack.c.l.b16 %v43
  %v212 = vunpack.c.l.b16 %v44
  %v213 = vunpack.c.l.b16 %v45
  %v214 = vunpack.c.l.b16 %v46
  %v215 = vunpack.c.l.b16 %v47
  %v216 = vunpack.c.l.b16 %v48
  %v217 = vunpack.c.l.b16 %v49
  %v218 = vunpack.c.l.b16 %v50
  %v219 = vunpack.c.l.b16 %v51
  %v220 = vunpack.c.l.b16 %v52
  %v221 = vunpack.c.l.b16 %v53
  %v222 = vunpack.c.l.b16 %v54
  %v223 = vunpack.c.l.b16 %v55
  %v224 = vunpack.c.l.b16 %v56
  %v225 = vunpack.c.l.b16 %v57
  %v226 = vunpack.c.l.b16 %v58
  %v227 = vunpack.c.l.b16 %v59
  %v228 = vunpack.c.l.b16 %v60
  %v229 = vunpack.c.l.b16 %v61
  %v230 = vunpack.c.l.b16 %v62
  %v231 = vunpack.c.l.b16 %v63
  %v232 = vunpack.c.l.b16 %v64
  %v233 = vunpack.c.l.b16 %v65
  %v234 = vunpack.c.l.b16 %v66
  %v235 = vunpack.c.l.b16 %v67
  %v236 = vunpack.c.l.b16 %v68
  %v237 = vunpack.c.l.b16 %v69
  %v238 = vunpack.c.l.b16 %v70
  %v239 = vunpack.c.l.b16 %v71
  %v240 = vunpack.c.l.b16 %v72
  %v241 = vunpack.c.l.b16 %v73
  %v242 = vunpack.c.l.b16 %v74
  %v243 = vunpack.c.l.b16 %v75
  %v244 = vunpack.c.l.b16 %v76
  %v245 = vunpack.c.l.b16 %v77
  %v246 = vunpack.c.l.b16 %v78
  %v247 = vunpack.c.l.b16 %v79
  %v248 = vunpack.c.l.b16 %v80
  %v249 = vunpack.c.l.b16 %v81
  %v250 = vunpack.c.l.b16 %v82
  %v251 = vunpack.c.l.b16 %v83
  %v252 = vunpack.c.l.b16 %v84
  %v253 = vunpack.c.l.b16 %v85
  %v254 = vunpack.c.l.b16 %v86
  %v255 = vunpack.c.l.b16 %v87
  %v256 = vunpack.c.l.b16 %v88
  %v257 = vunpack.c.l.b16 %v89
  %v258 = vunpack.c.l.b16 %v90
  %v259 = vunpack.c.l.b16 %v91
  %v260 = vunpack.c.l.b16 %v92
  %v261 = vpack.c.b16 %v198, %v197
  %v262 = vpack.c.b16 %v200, %v199
  %v263 = vpack.c.b16 %v202, %v201
  %v264 = vpack.c.b16 %v204, %v203
  %v265 = vpack.c.b16 %v206, %v205
  %v266 = vpack.c.b16 %v208, %v207
  %v267 = vpack.c.b16 %v210, %v209
  %v268 = vpack.c.b16 %v212, %v211
  %v269 = vpack.c.b16 %v214, %v213
  %v270 = vpack.c.b16 %v216, %v215
  %v271 = vpack.c.b16 %v218, %v217
  %v272 = vpack.c.b16 %v220, %v219
  %v273 = vpack.c.b16 %v222, %v221
  %v274 = vpack.c.b16 %v224, %v223
  %v275 = vpack.c.b16 %v226, %v225
  %v276 = vpack.c.b16 %v228, %v227
  %v277 = vpack.c.b16 %v230, %v229
  %v278 = vpack.c.b16 %v232, %v231
  %v279 = vpack.c.b16 %v234, %v233
  %v280 = vpack.c.b16 %v236, %v235
  %v281 = vpack.c.b16 %v238, %v237
  %v282 = vpack.c.b16 %v240, %v239
  %v283 = vpack.c.b16 %v242, %v241
  %v284 = vpack.c.b16 %v244, %v243
  %v285 = vpack.c.b16 %v246, %v245
  %v286 = vpack.c.b16 %v248, %v247
  %v287 = vpack.c.b16 %v250, %v249
  %v288 = vpack.c.b16 %v252, %v251
  %v289 = vpack.c.b16 %v254, %v253
  %v290 = vpack.c.b16 %v256, %v255
  %v291 = vpack.c.b16 %v258, %v257
  %v292 = vpack.c.b16 %v260, %v259
  %325 = vmatprep.subr.bf16.mxu0 0
  %326 = vmatpush1.bf16.msra.mxu0 %v261
  %327 = vmatprep.subr.bf16.mxu0 0
  %328 = vmatpush1.bf16.msra.mxu0 %v262
  %329 = vmatprep.subr.bf16.mxu0 0
  %330 = vmatpush1.bf16.msra.mxu0 %v263
  %331 = vmatprep.subr.bf16.mxu0 0
  %332 = vmatpush1.bf16.msra.mxu0 %v264
  %333 = vmatprep.subr.bf16.mxu0 0
  %334 = vmatpush1.bf16.msra.mxu0 %v265
  %335 = vmatprep.subr.bf16.mxu0 0
  %336 = vmatpush1.bf16.msra.mxu0 %v266
  %337 = vmatprep.subr.bf16.mxu0 0
  %338 = vmatpush1.bf16.msra.mxu0 %v267
  %339 = vmatprep.subr.bf16.mxu0 0
  %340 = vmatpush1.bf16.msra.mxu0 %v268
  %341 = vmatprep.subr.bf16.mxu0 0
  %342 = vmatpush1.bf16.msra.mxu0 %v269
  %343 = vmatprep.subr.bf16.mxu0 0
  %344 = vmatpush1.bf16.msra.mxu0 %v270
  %345 = vmatprep.subr.bf16.mxu0 0
  %346 = vmatpush1.bf16.msra.mxu0 %v271
  %347 = vmatprep.subr.bf16.mxu0 0
  %348 = vmatpush1.bf16.msra.mxu0 %v272
  %349 = vmatprep.subr.bf16.mxu0 0
  %350 = vmatpush1.bf16.msra.mxu0 %v273
  %351 = vmatprep.subr.bf16.mxu0 0
  %352 = vmatpush1.bf16.msra.mxu0 %v274
  %353 = vmatprep.subr.bf16.mxu0 0
  %354 = vmatpush1.bf16.msra.mxu0 %v275
  %355 = vmatprep.subr.bf16.mxu0 0
  %356 = vmatpush1.bf16.msra.mxu0 %v276
  %357 = vmatprep.mubr.bf16.mxu0 %v118
  %358 = vmatmul.mubr.bf16.gmra.mrb[0].mxu0 %v117
  %v359 = vpop.f32.mrb[0].mxu0
  %v360 = vadd.f32 0.0, %v359
  %v361 = vpop.f32.mrb[0].mxu0
  %v362 = vpop.f32.mrb[0].mxu0
  %v363 = vadd.f32 0.0, %v362
  %v364 = vpop.f32.mrb[0].mxu0
  %365 = vmatprep.mubr.bf16.mxu0 %v122
  %366 = vmatmul.mubr.bf16.gmra.mrb[0].mxu0 %v121
  %v367 = vpop.f32.mrb[0].mxu0
  %v368 = vadd.f32 0.0, %v367
  %v369 = vpop.f32.mrb[0].mxu0
  %v370 = vpop.f32.mrb[0].mxu0
  %v371 = vadd.f32 0.0, %v370
  %v372 = vpop.f32.mrb[0].mxu0
  %373 = vdwg.mxu0
  %374 = vmatprep.subr.bf16.mxu0 0
  %375 = vmatpush1.bf16.msra.mxu0 %v277
  %376 = vmatprep.subr.bf16.mxu0 0
  %377 = vmatpush1.bf16.msra.mxu0 %v278
  %378 = vmatprep.subr.bf16.mxu0 0
  %379 = vmatpush1.bf16.msra.mxu0 %v279
  %380 = vmatprep.subr.bf16.mxu0 0
  %381 = vmatpush1.bf16.msra.mxu0 %v280
  %382 = vmatprep.subr.bf16.mxu0 0
  %383 = vmatpush1.bf16.msra.mxu0 %v281
  %384 = vmatprep.subr.bf16.mxu0 0
  %385 = vmatpush1.bf16.msra.mxu0 %v282
  %386 = vmatprep.subr.bf16.mxu0 0
  %387 = vmatpush1.bf16.msra.mxu0 %v283
  %388 = vmatprep.subr.bf16.mxu0 0
  %389 = vmatpush1.bf16.msra.mxu0 %v284
  %390 = vmatprep.subr.bf16.mxu0 0
  %391 = vmatpush1.bf16.msra.mxu0 %v285
  %392 = vmatprep.subr.bf16.mxu0 0
  %393 = vmatpush1.bf16.msra.mxu0 %v286
  %394 = vmatprep.subr.bf16.mxu0 0
  %395 = vmatpush1.bf16.msra.mxu0 %v287
  %396 = vmatprep.subr.bf16.mxu0 0
  %397 = vmatpush1.bf16.msra.mxu0 %v288
  %398 = vmatprep.subr.bf16.mxu0 0
  %399 = vmatpush1.bf16.msra.mxu0 %v289
  %400 = vmatprep.subr.bf16.mxu0 0
  %401 = vmatpush1.bf16.msra.mxu0 %v290
  %402 = vmatprep.subr.bf16.mxu0 0
  %403 = vmatpush1.bf16.msra.mxu0 %v291
  %404 = vmatprep.subr.bf16.mxu0 0
  %405 = vmatpush1.bf16.msra.mxu0 %v292
  %406 = vmatprep.mubr.bf16.mxu0 %v120
  %407 = vmatmul.mubr.bf16.gmra.mrb[0].mxu0 %v119
  %v408 = vpop.f32.mrb[0].mxu0
  %v409 = vadd.f32 %v360, %v408
  %v410 = vpop.f32.mrb[0].mxu0
  %v411 = vpop.f32.mrb[0].mxu0
  %v412 = vadd.f32 %v363, %v411
  %v413 = vpop.f32.mrb[0].mxu0
  %414 = vmatprep.mubr.bf16.mxu0 %v124
  %415 = vmatmul.mubr.bf16.gmra.mrb[0].mxu0 %v123
  %v416 = vpop.f32.mrb[0].mxu0
  %v417 = vadd.f32 %v368, %v416
  %v418 = vpop.f32.mrb[0].mxu0
  %v419 = vpop.f32.mrb[0].mxu0
  %v420 = vadd.f32 %v371, %v419
  %v421 = vpop.f32.mrb[0].mxu0
  %422 = vdwg.mxu0
  %v423 = vld [vmem:[%s3] sm:$0x1]
  %v424 = vadd.f32 %v409, %v412
  %v425 = vadd.f32 %v424, %v417
  %v426 = vadd.f32 %v425, %v420
  %v427 = vrot.slane %v426, 4
  %v428 = vadd.f32 %v426, %v427
  %v429 = vrot.slane %v428, 2
  %v430 = vadd.f32 %v428, %v429
  %v431 = vrot.slane %v430, 1
  %v432 = vadd.f32 %v430, %v431
  %v433 = vadd.f32 %v423, %v432
  %434 = vst [vmem:[%s3] sm:$0x1] %v433
  %v435 = vld [vmem:[%s4] sm:$0x1]
  %v436 = vmul.f32 %v409, %v409
  %v437 = vmul.f32 %v412, %v412
  %v438 = vmul.f32 %v417, %v417
  %v439 = vmul.f32 %v420, %v420
  %v440 = vadd.f32 %v436, %v437
  %v441 = vadd.f32 %v440, %v438
  %v442 = vadd.f32 %v441, %v439
  %v443 = vrot.slane %v442, 4
  %v444 = vadd.f32 %v442, %v443
  %v445 = vrot.slane %v444, 2
  %v446 = vadd.f32 %v444, %v445
  %v447 = vrot.slane %v446, 1
  %v448 = vadd.f32 %v446, %v447
  %v449 = vadd.f32 %v435, %v448
  %450 = vst [vmem:[%s4] sm:$0x1] %v449
  %v451 = vpack.c.bf16 %v412, %v409
  %v452 = vpack.c.bf16 %v420, %v417
  %v455 = vunpack.c.l.b16 %v451
  %v456 = vunpack.c.h.b16 %v451
  %v457 = vunpack.c.l.b16 %v452
  %v458 = vunpack.c.h.b16 %v452
  %v459 = vpack.c.b16 %v455, %v455
  %v460 = vpack.c.b16 %v456, %v456
  %v461 = vpack.c.b16 %v457, %v457
  %v462 = vpack.c.b16 %v458, %v458
  %467 = vst [vmem:[%s2] sm:$0xf] %v459
  %468 = vst [vmem:[%s2 + $0x4] sm:$0xf] %v460
  %469 = vst [vmem:[%s2 + $0x8] sm:$0xf] %v461
  %470 = vst [vmem:[%s2 + $0xc] sm:$0xf] %v462
  // Predicated region
  $region14: #{discriminator_forward.12} parent=0 // pred_check
    _
  $region15: #{discriminator_forward.12} parent=0 // pred_check_branch
    %472 = sbr.rel (0) target = $region17
  $region16: #{discriminator_forward.12} parent=0 // pred_region
    _
  $region17: #{discriminator_forward.12} parent=0 // pred_fallthru
    _
  // Predicated region
  $region18: #{discriminator_forward.12} parent=0 // pred_check
    _
  $region19: #{discriminator_forward.12} parent=0 // pred_check_branch
    %474 = sbr.rel (0) target = $region21
  $region20: #{discriminator_forward.12} parent=0 // pred_region
    _
  $region21: #{discriminator_forward.12} parent=0 // pred_fallthru
    _
  // Predicated region
  $region22: #{discriminator_forward.12} parent=0 // pred_check
    _
  $region23: #{discriminator_forward.12} parent=0 // pred_check_branch
    %476 = sbr.rel (0) target = $region25
  $region24: #{discriminator_forward.12} parent=0 // pred_region
    _
  $region25: #{discriminator_forward.12} parent=0 // pred_fallthru
    _
  // Predicated region
  $region26: #{discriminator_forward.12} parent=0 // pred_check
    _
  $region27: #{discriminator_forward.12} parent=0 // pred_check_branch
    %478 = sbr.rel (0) target = $region29
  $region28: #{discriminator_forward.12} parent=0 // pred_region
    _
  $region29: #{discriminator_forward.12} parent=0 // pred_fallthru
    _
  // Predicated region
  $region30: #{discriminator_forward.12} parent=0 // pred_check
    _
  $region31: #{discriminator_forward.12} parent=0 // pred_check_branch
    %480 = sbr.rel (0) target = $region33
  $region32: #{discriminator_forward.12} parent=0 // pred_region
    _
  $region33: #{discriminator_forward.12} parent=0 // pred_fallthru
    _
  // Predicated region
  $region34: #{discriminator_forward.12} parent=0 // pred_check
    _
  $region35: #{discriminator_forward.12} parent=0 // pred_check_branch
    %482 = sbr.rel (0) target = $region37
  $region36: #{discriminator_forward.12} parent=0 // pred_region
    _
  $region37: #{discriminator_forward.12} parent=0 // pred_fallthru
    _

</llo_original>
